<compile_context>
chip_gen: v7x
topology: tpu7x:2x2x1
jax: 0.10.0
libtpu: 0.0.40
codegen_flags: <defaults>
</compile_context>

<pallas_src>
import functools

import numpy as np

import jax
import jax.numpy as jnp
from jax.experimental import pallas as pl
from jax.experimental.pallas import tpu as pltpu


def _round_up(x, m):
    return (x + m - 1) // m * m


def _choose_tile(padded, max_tile, align):
    """Largest multiple of `align` <= max_tile that divides `padded`."""
    if padded <= max_tile:
        return padded
    t = (max_tile // align) * align
    while padded % t:
        t -= align
    return t


# ----------------------------------------------------------------------------
# Kernel 1: generic fused tiled matmul with bias / ReLU epilogue (bf16 in/out)
# ----------------------------------------------------------------------------
def _fused_matmul_kernel(*refs, has_bias, relu):
    a_ref, b_ref = refs[0], refs[1]
    idx = 2
    bias_ref = None
    if has_bias:
        bias_ref = refs[idx]
        idx += 1
    o_ref, acc_ref = refs[idx], refs[idx + 1]

    @pl.when(pl.program_id(2) == 0)
    def _():
        acc_ref[...] = jnp.zeros_like(acc_ref)

    acc_ref[...] += jnp.dot(a_ref[...], b_ref[...],
                            preferred_element_type=jnp.float32)

    @pl.when(pl.program_id(2) == pl.num_programs(2) - 1)
    def _():
        y = acc_ref[...]
        if has_bias:
            y = y + bias_ref[...]
        if relu:
            y = jnp.maximum(y, 0.0)
        o_ref[...] = y.astype(o_ref.dtype)


def fused_matmul(a, b, bias=None, relu=False, out_dtype=jnp.bfloat16):
    """(M,K) @ (K,N) + bias (+ReLU); bf16 MXU operands, f32 accumulation."""
    M, K = a.shape
    K2, N = b.shape
    assert K == K2, (a.shape, b.shape)

    Mp = _round_up(M, 16)          # bf16 packs 2 rows/sublane -> native (16,128) tiles
    Kp = _round_up(K, 128)
    Np = _round_up(N, 128)
    tm = _choose_tile(Mp, 256, 16)     # adaptive: never pad tiny M to 128
    tk = _choose_tile(Kp, 1024, 128)
    tn = _choose_tile(Np, 512, 128)    # caps fit v7x's 32 MiB scoped VMEM; raise on v5e/v6e

    a_p = a if (M == Mp and K == Kp) else jnp.pad(a, ((0, Mp - M), (0, Kp - K)))
    b_p = b if (K == Kp and N == Np) else jnp.pad(b, ((0, Kp - K), (0, Np - N)))
    if a_p.dtype != jnp.bfloat16:
        a_p = a_p.astype(jnp.bfloat16)
    if b_p.dtype != jnp.bfloat16:
        b_p = b_p.astype(jnp.bfloat16)

    inputs = [a_p, b_p]
    in_specs = [
        pl.BlockSpec((tm, tk), lambda i, j, k: (i, k)),
        pl.BlockSpec((tk, tn), lambda i, j, k: (k, j)),
    ]
    has_bias = bias is not None
    if has_bias:
        bias_p = bias.reshape(-1)
        if bias_p.shape[0] != Np:
            bias_p = jnp.pad(bias_p, (0, Np - N))
        inputs.append(bias_p.reshape(1, Np).astype(jnp.float32))
        in_specs.append(pl.BlockSpec((1, tn), lambda i, j, k: (0, j)))

    out = pl.pallas_call(
        functools.partial(_fused_matmul_kernel, has_bias=has_bias, relu=relu),
        out_shape=jax.ShapeDtypeStruct((Mp, Np), out_dtype),
        grid_spec=pltpu.PrefetchScalarGridSpec(
            num_scalar_prefetch=0,
            grid=(Mp // tm, Np // tn, Kp // tk),
            in_specs=in_specs,
            out_specs=pl.BlockSpec((tm, tn), lambda i, j, k: (i, j)),
            scratch_shapes=[pltpu.VMEM((tm, tn), jnp.float32)],
        ),
        compiler_params=pltpu.CompilerParams(
            dimension_semantics=("parallel", "parallel", "arbitrary")),
    )(*inputs)

    if Mp == M and Np == N:
        return out
    return out[:M, :N]


# ----------------------------------------------------------------------------
# Kernel 2: one GIN layer fused -> (A+I)@x, Linear+ReLU, Linear+ReLU  (row-tiled)
# ----------------------------------------------------------------------------
def _gin_layer_kernel(adj_ref, x_ref, w1_ref, b1_ref, w2_ref, b2_ref, o_ref):
    agg = jnp.dot(adj_ref[...], x_ref[...], preferred_element_type=jnp.float32)
    h1 = jnp.dot(agg.astype(jnp.bfloat16), w1_ref[...],
                 preferred_element_type=jnp.float32)
    h1 = jnp.maximum(h1 + b1_ref[...], 0.0)
    h2 = jnp.dot(h1.astype(jnp.bfloat16), w2_ref[...],
                 preferred_element_type=jnp.float32)
    h2 = jnp.maximum(h2 + b2_ref[...], 0.0)
    o_ref[...] = h2.astype(o_ref.dtype)


def gin_layer(adj_plus_i, x, w1, b1, w2, b2):
    Np, D = x.shape
    tm = _choose_tile(Np, 256, 16)
    return pl.pallas_call(
        _gin_layer_kernel,
        out_shape=jax.ShapeDtypeStruct((Np, D), jnp.bfloat16),
        grid=(Np // tm,),
        in_specs=[
            pl.BlockSpec((tm, Np), lambda i: (i, 0)),   # (A+I) rows for this block
            pl.BlockSpec((Np, D), lambda i: (0, 0)),    # all source features (fetched once)
            pl.BlockSpec((D, D), lambda i: (0, 0)),
            pl.BlockSpec((1, D), lambda i: (0, 0)),
            pl.BlockSpec((D, D), lambda i: (0, 0)),
            pl.BlockSpec((1, D), lambda i: (0, 0)),
        ],
        out_specs=pl.BlockSpec((tm, D), lambda i: (i, 0)),
        compiler_params=pltpu.CompilerParams(dimension_semantics=("parallel",)),
    )(adj_plus_i, x, w1, b1, w2, b2)


# ----------------------------------------------------------------------------
# Kernel 3: GAT linear over concatenated hops  == sum_l x_list[l] @ W_l
#           (hop index is the reduction grid axis -> no HBM concat copy)
# ----------------------------------------------------------------------------
def _gat_linear_kernel(x_ref, w_ref, o_ref, acc_ref):
    @pl.when(pl.program_id(1) == 0)
    def _():
        acc_ref[...] = jnp.zeros_like(acc_ref)

    acc_ref[...] += jnp.dot(x_ref[0], w_ref[0], preferred_element_type=jnp.float32)

    @pl.when(pl.program_id(1) == pl.num_programs(1) - 1)
    def _():
        o_ref[...] = acc_ref[...].astype(o_ref.dtype)


def gat_linear(x_hops, w_hops):
    L, Np, D = x_hops.shape
    tm = _choose_tile(Np, 256, 16)
    return pl.pallas_call(
        _gat_linear_kernel,
        out_shape=jax.ShapeDtypeStruct((Np, D), jnp.bfloat16),
        grid_spec=pltpu.PrefetchScalarGridSpec(
            num_scalar_prefetch=0,
            grid=(Np // tm, L),
            in_specs=[
                pl.BlockSpec((1, tm, D), lambda i, k: (k, i, 0)),
                pl.BlockSpec((1, D, D), lambda i, k: (k, 0, 0)),
            ],
            out_specs=pl.BlockSpec((tm, D), lambda i, k: (i, 0)),
            scratch_shapes=[pltpu.VMEM((tm, D), jnp.float32)],
        ),
        compiler_params=pltpu.CompilerParams(
            dimension_semantics=("parallel", "arbitrary")),
    )(x_hops, w_hops)


# ----------------------------------------------------------------------------
# Kernel 4: GAT masked-softmax attention, scores built in-kernel, + bias + ReLU
# ----------------------------------------------------------------------------
def _gat_attention_kernel(a_dst_ref, a_src_ref, xh_ref, mask_ref, head_mask_ref,
                          bias_ref, o_ref, *, num_heads, negative_slope):
    mask = mask_ref[...].astype(jnp.float32)          # (tm, Np): 1 iff edge j->i (+ self)
    neg = (1.0 - mask) * (-1e9)
    xh = xh_ref[...].astype(jnp.float32)              # (Np, D) source features
    a_dst = a_dst_ref[...]                            # (tm, H)
    tm, d = o_ref.shape
    acc = jnp.zeros((tm, d), jnp.float32)
    for h in range(num_heads):
        s = a_dst[:, h:h + 1] + a_src_ref[h:h + 1, :]     # (tm, Np), VPU broadcast
        s = jnp.where(s > 0, s, negative_slope * s)       # LeakyReLU
        s = s + neg
        s = s - jnp.max(s, axis=-1, keepdims=True)
        e = jnp.exp(s) * mask
        p = e * pl.reciprocal(jnp.sum(e, axis=-1, keepdims=True), approx=True)
        xh_h = xh * head_mask_ref[h:h + 1, :]             # head h channels in final lanes
        acc = acc + jnp.dot(p, xh_h, preferred_element_type=jnp.float32)
    o_ref[...] = jnp.maximum(acc + bias_ref[...], 0.0).astype(o_ref.dtype)


def gat_attention(a_dst, a_src_t, xh, mask, head_mask, bias, *, negative_slope=0.2):
    Np, D = xh.shape
    H = a_dst.shape[1]
    tm = _choose_tile(Np, 256, 16)
    return pl.pallas_call(
        functools.partial(_gat_attention_kernel, num_heads=H,
                          negative_slope=negative_slope),
        out_shape=jax.ShapeDtypeStruct((Np, D), jnp.bfloat16),
        grid=(Np // tm,),
        in_specs=[
            pl.BlockSpec((tm, H), lambda i: (i, 0)),
            pl.BlockSpec((H, Np), lambda i: (0, 0)),
            pl.BlockSpec((Np, D), lambda i: (0, 0)),
            pl.BlockSpec((tm, Np), lambda i: (i, 0)),
            pl.BlockSpec((H, D), lambda i: (0, 0)),
            pl.BlockSpec((1, D), lambda i: (0, 0)),
        ],
        out_specs=pl.BlockSpec((tm, D), lambda i: (i, 0)),
        compiler_params=pltpu.CompilerParams(dimension_semantics=("parallel",)),
    )(a_dst, a_src_t, xh, mask, head_mask, bias)


# ----------------------------------------------------------------------------
# Kernel 5: whole MultiheadAttention over hops (q/k/v proj + softmax + out proj)
# ----------------------------------------------------------------------------
def _hop_mha_kernel(xg_ref, hops_ref, wq_ref, bq_ref, wk_ref, bk_ref, wv_ref, bv_ref,
                    rmat_ref, emat_ref, wo_ref, bo_ref, o_ref, *, num_hops, scale):
    q = jnp.dot(xg_ref[...], wq_ref[...],
                preferred_element_type=jnp.float32) + bq_ref[...]          # (tm, D)
    rmat = rmat_ref[...]                                                   # (D, H) reducer
    emat = emat_ref[...]                                                   # (H, D) expander
    scores, vals = [], []
    for l in range(num_hops):
        x_l = hops_ref[l]                                                  # (tm, D) bf16
        k_l = jnp.dot(x_l, wk_ref[...],
                      preferred_element_type=jnp.float32) + bk_ref[...]
        v_l = jnp.dot(x_l, wv_ref[...],
                      preferred_element_type=jnp.float32) + bv_ref[...]
        s_l = jnp.dot(q * k_l, rmat, preferred_element_type=jnp.float32) * scale
        scores.append(s_l)                                                 # (tm, H)
        vals.append(v_l)
    m = scores[0]
    for l in range(1, num_hops):
        m = jnp.maximum(m, scores[l])
    exps = [jnp.exp(s - m) for s in scores]
    denom = exps[0]
    for l in range(1, num_hops):
        denom = denom + exps[l]
    inv = pl.reciprocal(denom, approx=True)
    acc = jnp.zeros(q.shape, jnp.float32)
    for l in range(num_hops):
        w_full = jnp.dot(exps[l] * inv, emat, preferred_element_type=jnp.float32)
        acc = acc + w_full * vals[l]
    out = jnp.dot(acc.astype(jnp.bfloat16), wo_ref[...],
                  preferred_element_type=jnp.float32) + bo_ref[...]
    o_ref[...] = out.astype(o_ref.dtype)


def hop_mha(x_gat, x_hops, wq, bq, wk, bk, wv, bv, rmat, emat, wo, bo, *, scale):
    L, Np, D = x_hops.shape
    H = rmat.shape[1]
    tm = _choose_tile(Np, 256, 16)
    return pl.pallas_call(
        functools.partial(_hop_mha_kernel, num_hops=L, scale=scale),
        out_shape=jax.ShapeDtypeStruct((Np, D), jnp.bfloat16),
        grid=(Np // tm,),
        in_specs=[
            pl.BlockSpec((tm, D), lambda i: (i, 0)),
            pl.BlockSpec((L, tm, D), lambda i: (0, i, 0)),
            pl.BlockSpec((D, D), lambda i: (0, 0)),
            pl.BlockSpec((1, D), lambda i: (0, 0)),
            pl.BlockSpec((D, D), lambda i: (0, 0)),
            pl.BlockSpec((1, D), lambda i: (0, 0)),
            pl.BlockSpec((D, D), lambda i: (0, 0)),
            pl.BlockSpec((1, D), lambda i: (0, 0)),
            pl.BlockSpec((D, H), lambda i: (0, 0)),
            pl.BlockSpec((H, D), lambda i: (0, 0)),
            pl.BlockSpec((D, D), lambda i: (0, 0)),
            pl.BlockSpec((1, D), lambda i: (0, 0)),
        ],
        out_specs=pl.BlockSpec((tm, D), lambda i: (i, 0)),
        compiler_params=pltpu.CompilerParams(dimension_semantics=("parallel",)),
    )(x_gat, x_hops, wq, bq, wk, bk, wv, bv, rmat, emat, wo, bo)


# ----------------------------------------------------------------------------
# Kernel 6: global mean pool + final fc fused
# ----------------------------------------------------------------------------
def _pool_fc_kernel(pool_ref, x_ref, w_ref, b_ref, o_ref):
    pooled = jnp.dot(pool_ref[...], x_ref[...], preferred_element_type=jnp.float32)
    out = jnp.dot(pooled.astype(jnp.bfloat16), w_ref[...],
                  preferred_element_type=jnp.float32) + b_ref[...]
    o_ref[...] = out.astype(o_ref.dtype)


def pool_fc(pool_mat, x, fc_w, fc_b):
    Gp, Np = pool_mat.shape
    D = x.shape[1]
    E = fc_w.shape[1]
    return pl.pallas_call(
        _pool_fc_kernel,
        out_shape=jax.ShapeDtypeStruct((Gp, E), jnp.float32),
        grid=(1,),
        in_specs=[
            pl.BlockSpec((Gp, Np), lambda i: (0, 0)),
            pl.BlockSpec((Np, D), lambda i: (0, 0)),
            pl.BlockSpec((D, E), lambda i: (0, 0)),
            pl.BlockSpec((1, E), lambda i: (0, 0)),
        ],
        out_specs=pl.BlockSpec((Gp, E), lambda i: (0, 0)),
    )(pool_mat, x, fc_w, fc_b)


# ----------------------------------------------------------------------------
# GraphHop forward
# ----------------------------------------------------------------------------
def graphhop_forward(x, adj_plus_i, adj_self, pool_mat, params, *,
                     num_layers, gat_heads, attn_heads, hidden_dim,
                     feat_pad, num_graphs, embedding_dim):
    D = hidden_dim
    Np = adj_plus_i.shape[0]
    N, F = x.shape

    # node features, padded once to the aligned (Np, feat_pad) layout
    x0 = jnp.pad(x, ((0, Np - N), (0, feat_pad - F)))

    # projection (no activation in the module); bf16 activation out
    h = fused_matmul(x0, params["proj_w"], bias=params["proj_b"],
                     out_dtype=jnp.bfloat16)
    x_list = [h]

    # GIN layers: one fused kernel per layer ((A+I)@x -> Lin+ReLU -> Lin+ReLU)
    for i in range(num_layers):
        p = params["gin"][i]
        x_list.append(gin_layer(adj_plus_i, x_list[-1],
                                p["w1"], p["b1"], p["w2"], p["b2"]))

    # single bf16 stack of all hops, reused by the GAT linear and the MHA K/V
    x_hops = jnp.stack(x_list, axis=0)                         # (L, Np, D)

    # GATConv linear over concatenated hops == sum_l x_list[l] @ W_l
    xh = gat_linear(x_hops, params["gat_w"])                   # (Np, D) bf16

    # per-head attention logits (tiny (Np, H) tensors; (tm, Np) scores built in-kernel)
    C = D // gat_heads
    xh_heads = xh.astype(jnp.float32).reshape(Np, gat_heads, C)
    a_src = jnp.sum(xh_heads * params["gat_att_src"][None], axis=-1)    # (Np, H)
    a_dst = jnp.sum(xh_heads * params["gat_att_dst"][None], axis=-1)    # (Np, H)
    x_gat = gat_attention(a_dst, a_src.T, xh, adj_self,
                          params["gat_head_mask"], params["gat_bias"])

    # HopAttn: full MultiheadAttention fused (Q = GAT output, K = V = hop stack)
    scale = 1.0 / float(np.sqrt(D // attn_heads))
    attn = hop_mha(x_gat, x_hops,
                   params["wq"], params["bq"], params["wk"], params["bk"],
                   params["wv"], params["bv"], params["rmat"], params["emat"],
                   params["wo"], params["bo"], scale=scale)

    # global mean pool + final fc fused
    out = pool_fc(pool_mat, attn, params["fc_w"], params["fc_b"])
    return out[:num_graphs, :embedding_dim]


# ----------------------------------------------------------------------------
# Deterministic synthetic parameters (pre-padded, matmul weights pre-cast bf16)
# ----------------------------------------------------------------------------
def init_params(key, *, num_node_features, feat_pad, hidden_dim, embedding_dim,
                emb_pad, num_layers, gat_heads, attn_heads):
    D = hidden_dim
    keys = iter(jax.random.split(key, 64))
    wdt = jnp.bfloat16

    def uniform(shape, bound):
        return jax.random.uniform(next(keys), shape, jnp.float32, -bound, bound)

    def linear_w(fin, fout):    # stored (in, out); PyTorch-default uniform init
        return uniform((fin, fout), 1.0 / (fin ** 0.5))

    params = {}
    w = jnp.pad(linear_w(num_node_features, D),
                ((0, feat_pad - num_node_features), (0, 0)))
    params["proj_w"] = w.astype(wdt)
    params["proj_b"] = uniform((D,), 1.0 / (num_node_features ** 0.5))

    gin = []
    for _ in range(num_layers):
        gin.append({
            "w1": linear_w(D, D).astype(wdt),
            "b1": uniform((D,), 1.0 / D ** 0.5).reshape(1, D),
            "w2": linear_w(D, D).astype(wdt),
            "b2": uniform((D,), 1.0 / D ** 0.5).reshape(1, D),
        })
    params["gin"] = gin

    L = num_layers + 1
    gat_in = D * L
    gat_c = D // gat_heads
    gw = uniform((gat_in, D), (6.0 / (gat_in + D)) ** 0.5)
    params["gat_w"] = gw.reshape(L, D, D).astype(wdt)          # W_l = W[l*D:(l+1)*D, :]
    ga = (6.0 / (1 + gat_c)) ** 0.5
    params["gat_att_src"] = uniform((gat_heads, gat_c), ga)
    params["gat_att_dst"] = uniform((gat_heads, gat_c), ga)
    params["gat_bias"] = jnp.zeros((1, D), jnp.float32)
    head_mask = np.zeros((gat_heads, D), np.float32)
    for h in range(gat_heads):
        head_mask[h, h * gat_c:(h + 1) * gat_c] = 1.0
    params["gat_head_mask"] = jnp.asarray(head_mask)

    xb = (6.0 / (2 * D)) ** 0.5
    params["wq"] = uniform((D, D), xb).astype(wdt)
    params["wk"] = uniform((D, D), xb).astype(wdt)
    params["wv"] = uniform((D, D), xb).astype(wdt)
    params["bq"] = jnp.zeros((1, D), jnp.float32)
    params["bk"] = jnp.zeros((1, D), jnp.float32)
    params["bv"] = jnp.zeros((1, D), jnp.float32)
    params["wo"] = linear_w(D, D).astype(wdt)
    params["bo"] = jnp.zeros((1, D), jnp.float32)
    dh = D // attn_heads
    rmat = np.zeros((D, attn_heads), np.float32)
    for h in range(attn_heads):
        rmat[h * dh:(h + 1) * dh, h] = 1.0
    params["rmat"] = jnp.asarray(rmat)
    params["emat"] = jnp.asarray(rmat.T)

    w = jnp.pad(linear_w(D, embedding_dim), ((0, 0), (0, emb_pad - embedding_dim)))
    b = jnp.pad(uniform((embedding_dim,), 1.0 / D ** 0.5),
                (0, emb_pad - embedding_dim))
    params["fc_w"] = w.astype(wdt)
    params["fc_b"] = b.reshape(1, emb_pad)
    return params


def build_graph(edge_index, batch, num_nodes, num_graphs, n_pad, g_pad):
    src, dst = np.asarray(edge_index)
    adj = np.zeros((n_pad, n_pad), np.float32)
    adj[dst, src] = 1.0                              # adj[i, j] = 1 iff edge j -> i
    adj_plus_i = adj + np.eye(n_pad, dtype=np.float32)   # GIN eps=0: x + A@x == (A+I)@x
    adj_self = adj.copy()
    np.fill_diagonal(adj_self, 1.0)                  # GATConv add_self_loops=True
    counts = np.bincount(np.asarray(batch), minlength=num_graphs).astype(np.float32)
    pool = np.zeros((g_pad, n_pad), np.float32)
    for n in range(num_nodes):
        g = int(batch[n])
        pool[g, n] = 1.0 / counts[g]
    # static graph matrices pre-cast bf16 once (0/1/2 and diag entries are exact)
    return (jnp.asarray(adj_plus_i, jnp.bfloat16),
            jnp.asarray(adj_self, jnp.bfloat16),
            jnp.asarray(pool, jnp.bfloat16))


if __name__ == "__main__":
    # small config consistent with GraphHop(num_node_features=5, ...)
    NUM_FEATURES = 5
    HIDDEN = 128          # divisible by GAT heads (4) and attention heads (8)
    EMBED = 64
    NUM_LAYERS = 4
    GAT_HEADS = 4
    ATTN_HEADS = 8
    FEAT_PAD = 128
    EMB_PAD = 128

    # deterministic small graph: 2 graphs, each a 6-node bidirectional cycle
    num_graphs = 2
    nodes_per_graph = 6
    num_nodes = num_graphs * nodes_per_graph
    edges = []
    for g in range(num_graphs):
        base = g * nodes_per_graph
        for k in range(nodes_per_graph):
            a, b = base + k, base + (k + 1) % nodes_per_graph
            edges.append((a, b))
            edges.append((b, a))
    edge_index = np.array(edges, np.int32).T                       # (2, 24)
    batch = np.repeat(np.arange(num_graphs, dtype=np.int32), nodes_per_graph)

    n_pad = _round_up(num_nodes, 16)
    g_pad = _round_up(num_graphs, 8)
    adj_plus_i, adj_self, pool_mat = build_graph(edge_index, batch, num_nodes,
                                                 num_graphs, n_pad, g_pad)

    key = jax.random.PRNGKey(0)
    k_param, k_x = jax.random.split(key)
    params = init_params(k_param, num_node_features=NUM_FEATURES, feat_pad=FEAT_PAD,
                         hidden_dim=HIDDEN, embedding_dim=EMBED, emb_pad=EMB_PAD,
                         num_layers=NUM_LAYERS, gat_heads=GAT_HEADS,
                         attn_heads=ATTN_HEADS)
    x = jax.random.normal(k_x, (num_nodes, NUM_FEATURES), jnp.float32)

    fwd = jax.jit(functools.partial(
        graphhop_forward, num_layers=NUM_LAYERS, gat_heads=GAT_HEADS,
        attn_heads=ATTN_HEADS, hidden_dim=HIDDEN, feat_pad=FEAT_PAD,
        num_graphs=num_graphs, embedding_dim=EMBED))
    out = fwd(x, adj_plus_i, adj_self, pool_mat, params)
    out = jax.block_until_ready(out)

    assert out.shape == (num_graphs, EMBED), out.shape
    assert bool(jnp.all(jnp.isfinite(out)))
    print("KERNEL_OK")
</pallas_src>

<mosaic_0001>
module attributes {stable_mosaic.version = 11 : i64} {
  func.func @_fused_matmul_kernel(%arg0: i32, %arg1: i32, %arg2: i32, %arg3: memref<16x128xbf16, #tpu.memory_space<vmem>>, %arg4: memref<128x128xbf16, #tpu.memory_space<vmem>>, %arg5: memref<1x128xf32, #tpu.memory_space<vmem>>, %arg6: memref<16x128xbf16, #tpu.memory_space<vmem>>, %arg7: memref<16x128xf32, #tpu.memory_space<vmem>>) attributes {dimension_semantics = [#tpu.dimension_semantics<parallel>, #tpu.dimension_semantics<parallel>, #tpu.dimension_semantics<arbitrary>], iteration_bounds = array<i64: 1, 1, 1>, scalar_prefetch = 0 : i64, scratch_operands = 1 : i64, tpu.core_type = #tpu.core_type<tc>, window_params = [{transform_indices = @transform_0, window_bounds = array<i64: 16, 128>}, {transform_indices = @transform_1, window_bounds = array<i64: 128, 128>}, {transform_indices = @transform_2, window_bounds = array<i64: 1, 128>}, {transform_indices = @transform_3, window_bounds = array<i64: 16, 128>}]} {
    %c0_i32 = arith.constant 0 : i32
    %0 = arith.cmpi eq, %arg2, %c0_i32 : i32
    %1 = arith.extui %0 : i1 to i32
    %c0_i32_0 = arith.constant 0 : i32
    %2 = arith.cmpi ne, %1, %c0_i32_0 : i32
    scf.if %2 {
      %cst_10 = arith.constant 0.000000e+00 : f32
      %12 = vector.broadcast %cst_10 : f32 to vector<16x128xf32>
      %c0_11 = arith.constant 0 : index
      %c0_12 = arith.constant 0 : index
      %13 = vector.load %arg7[%c0_11, %c0_12] : memref<16x128xf32, #tpu.memory_space<vmem>>, vector<16x128xf32>
      tpu.vector_store %arg7[%c0_11, %c0_12], %12 {strides = array<i32>} : memref<16x128xf32, #tpu.memory_space<vmem>>, vector<16x128xf32>,
    } else {
    }
    %c0 = arith.constant 0 : index
    %c0_1 = arith.constant 0 : index
    %3 = vector.load %arg7[%c0, %c0_1] : memref<16x128xf32, #tpu.memory_space<vmem>>, vector<16x128xf32>
    %c0_2 = arith.constant 0 : index
    %c0_3 = arith.constant 0 : index
    %4 = vector.load %arg3[%c0_2, %c0_3] : memref<16x128xbf16, #tpu.memory_space<vmem>>, vector<16x128xbf16>
    %c0_4 = arith.constant 0 : index
    %c0_5 = arith.constant 0 : index
    %5 = vector.load %arg4[%c0_4, %c0_5] : memref<128x128xbf16, #tpu.memory_space<vmem>>, vector<128x128xbf16>
    %cst = arith.constant dense<0.000000e+00> : vector<16x128xf32>
    %6 = tpu.matmul %4, %5, %cst {dimension_numbers = #tpu.dot_dimension_numbers<[1], [0], [0], [1], [0, 0, 1, 1], [], []>} : vector<16x128xbf16>, vector<128x128xbf16>, vector<16x128xf32> -> vector<16x128xf32>
    %7 = arith.addf %3, %6 : vector<16x128xf32>
    %c0_6 = arith.constant 0 : index
    %c0_7 = arith.constant 0 : index
    %8 = vector.load %arg7[%c0_6, %c0_7] : memref<16x128xf32, #tpu.memory_space<vmem>>, vector<16x128xf32>
    tpu.vector_store %arg7[%c0_6, %c0_7], %7 {strides = array<i32>} : memref<16x128xf32, #tpu.memory_space<vmem>>, vector<16x128xf32>,
    %c0_i32_8 = arith.constant 0 : i32
    %9 = arith.cmpi eq, %arg2, %c0_i32_8 : i32
    %10 = arith.extui %9 : i1 to i32
    %c0_i32_9 = arith.constant 0 : i32
    %11 = arith.cmpi ne, %10, %c0_i32_9 : i32
    scf.if %11 {
      %c0_10 = arith.constant 0 : index
      %c0_11 = arith.constant 0 : index
      %12 = vector.load %arg7[%c0_10, %c0_11] : memref<16x128xf32, #tpu.memory_space<vmem>>, vector<16x128xf32>
      %c0_12 = arith.constant 0 : index
      %c0_13 = arith.constant 0 : index
      %13 = vector.load %arg5[%c0_12, %c0_13] : memref<1x128xf32, #tpu.memory_space<vmem>>, vector<1x128xf32>
      %14 = vector.broadcast %13 : vector<1x128xf32> to vector<16x128xf32>
      %15 = arith.addf %12, %14 : vector<16x128xf32>
      %16 = arith.truncf %15 : vector<16x128xf32> to vector<16x128xbf16>
      %c0_14 = arith.constant 0 : index
      %c0_15 = arith.constant 0 : index
      %17 = vector.load %arg6[%c0_14, %c0_15] : memref<16x128xbf16, #tpu.memory_space<vmem>>, vector<16x128xbf16>
      tpu.vector_store %arg6[%c0_14, %c0_15], %16 {strides = array<i32>} : memref<16x128xbf16, #tpu.memory_space<vmem>>, vector<16x128xbf16>,
    } else {
    }
    return
  }
  func.func @transform_0(%arg0: i32, %arg1: i32, %arg2: i32) -> (i32, i32) {
    %c0_i32 = arith.constant 0 : i32
    return %arg0, %arg2 : i32, i32
  }
  func.func @transform_1(%arg0: i32, %arg1: i32, %arg2: i32) -> (i32, i32) {
    %c0_i32 = arith.constant 0 : i32
    return %arg2, %arg1 : i32, i32
  }
  func.func @transform_2(%arg0: i32, %arg1: i32, %arg2: i32) -> (i32, i32) {
    %c0_i32 = arith.constant 0 : i32
    %c0_i32_0 = arith.constant 0 : i32
    return %c0_i32, %arg1 : i32, i32
  }
  func.func @transform_3(%arg0: i32, %arg1: i32, %arg2: i32) -> (i32, i32) {
    %c0_i32 = arith.constant 0 : i32
    return %arg0, %arg1 : i32, i32
  }
}

module attributes {stable_mosaic.version = 11 : i64} {
  func.func @_gin_layer_kernel(%arg0: i32, %arg1: memref<16x16xbf16, #tpu.memory_space<vmem>>, %arg2: memref<16x128xbf16, #tpu.memory_space<vmem>>, %arg3: memref<128x128xbf16, #tpu.memory_space<vmem>>, %arg4: memref<1x128xf32, #tpu.memory_space<vmem>>, %arg5: memref<128x128xbf16, #tpu.memory_space<vmem>>, %arg6: memref<1x128xf32, #tpu.memory_space<vmem>>, %arg7: memref<16x128xbf16, #tpu.memory_space<vmem>>) attributes {dimension_semantics = [#tpu.dimension_semantics<parallel>], iteration_bounds = array<i64: 1>, scalar_prefetch = 0 : i64, scratch_operands = 0 : i64, tpu.core_type = #tpu.core_type<tc>, window_params = [{transform_indices = @transform_0, window_bounds = array<i64: 16, 16>}, {pipeline_mode = #tpu.pipeline_mode<synchronous>, transform_indices = @transform_1, window_bounds = array<i64: 16, 128>}, {pipeline_mode = #tpu.pipeline_mode<synchronous>, transform_indices = @transform_2, window_bounds = array<i64: 128, 128>}, {pipeline_mode = #tpu.pipeline_mode<synchronous>, transform_indices = @transform_3, window_bounds = array<i64: 1, 128>}, {pipeline_mode = #tpu.pipeline_mode<synchronous>, transform_indices = @transform_4, window_bounds = array<i64: 128, 128>}, {pipeline_mode = #tpu.pipeline_mode<synchronous>, transform_indices = @transform_5, window_bounds = array<i64: 1, 128>}, {transform_indices = @transform_6, window_bounds = array<i64: 16, 128>}]} {
    %c0 = arith.constant 0 : index
    %c0_0 = arith.constant 0 : index
    %0 = vector.load %arg1[%c0, %c0_0] : memref<16x16xbf16, #tpu.memory_space<vmem>>, vector<16x16xbf16>
    %c0_1 = arith.constant 0 : index
    %c0_2 = arith.constant 0 : index
    %1 = vector.load %arg2[%c0_1, %c0_2] : memref<16x128xbf16, #tpu.memory_space<vmem>>, vector<16x128xbf16>
    %cst = arith.constant dense<0.000000e+00> : vector<16x128xf32>
    %2 = tpu.matmul %0, %1, %cst {dimension_numbers = #tpu.dot_dimension_numbers<[1], [0], [0], [1], [0, 0, 1, 1], [], []>} : vector<16x16xbf16>, vector<16x128xbf16>, vector<16x128xf32> -> vector<16x128xf32>
    %3 = arith.truncf %2 : vector<16x128xf32> to vector<16x128xbf16>
    %c0_3 = arith.constant 0 : index
    %c0_4 = arith.constant 0 : index
    %4 = vector.load %arg3[%c0_3, %c0_4] : memref<128x128xbf16, #tpu.memory_space<vmem>>, vector<128x128xbf16>
    %cst_5 = arith.constant dense<0.000000e+00> : vector<16x128xf32>
    %5 = tpu.matmul %3, %4, %cst_5 {dimension_numbers = #tpu.dot_dimension_numbers<[1], [0], [0], [1], [0, 0, 1, 1], [], []>} : vector<16x128xbf16>, vector<128x128xbf16>, vector<16x128xf32> -> vector<16x128xf32>
    %c0_6 = arith.constant 0 : index
    %c0_7 = arith.constant 0 : index
    %6 = vector.load %arg4[%c0_6, %c0_7] : memref<1x128xf32, #tpu.memory_space<vmem>>, vector<1x128xf32>
    %7 = vector.broadcast %6 : vector<1x128xf32> to vector<16x128xf32>
    %8 = arith.addf %5, %7 : vector<16x128xf32>
    %cst_8 = arith.constant 0.000000e+00 : f32
    %9 = vector.broadcast %cst_8 : f32 to vector<16x128xf32>
    %10 = arith.maximumf %8, %9 : vector<16x128xf32>
    %11 = arith.truncf %10 : vector<16x128xf32> to vector<16x128xbf16>
    %c0_9 = arith.constant 0 : index
    %c0_10 = arith.constant 0 : index
    %12 = vector.load %arg5[%c0_9, %c0_10] : memref<128x128xbf16, #tpu.memory_space<vmem>>, vector<128x128xbf16>
    %cst_11 = arith.constant dense<0.000000e+00> : vector<16x128xf32>
    %13 = tpu.matmul %11, %12, %cst_11 {dimension_numbers = #tpu.dot_dimension_numbers<[1], [0], [0], [1], [0, 0, 1, 1], [], []>} : vector<16x128xbf16>, vector<128x128xbf16>, vector<16x128xf32> -> vector<16x128xf32>
    %c0_12 = arith.constant 0 : index
    %c0_13 = arith.constant 0 : index
    %14 = vector.load %arg6[%c0_12, %c0_13] : memref<1x128xf32, #tpu.memory_space<vmem>>, vector<1x128xf32>
    %15 = vector.broadcast %14 : vector<1x128xf32> to vector<16x128xf32>
    %16 = arith.addf %13, %15 : vector<16x128xf32>
    %cst_14 = arith.constant 0.000000e+00 : f32
    %17 = vector.broadcast %cst_14 : f32 to vector<16x128xf32>
    %18 = arith.maximumf %16, %17 : vector<16x128xf32>
    %19 = arith.truncf %18 : vector<16x128xf32> to vector<16x128xbf16>
    %c0_15 = arith.constant 0 : index
    %c0_16 = arith.constant 0 : index
    %20 = vector.load %arg7[%c0_15, %c0_16] : memref<16x128xbf16, #tpu.memory_space<vmem>>, vector<16x128xbf16>
    tpu.vector_store %arg7[%c0_15, %c0_16], %19 {strides = array<i32>} : memref<16x128xbf16, #tpu.memory_space<vmem>>, vector<16x128xbf16>,
    return
  }
  func.func @transform_0(%arg0: i32) -> (i32, i32) {
    %c0_i32 = arith.constant 0 : i32
    %c0_i32_0 = arith.constant 0 : i32
    return %arg0, %c0_i32 : i32, i32
  }
  func.func @transform_1(%arg0: i32) -> (i32, i32) {
    %c0_i32 = arith.constant 0 : i32
    %c0_i32_0 = arith.constant 0 : i32
    %c0_i32_1 = arith.constant 0 : i32
    return %c0_i32, %c0_i32_0 : i32, i32
  }
  func.func @transform_2(%arg0: i32) -> (i32, i32) {
    %c0_i32 = arith.constant 0 : i32
    %c0_i32_0 = arith.constant 0 : i32
    %c0_i32_1 = arith.constant 0 : i32
    return %c0_i32, %c0_i32_0 : i32, i32
  }
  func.func @transform_3(%arg0: i32) -> (i32, i32) {
    %c0_i32 = arith.constant 0 : i32
    %c0_i32_0 = arith.constant 0 : i32
    %c0_i32_1 = arith.constant 0 : i32
    return %c0_i32, %c0_i32_0 : i32, i32
  }
  func.func @transform_4(%arg0: i32) -> (i32, i32) {
    %c0_i32 = arith.constant 0 : i32
    %c0_i32_0 = arith.constant 0 : i32
    %c0_i32_1 = arith.constant 0 : i32
    return %c0_i32, %c0_i32_0 : i32, i32
  }
  func.func @transform_5(%arg0: i32) -> (i32, i32) {
    %c0_i32 = arith.constant 0 : i32
    %c0_i32_0 = arith.constant 0 : i32
    %c0_i32_1 = arith.constant 0 : i32
    return %c0_i32, %c0_i32_0 : i32, i32
  }
  func.func @transform_6(%arg0: i32) -> (i32, i32) {
    %c0_i32 = arith.constant 0 : i32
    %c0_i32_0 = arith.constant 0 : i32
    return %arg0, %c0_i32 : i32, i32
  }
}

module attributes {stable_mosaic.version = 11 : i64} {
  func.func @_gat_linear_kernel(%arg0: i32, %arg1: i32, %arg2: memref<1x16x128xbf16, #tpu.memory_space<vmem>>, %arg3: memref<1x128x128xbf16, #tpu.memory_space<vmem>>, %arg4: memref<16x128xbf16, #tpu.memory_space<vmem>>, %arg5: memref<16x128xf32, #tpu.memory_space<vmem>>) attributes {dimension_semantics = [#tpu.dimension_semantics<parallel>, #tpu.dimension_semantics<arbitrary>], iteration_bounds = array<i64: 1, 5>, scalar_prefetch = 0 : i64, scratch_operands = 1 : i64, tpu.core_type = #tpu.core_type<tc>, window_params = [{transform_indices = @transform_0, window_bounds = array<i64: 1, 16, 128>}, {transform_indices = @transform_1, window_bounds = array<i64: 1, 128, 128>}, {transform_indices = @transform_2, window_bounds = array<i64: 16, 128>}]} {
    %c0_i32 = arith.constant 0 : i32
    %0 = arith.cmpi eq, %arg1, %c0_i32 : i32
    %1 = arith.extui %0 : i1 to i32
    %c0_i32_0 = arith.constant 0 : i32
    %2 = arith.cmpi ne, %1, %c0_i32_0 : i32
    scf.if %2 {
      %cst_11 = arith.constant 0.000000e+00 : f32
      %14 = vector.broadcast %cst_11 : f32 to vector<16x128xf32>
      %c0_12 = arith.constant 0 : index
      %c0_13 = arith.constant 0 : index
      %15 = vector.load %arg5[%c0_12, %c0_13] : memref<16x128xf32, #tpu.memory_space<vmem>>, vector<16x128xf32>
      tpu.vector_store %arg5[%c0_12, %c0_13], %14 {strides = array<i32>} : memref<16x128xf32, #tpu.memory_space<vmem>>, vector<16x128xf32>,
    } else {
    }
    %c0 = arith.constant 0 : index
    %c0_1 = arith.constant 0 : index
    %3 = vector.load %arg5[%c0, %c0_1] : memref<16x128xf32, #tpu.memory_space<vmem>>, vector<16x128xf32>
    %c0_2 = arith.constant 0 : index
    %c0_3 = arith.constant 0 : index
    %c0_4 = arith.constant 0 : index
    %4 = vector.load %arg2[%c0_2, %c0_3, %c0_4] : memref<1x16x128xbf16, #tpu.memory_space<vmem>>, vector<1x16x128xbf16>
    %5 = vector.shape_cast %4 : vector<1x16x128xbf16> to vector<16x128xbf16>
    %c0_5 = arith.constant 0 : index
    %c0_6 = arith.constant 0 : index
    %c0_7 = arith.constant 0 : index
    %6 = vector.load %arg3[%c0_5, %c0_6, %c0_7] : memref<1x128x128xbf16, #tpu.memory_space<vmem>>, vector<1x128x128xbf16>
    %7 = vector.shape_cast %6 : vector<1x128x128xbf16> to vector<128x128xbf16>
    %cst = arith.constant dense<0.000000e+00> : vector<16x128xf32>
    %8 = tpu.matmul %5, %7, %cst {dimension_numbers = #tpu.dot_dimension_numbers<[1], [0], [0], [1], [0, 0, 1, 1], [], []>} : vector<16x128xbf16>, vector<128x128xbf16>, vector<16x128xf32> -> vector<16x128xf32>
    %9 = arith.addf %3, %8 : vector<16x128xf32>
    %c0_8 = arith.constant 0 : index
    %c0_9 = arith.constant 0 : index
    %10 = vector.load %arg5[%c0_8, %c0_9] : memref<16x128xf32, #tpu.memory_space<vmem>>, vector<16x128xf32>
    tpu.vector_store %arg5[%c0_8, %c0_9], %9 {strides = array<i32>} : memref<16x128xf32, #tpu.memory_space<vmem>>, vector<16x128xf32>,
    %c4_i32 = arith.constant 4 : i32
    %11 = arith.cmpi eq, %arg1, %c4_i32 : i32
    %12 = arith.extui %11 : i1 to i32
    %c0_i32_10 = arith.constant 0 : i32
    %13 = arith.cmpi ne, %12, %c0_i32_10 : i32
    scf.if %13 {
      %c0_11 = arith.constant 0 : index
      %c0_12 = arith.constant 0 : index
      %14 = vector.load %arg5[%c0_11, %c0_12] : memref<16x128xf32, #tpu.memory_space<vmem>>, vector<16x128xf32>
      %15 = arith.truncf %14 : vector<16x128xf32> to vector<16x128xbf16>
      %c0_13 = arith.constant 0 : index
      %c0_14 = arith.constant 0 : index
      %16 = vector.load %arg4[%c0_13, %c0_14] : memref<16x128xbf16, #tpu.memory_space<vmem>>, vector<16x128xbf16>
      tpu.vector_store %arg4[%c0_13, %c0_14], %15 {strides = array<i32>} : memref<16x128xbf16, #tpu.memory_space<vmem>>, vector<16x128xbf16>,
    } else {
    }
    return
  }
  func.func @transform_0(%arg0: i32, %arg1: i32) -> (i32, i32, i32) {
    %c0_i32 = arith.constant 0 : i32
    %c0_i32_0 = arith.constant 0 : i32
    return %arg1, %arg0, %c0_i32 : i32, i32, i32
  }
  func.func @transform_1(%arg0: i32, %arg1: i32) -> (i32, i32, i32) {
    %c0_i32 = arith.constant 0 : i32
    %c0_i32_0 = arith.constant 0 : i32
    %c0_i32_1 = arith.constant 0 : i32
    return %arg1, %c0_i32, %c0_i32_0 : i32, i32, i32
  }
  func.func @transform_2(%arg0: i32, %arg1: i32) -> (i32, i32) {
    %c0_i32 = arith.constant 0 : i32
    %c0_i32_0 = arith.constant 0 : i32
    return %arg0, %c0_i32 : i32, i32
  }
}

module attributes {stable_mosaic.version = 11 : i64} {
  func.func @_gin_layer_kernel(%arg0: i32, %arg1: memref<16x16xbf16, #tpu.memory_space<vmem>>, %arg2: memref<16x128xbf16, #tpu.memory_space<vmem>>, %arg3: memref<128x128xbf16, #tpu.memory_space<vmem>>, %arg4: memref<1x128xf32, #tpu.memory_space<vmem>>, %arg5: memref<128x128xbf16, #tpu.memory_space<vmem>>, %arg6: memref<1x128xf32, #tpu.memory_space<vmem>>, %arg7: memref<16x128xbf16, #tpu.memory_space<vmem>>) attributes {dimension_semantics = [#tpu.dimension_semantics<parallel>], iteration_bounds = array<i64: 1>, scalar_prefetch = 0 : i64, scratch_operands = 0 : i64, tpu.core_type = #tpu.core_type<tc>, window_params = [{transform_indices = @transform_0, window_bounds = array<i64: 16, 16>}, {pipeline_mode = #tpu.pipeline_mode<synchronous>, transform_indices = @transform_1, window_bounds = array<i64: 16, 128>}, {pipeline_mode = #tpu.pipeline_mode<synchronous>, transform_indices = @transform_2, window_bounds = array<i64: 128, 128>}, {pipeline_mode = #tpu.pipeline_mode<synchronous>, transform_indices = @transform_3, window_bounds = array<i64: 1, 128>}, {pipeline_mode = #tpu.pipeline_mode<synchronous>, transform_indices = @transform_4, window_bounds = array<i64: 128, 128>}, {pipeline_mode = #tpu.pipeline_mode<synchronous>, transform_indices = @transform_5, window_bounds = array<i64: 1, 128>}, {transform_indices = @transform_6, window_bounds = array<i64: 16, 128>}]} {
    %c0 = arith.constant 0 : index
    %c0_0 = arith.constant 0 : index
    %0 = vector.load %arg1[%c0, %c0_0] : memref<16x16xbf16, #tpu.memory_space<vmem>>, vector<16x16xbf16>
    %c0_1 = arith.constant 0 : index
    %c0_2 = arith.constant 0 : index
    %1 = vector.load %arg2[%c0_1, %c0_2] : memref<16x128xbf16, #tpu.memory_space<vmem>>, vector<16x128xbf16>
    %cst = arith.constant dense<0.000000e+00> : vector<16x128xf32>
    %2 = tpu.matmul %0, %1, %cst {dimension_numbers = #tpu.dot_dimension_numbers<[1], [0], [0], [1], [0, 0, 1, 1], [], []>} : vector<16x16xbf16>, vector<16x128xbf16>, vector<16x128xf32> -> vector<16x128xf32>
    %3 = arith.truncf %2 : vector<16x128xf32> to vector<16x128xbf16>
    %c0_3 = arith.constant 0 : index
    %c0_4 = arith.constant 0 : index
    %4 = vector.load %arg3[%c0_3, %c0_4] : memref<128x128xbf16, #tpu.memory_space<vmem>>, vector<128x128xbf16>
    %cst_5 = arith.constant dense<0.000000e+00> : vector<16x128xf32>
    %5 = tpu.matmul %3, %4, %cst_5 {dimension_numbers = #tpu.dot_dimension_numbers<[1], [0], [0], [1], [0, 0, 1, 1], [], []>} : vector<16x128xbf16>, vector<128x128xbf16>, vector<16x128xf32> -> vector<16x128xf32>
    %c0_6 = arith.constant 0 : index
    %c0_7 = arith.constant 0 : index
    %6 = vector.load %arg4[%c0_6, %c0_7] : memref<1x128xf32, #tpu.memory_space<vmem>>, vector<1x128xf32>
    %7 = vector.broadcast %6 : vector<1x128xf32> to vector<16x128xf32>
    %8 = arith.addf %5, %7 : vector<16x128xf32>
    %cst_8 = arith.constant 0.000000e+00 : f32
    %9 = vector.broadcast %cst_8 : f32 to vector<16x128xf32>
    %10 = arith.maximumf %8, %9 : vector<16x128xf32>
    %11 = arith.truncf %10 : vector<16x128xf32> to vector<16x128xbf16>
    %c0_9 = arith.constant 0 : index
    %c0_10 = arith.constant 0 : index
    %12 = vector.load %arg5[%c0_9, %c0_10] : memref<128x128xbf16, #tpu.memory_space<vmem>>, vector<128x128xbf16>
    %cst_11 = arith.constant dense<0.000000e+00> : vector<16x128xf32>
    %13 = tpu.matmul %11, %12, %cst_11 {dimension_numbers = #tpu.dot_dimension_numbers<[1], [0], [0], [1], [0, 0, 1, 1], [], []>} : vector<16x128xbf16>, vector<128x128xbf16>, vector<16x128xf32> -> vector<16x128xf32>
    %c0_12 = arith.constant 0 : index
    %c0_13 = arith.constant 0 : index
    %14 = vector.load %arg6[%c0_12, %c0_13] : memref<1x128xf32, #tpu.memory_space<vmem>>, vector<1x128xf32>
    %15 = vector.broadcast %14 : vector<1x128xf32> to vector<16x128xf32>
    %16 = arith.addf %13, %15 : vector<16x128xf32>
    %cst_14 = arith.constant 0.000000e+00 : f32
    %17 = vector.broadcast %cst_14 : f32 to vector<16x128xf32>
    %18 = arith.maximumf %16, %17 : vector<16x128xf32>
    %19 = arith.truncf %18 : vector<16x128xf32> to vector<16x128xbf16>
    %c0_15 = arith.constant 0 : index
    %c0_16 = arith.constant 0 : index
    %20 = vector.load %arg7[%c0_15, %c0_16] : memref<16x128xbf16, #tpu.memory_space<vmem>>, vector<16x128xbf16>
    tpu.vector_store %arg7[%c0_15, %c0_16], %19 {strides = array<i32>} : memref<16x128xbf16, #tpu.memory_space<vmem>>, vector<16x128xbf16>,
    return
  }
  func.func @transform_0(%arg0: i32) -> (i32, i32) {
    %c0_i32 = arith.constant 0 : i32
    %c0_i32_0 = arith.constant 0 : i32
    return %arg0, %c0_i32 : i32, i32
  }
  func.func @transform_1(%arg0: i32) -> (i32, i32) {
    %c0_i32 = arith.constant 0 : i32
    %c0_i32_0 = arith.constant 0 : i32
    %c0_i32_1 = arith.constant 0 : i32
    return %c0_i32, %c0_i32_0 : i32, i32
  }
  func.func @transform_2(%arg0: i32) -> (i32, i32) {
    %c0_i32 = arith.constant 0 : i32
    %c0_i32_0 = arith.constant 0 : i32
    %c0_i32_1 = arith.constant 0 : i32
    return %c0_i32, %c0_i32_0 : i32, i32
  }
  func.func @transform_3(%arg0: i32) -> (i32, i32) {
    %c0_i32 = arith.constant 0 : i32
    %c0_i32_0 = arith.constant 0 : i32
    %c0_i32_1 = arith.constant 0 : i32
    return %c0_i32, %c0_i32_0 : i32, i32
  }
  func.func @transform_4(%arg0: i32) -> (i32, i32) {
    %c0_i32 = arith.constant 0 : i32
    %c0_i32_0 = arith.constant 0 : i32
    %c0_i32_1 = arith.constant 0 : i32
    return %c0_i32, %c0_i32_0 : i32, i32
  }
  func.func @transform_5(%arg0: i32) -> (i32, i32) {
    %c0_i32 = arith.constant 0 : i32
    %c0_i32_0 = arith.constant 0 : i32
    %c0_i32_1 = arith.constant 0 : i32
    return %c0_i32, %c0_i32_0 : i32, i32
  }
  func.func @transform_6(%arg0: i32) -> (i32, i32) {
    %c0_i32 = arith.constant 0 : i32
    %c0_i32_0 = arith.constant 0 : i32
    return %arg0, %c0_i32 : i32, i32
  }
}

module attributes {stable_mosaic.version = 11 : i64} {
  func.func @_pool_fc_kernel(%arg0: i32, %arg1: memref<8x16xbf16, #tpu.memory_space<vmem>>, %arg2: memref<16x128xbf16, #tpu.memory_space<vmem>>, %arg3: memref<128x128xbf16, #tpu.memory_space<vmem>>, %arg4: memref<1x128xf32, #tpu.memory_space<vmem>>, %arg5: memref<8x128xf32, #tpu.memory_space<vmem>>) attributes {dimension_semantics = [#tpu.dimension_semantics<arbitrary>], iteration_bounds = array<i64: 1>, scalar_prefetch = 0 : i64, scratch_operands = 0 : i64, tpu.core_type = #tpu.core_type<tc>, window_params = [{pipeline_mode = #tpu.pipeline_mode<synchronous>, transform_indices = @transform_0, window_bounds = array<i64: 8, 16>}, {pipeline_mode = #tpu.pipeline_mode<synchronous>, transform_indices = @transform_1, window_bounds = array<i64: 16, 128>}, {pipeline_mode = #tpu.pipeline_mode<synchronous>, transform_indices = @transform_2, window_bounds = array<i64: 128, 128>}, {pipeline_mode = #tpu.pipeline_mode<synchronous>, transform_indices = @transform_3, window_bounds = array<i64: 1, 128>}, {pipeline_mode = #tpu.pipeline_mode<synchronous>, transform_indices = @transform_4, window_bounds = array<i64: 8, 128>}]} {
    %c0 = arith.constant 0 : index
    %c0_0 = arith.constant 0 : index
    %0 = vector.load %arg1[%c0, %c0_0] : memref<8x16xbf16, #tpu.memory_space<vmem>>, vector<8x16xbf16>
    %c0_1 = arith.constant 0 : index
    %c0_2 = arith.constant 0 : index
    %1 = vector.load %arg2[%c0_1, %c0_2] : memref<16x128xbf16, #tpu.memory_space<vmem>>, vector<16x128xbf16>
    %cst = arith.constant dense<0.000000e+00> : vector<8x128xf32>
    %2 = tpu.matmul %0, %1, %cst {dimension_numbers = #tpu.dot_dimension_numbers<[1], [0], [0], [1], [0, 0, 1, 1], [], []>} : vector<8x16xbf16>, vector<16x128xbf16>, vector<8x128xf32> -> vector<8x128xf32>
    %3 = arith.truncf %2 : vector<8x128xf32> to vector<8x128xbf16>
    %c0_3 = arith.constant 0 : index
    %c0_4 = arith.constant 0 : index
    %4 = vector.load %arg3[%c0_3, %c0_4] : memref<128x128xbf16, #tpu.memory_space<vmem>>, vector<128x128xbf16>
    %cst_5 = arith.constant dense<0.000000e+00> : vector<8x128xf32>
    %5 = tpu.matmul %3, %4, %cst_5 {dimension_numbers = #tpu.dot_dimension_numbers<[1], [0], [0], [1], [0, 0, 1, 1], [], []>} : vector<8x128xbf16>, vector<128x128xbf16>, vector<8x128xf32> -> vector<8x128xf32>
    %c0_6 = arith.constant 0 : index
    %c0_7 = arith.constant 0 : index
    %6 = vector.load %arg4[%c0_6, %c0_7] : memref<1x128xf32, #tpu.memory_space<vmem>>, vector<1x128xf32>
    %7 = vector.broadcast %6 : vector<1x128xf32> to vector<8x128xf32>
    %8 = arith.addf %5, %7 : vector<8x128xf32>
    %c0_8 = arith.constant 0 : index
    %c0_9 = arith.constant 0 : index
    %9 = vector.load %arg5[%c0_8, %c0_9] : memref<8x128xf32, #tpu.memory_space<vmem>>, vector<8x128xf32>
    tpu.vector_store %arg5[%c0_8, %c0_9], %8 {strides = array<i32>} : memref<8x128xf32, #tpu.memory_space<vmem>>, vector<8x128xf32>,
    return
  }
  func.func @transform_0(%arg0: i32) -> (i32, i32) {
    %c0_i32 = arith.constant 0 : i32
    %c0_i32_0 = arith.constant 0 : i32
    %c0_i32_1 = arith.constant 0 : i32
    return %c0_i32, %c0_i32_0 : i32, i32
  }
  func.func @transform_1(%arg0: i32) -> (i32, i32) {
    %c0_i32 = arith.constant 0 : i32
    %c0_i32_0 = arith.constant 0 : i32
    %c0_i32_1 = arith.constant 0 : i32
    return %c0_i32, %c0_i32_0 : i32, i32
  }
  func.func @transform_2(%arg0: i32) -> (i32, i32) {
    %c0_i32 = arith.constant 0 : i32
    %c0_i32_0 = arith.constant 0 : i32
    %c0_i32_1 = arith.constant 0 : i32
    return %c0_i32, %c0_i32_0 : i32, i32
  }
  func.func @transform_3(%arg0: i32) -> (i32, i32) {
    %c0_i32 = arith.constant 0 : i32
    %c0_i32_0 = arith.constant 0 : i32
    %c0_i32_1 = arith.constant 0 : i32
    return %c0_i32, %c0_i32_0 : i32, i32
  }
  func.func @transform_4(%arg0: i32) -> (i32, i32) {
    %c0_i32 = arith.constant 0 : i32
    %c0_i32_0 = arith.constant 0 : i32
    %c0_i32_1 = arith.constant 0 : i32
    return %c0_i32, %c0_i32_0 : i32, i32
  }
}

module attributes {stable_mosaic.version = 11 : i64} {
  func.func @_gat_attention_kernel(%arg0: i32, %arg1: memref<16x4xf32, #tpu.memory_space<vmem>>, %arg2: memref<4x16xf32, #tpu.memory_space<vmem>>, %arg3: memref<16x128xbf16, #tpu.memory_space<vmem>>, %arg4: memref<16x16xbf16, #tpu.memory_space<vmem>>, %arg5: memref<4x128xf32, #tpu.memory_space<vmem>>, %arg6: memref<1x128xf32, #tpu.memory_space<vmem>>, %arg7: memref<16x128xbf16, #tpu.memory_space<vmem>>) attributes {dimension_semantics = [#tpu.dimension_semantics<parallel>], iteration_bounds = array<i64: 1>, scalar_prefetch = 0 : i64, scratch_operands = 0 : i64, tpu.core_type = #tpu.core_type<tc>, window_params = [{transform_indices = @transform_0, window_bounds = array<i64: 16, 4>}, {pipeline_mode = #tpu.pipeline_mode<synchronous>, transform_indices = @transform_1, window_bounds = array<i64: 4, 16>}, {pipeline_mode = #tpu.pipeline_mode<synchronous>, transform_indices = @transform_2, window_bounds = array<i64: 16, 128>}, {transform_indices = @transform_3, window_bounds = array<i64: 16, 16>}, {pipeline_mode = #tpu.pipeline_mode<synchronous>, transform_indices = @transform_4, window_bounds = array<i64: 4, 128>}, {pipeline_mode = #tpu.pipeline_mode<synchronous>, transform_indices = @transform_5, window_bounds = array<i64: 1, 128>}, {transform_indices = @transform_6, window_bounds = array<i64: 16, 128>}]} {
    %c0 = arith.constant 0 : index
    %c0_0 = arith.constant 0 : index
    %0 = vector.load %arg4[%c0, %c0_0] : memref<16x16xbf16, #tpu.memory_space<vmem>>, vector<16x16xbf16>
    %1 = arith.extf %0 : vector<16x16xbf16> to vector<16x16xf32>
    %cst = arith.constant 1.000000e+00 : f32
    %2 = vector.broadcast %cst : f32 to vector<16x16xf32>
    %3 = arith.subf %2, %1 : vector<16x16xf32>
    %cst_1 = arith.constant -1.000000e+09 : f32
    %4 = vector.broadcast %cst_1 : f32 to vector<16x16xf32>
    %5 = arith.mulf %3, %4 : vector<16x16xf32>
    %c0_2 = arith.constant 0 : index
    %c0_3 = arith.constant 0 : index
    %6 = vector.load %arg3[%c0_2, %c0_3] : memref<16x128xbf16, #tpu.memory_space<vmem>>, vector<16x128xbf16>
    %7 = arith.extf %6 : vector<16x128xbf16> to vector<16x128xf32>
    %c0_4 = arith.constant 0 : index
    %c0_5 = arith.constant 0 : index
    %8 = vector.load %arg1[%c0_4, %c0_5] : memref<16x4xf32, #tpu.memory_space<vmem>>, vector<16x4xf32>
    %cst_6 = arith.constant 0.000000e+00 : f32
    %9 = vector.broadcast %cst_6 : f32 to vector<16x128xf32>
    %10 = vector.extract_strided_slice %8 {offsets = [0, 0], sizes = [16, 1], strides = [1, 1]} : vector<16x4xf32> to vector<16x1xf32>
    %c0_7 = arith.constant 0 : index
    %c0_8 = arith.constant 0 : index
    %11 = vector.load %arg2[%c0_7, %c0_8] : memref<4x16xf32, #tpu.memory_space<vmem>>, vector<1x16xf32>
    %12 = vector.broadcast %10 : vector<16x1xf32> to vector<16x16xf32>
    %13 = vector.broadcast %11 : vector<1x16xf32> to vector<16x16xf32>
    %14 = arith.addf %12, %13 : vector<16x16xf32>
    %cst_9 = arith.constant 0.000000e+00 : f32
    %15 = vector.broadcast %cst_9 : f32 to vector<16x16xf32>
    %16 = arith.cmpf ogt, %14, %15 : vector<16x16xf32>
    %cst_10 = arith.constant 2.000000e-01 : f32
    %17 = vector.broadcast %cst_10 : f32 to vector<16x16xf32>
    %18 = arith.mulf %17, %14 : vector<16x16xf32>
    %19 = arith.select %16, %14, %18 : vector<16x16xi1>, vector<16x16xf32>
    %20 = arith.addf %19, %5 : vector<16x16xf32>
    %cst_11 = arith.constant dense<0xFF800000> : vector<16xf32>
    %21 = vector.multi_reduction <maximumf>, %20, %cst_11 [1] : vector<16x16xf32> to vector<16xf32>
    %22 = vector.shape_cast %21 : vector<16xf32> to vector<16x1xf32>
    %23 = vector.broadcast %22 : vector<16x1xf32> to vector<16x16xf32>
    %24 = arith.subf %20, %23 : vector<16x16xf32>
    %25 = math.exp %24 : vector<16x16xf32>
    %26 = arith.mulf %25, %1 : vector<16x16xf32>
    %cst_12 = arith.constant dense<0.000000e+00> : vector<16xf32>
    %27 = vector.multi_reduction <add>, %26, %cst_12 [1] : vector<16x16xf32> to vector<16xf32>
    %28 = vector.shape_cast %27 : vector<16xf32> to vector<16x1xf32>
    %29 = tpu.reciprocal %28 {approx = true} : vector<16x1xf32> -> vector<16x1xf32>
    %30 = vector.broadcast %29 : vector<16x1xf32> to vector<16x16xf32>
    %31 = arith.mulf %26, %30 : vector<16x16xf32>
    %c0_13 = arith.constant 0 : index
    %c0_14 = arith.constant 0 : index
    %32 = vector.load %arg5[%c0_13, %c0_14] : memref<4x128xf32, #tpu.memory_space<vmem>>, vector<1x128xf32>
    %33 = vector.broadcast %32 : vector<1x128xf32> to vector<16x128xf32>
    %34 = arith.mulf %7, %33 : vector<16x128xf32>
    %cst_15 = arith.constant dense<0.000000e+00> : vector<16x128xf32>
    %35 = tpu.matmul %31, %34, %cst_15 {dimension_numbers = #tpu.dot_dimension_numbers<[1], [0], [0], [1], [0, 0, 1, 1], [], []>} : vector<16x16xf32>, vector<16x128xf32>, vector<16x128xf32> -> vector<16x128xf32>
    %36 = arith.addf %9, %35 : vector<16x128xf32>
    %37 = vector.extract_strided_slice %8 {offsets = [0, 1], sizes = [16, 1], strides = [1, 1]} : vector<16x4xf32> to vector<16x1xf32>
    %c1 = arith.constant 1 : index
    %c0_16 = arith.constant 0 : index
    %38 = vector.load %arg2[%c1, %c0_16] : memref<4x16xf32, #tpu.memory_space<vmem>>, vector<1x16xf32>
    %39 = vector.broadcast %37 : vector<16x1xf32> to vector<16x16xf32>
    %40 = vector.broadcast %38 : vector<1x16xf32> to vector<16x16xf32>
    %41 = arith.addf %39, %40 : vector<16x16xf32>
    %cst_17 = arith.constant 0.000000e+00 : f32
    %42 = vector.broadcast %cst_17 : f32 to vector<16x16xf32>
    %43 = arith.cmpf ogt, %41, %42 : vector<16x16xf32>
    %cst_18 = arith.constant 2.000000e-01 : f32
    %44 = vector.broadcast %cst_18 : f32 to vector<16x16xf32>
    %45 = arith.mulf %44, %41 : vector<16x16xf32>
    %46 = arith.select %43, %41, %45 : vector<16x16xi1>, vector<16x16xf32>
    %47 = arith.addf %46, %5 : vector<16x16xf32>
    %cst_19 = arith.constant dense<0xFF800000> : vector<16xf32>
    %48 = vector.multi_reduction <maximumf>, %47, %cst_19 [1] : vector<16x16xf32> to vector<16xf32>
    %49 = vector.shape_cast %48 : vector<16xf32> to vector<16x1xf32>
    %50 = vector.broadcast %49 : vector<16x1xf32> to vector<16x16xf32>
    %51 = arith.subf %47, %50 : vector<16x16xf32>
    %52 = math.exp %51 : vector<16x16xf32>
    %53 = arith.mulf %52, %1 : vector<16x16xf32>
    %cst_20 = arith.constant dense<0.000000e+00> : vector<16xf32>
    %54 = vector.multi_reduction <add>, %53, %cst_20 [1] : vector<16x16xf32> to vector<16xf32>
    %55 = vector.shape_cast %54 : vector<16xf32> to vector<16x1xf32>
    %56 = tpu.reciprocal %55 {approx = true} : vector<16x1xf32> -> vector<16x1xf32>
    %57 = vector.broadcast %56 : vector<16x1xf32> to vector<16x16xf32>
    %58 = arith.mulf %53, %57 : vector<16x16xf32>
    %c1_21 = arith.constant 1 : index
    %c0_22 = arith.constant 0 : index
    %59 = vector.load %arg5[%c1_21, %c0_22] : memref<4x128xf32, #tpu.memory_space<vmem>>, vector<1x128xf32>
    %60 = vector.broadcast %59 : vector<1x128xf32> to vector<16x128xf32>
    %61 = arith.mulf %7, %60 : vector<16x128xf32>
    %cst_23 = arith.constant dense<0.000000e+00> : vector<16x128xf32>
    %62 = tpu.matmul %58, %61, %cst_23 {dimension_numbers = #tpu.dot_dimension_numbers<[1], [0], [0], [1], [0, 0, 1, 1], [], []>} : vector<16x16xf32>, vector<16x128xf32>, vector<16x128xf32> -> vector<16x128xf32>
    %63 = arith.addf %36, %62 : vector<16x128xf32>
    %64 = vector.extract_strided_slice %8 {offsets = [0, 2], sizes = [16, 1], strides = [1, 1]} : vector<16x4xf32> to vector<16x1xf32>
    %c2 = arith.constant 2 : index
    %c0_24 = arith.constant 0 : index
    %65 = vector.load %arg2[%c2, %c0_24] : memref<4x16xf32, #tpu.memory_space<vmem>>, vector<1x16xf32>
    %66 = vector.broadcast %64 : vector<16x1xf32> to vector<16x16xf32>
    %67 = vector.broadcast %65 : vector<1x16xf32> to vector<16x16xf32>
    %68 = arith.addf %66, %67 : vector<16x16xf32>
    %cst_25 = arith.constant 0.000000e+00 : f32
    %69 = vector.broadcast %cst_25 : f32 to vector<16x16xf32>
    %70 = arith.cmpf ogt, %68, %69 : vector<16x16xf32>
    %cst_26 = arith.constant 2.000000e-01 : f32
    %71 = vector.broadcast %cst_26 : f32 to vector<16x16xf32>
    %72 = arith.mulf %71, %68 : vector<16x16xf32>
    %73 = arith.select %70, %68, %72 : vector<16x16xi1>, vector<16x16xf32>
    %74 = arith.addf %73, %5 : vector<16x16xf32>
    %cst_27 = arith.constant dense<0xFF800000> : vector<16xf32>
    %75 = vector.multi_reduction <maximumf>, %74, %cst_27 [1] : vector<16x16xf32> to vector<16xf32>
    %76 = vector.shape_cast %75 : vector<16xf32> to vector<16x1xf32>
    %77 = vector.broadcast %76 : vector<16x1xf32> to vector<16x16xf32>
    %78 = arith.subf %74, %77 : vector<16x16xf32>
    %79 = math.exp %78 : vector<16x16xf32>
    %80 = arith.mulf %79, %1 : vector<16x16xf32>
    %cst_28 = arith.constant dense<0.000000e+00> : vector<16xf32>
    %81 = vector.multi_reduction <add>, %80, %cst_28 [1] : vector<16x16xf32> to vector<16xf32>
    %82 = vector.shape_cast %81 : vector<16xf32> to vector<16x1xf32>
    %83 = tpu.reciprocal %82 {approx = true} : vector<16x1xf32> -> vector<16x1xf32>
    %84 = vector.broadcast %83 : vector<16x1xf32> to vector<16x16xf32>
    %85 = arith.mulf %80, %84 : vector<16x16xf32>
    %c2_29 = arith.constant 2 : index
    %c0_30 = arith.constant 0 : index
    %86 = vector.load %arg5[%c2_29, %c0_30] : memref<4x128xf32, #tpu.memory_space<vmem>>, vector<1x128xf32>
    %87 = vector.broadcast %86 : vector<1x128xf32> to vector<16x128xf32>
    %88 = arith.mulf %7, %87 : vector<16x128xf32>
    %cst_31 = arith.constant dense<0.000000e+00> : vector<16x128xf32>
    %89 = tpu.matmul %85, %88, %cst_31 {dimension_numbers = #tpu.dot_dimension_numbers<[1], [0], [0], [1], [0, 0, 1, 1], [], []>} : vector<16x16xf32>, vector<16x128xf32>, vector<16x128xf32> -> vector<16x128xf32>
    %90 = arith.addf %63, %89 : vector<16x128xf32>
    %91 = vector.extract_strided_slice %8 {offsets = [0, 3], sizes = [16, 1], strides = [1, 1]} : vector<16x4xf32> to vector<16x1xf32>
    %c3 = arith.constant 3 : index
    %c0_32 = arith.constant 0 : index
    %92 = vector.load %arg2[%c3, %c0_32] : memref<4x16xf32, #tpu.memory_space<vmem>>, vector<1x16xf32>
    %93 = vector.broadcast %91 : vector<16x1xf32> to vector<16x16xf32>
    %94 = vector.broadcast %92 : vector<1x16xf32> to vector<16x16xf32>
    %95 = arith.addf %93, %94 : vector<16x16xf32>
    %cst_33 = arith.constant 0.000000e+00 : f32
    %96 = vector.broadcast %cst_33 : f32 to vector<16x16xf32>
    %97 = arith.cmpf ogt, %95, %96 : vector<16x16xf32>
    %cst_34 = arith.constant 2.000000e-01 : f32
    %98 = vector.broadcast %cst_34 : f32 to vector<16x16xf32>
    %99 = arith.mulf %98, %95 : vector<16x16xf32>
    %100 = arith.select %97, %95, %99 : vector<16x16xi1>, vector<16x16xf32>
    %101 = arith.addf %100, %5 : vector<16x16xf32>
    %cst_35 = arith.constant dense<0xFF800000> : vector<16xf32>
    %102 = vector.multi_reduction <maximumf>, %101, %cst_35 [1] : vector<16x16xf32> to vector<16xf32>
    %103 = vector.shape_cast %102 : vector<16xf32> to vector<16x1xf32>
    %104 = vector.broadcast %103 : vector<16x1xf32> to vector<16x16xf32>
    %105 = arith.subf %101, %104 : vector<16x16xf32>
    %106 = math.exp %105 : vector<16x16xf32>
    %107 = arith.mulf %106, %1 : vector<16x16xf32>
    %cst_36 = arith.constant dense<0.000000e+00> : vector<16xf32>
    %108 = vector.multi_reduction <add>, %107, %cst_36 [1] : vector<16x16xf32> to vector<16xf32>
    %109 = vector.shape_cast %108 : vector<16xf32> to vector<16x1xf32>
    %110 = tpu.reciprocal %109 {approx = true} : vector<16x1xf32> -> vector<16x1xf32>
    %111 = vector.broadcast %110 : vector<16x1xf32> to vector<16x16xf32>
    %112 = arith.mulf %107, %111 : vector<16x16xf32>
    %c3_37 = arith.constant 3 : index
    %c0_38 = arith.constant 0 : index
    %113 = vector.load %arg5[%c3_37, %c0_38] : memref<4x128xf32, #tpu.memory_space<vmem>>, vector<1x128xf32>
    %114 = vector.broadcast %113 : vector<1x128xf32> to vector<16x128xf32>
    %115 = arith.mulf %7, %114 : vector<16x128xf32>
    %cst_39 = arith.constant dense<0.000000e+00> : vector<16x128xf32>
    %116 = tpu.matmul %112, %115, %cst_39 {dimension_numbers = #tpu.dot_dimension_numbers<[1], [0], [0], [1], [0, 0, 1, 1], [], []>} : vector<16x16xf32>, vector<16x128xf32>, vector<16x128xf32> -> vector<16x128xf32>
    %117 = arith.addf %90, %116 : vector<16x128xf32>
    %c0_40 = arith.constant 0 : index
    %c0_41 = arith.constant 0 : index
    %118 = vector.load %arg6[%c0_40, %c0_41] : memref<1x128xf32, #tpu.memory_space<vmem>>, vector<1x128xf32>
    %119 = vector.broadcast %118 : vector<1x128xf32> to vector<16x128xf32>
    %120 = arith.addf %117, %119 : vector<16x128xf32>
    %cst_42 = arith.constant 0.000000e+00 : f32
    %121 = vector.broadcast %cst_42 : f32 to vector<16x128xf32>
    %122 = arith.maximumf %120, %121 : vector<16x128xf32>
    %123 = arith.truncf %122 : vector<16x128xf32> to vector<16x128xbf16>
    %c0_43 = arith.constant 0 : index
    %c0_44 = arith.constant 0 : index
    %124 = vector.load %arg7[%c0_43, %c0_44] : memref<16x128xbf16, #tpu.memory_space<vmem>>, vector<16x128xbf16>
    tpu.vector_store %arg7[%c0_43, %c0_44], %123 {strides = array<i32>} : memref<16x128xbf16, #tpu.memory_space<vmem>>, vector<16x128xbf16>,
    return
  }
  func.func @transform_0(%arg0: i32) -> (i32, i32) {
    %c0_i32 = arith.constant 0 : i32
    %c0_i32_0 = arith.constant 0 : i32
    return %arg0, %c0_i32 : i32, i32
  }
  func.func @transform_1(%arg0: i32) -> (i32, i32) {
    %c0_i32 = arith.constant 0 : i32
    %c0_i32_0 = arith.constant 0 : i32
    %c0_i32_1 = arith.constant 0 : i32
    return %c0_i32, %c0_i32_0 : i32, i32
  }
  func.func @transform_2(%arg0: i32) -> (i32, i32) {
    %c0_i32 = arith.constant 0 : i32
    %c0_i32_0 = arith.constant 0 : i32
    %c0_i32_1 = arith.constant 0 : i32
    return %c0_i32, %c0_i32_0 : i32, i32
  }
  func.func @transform_3(%arg0: i32) -> (i32, i32) {
    %c0_i32 = arith.constant 0 : i32
    %c0_i32_0 = arith.constant 0 : i32
    return %arg0, %c0_i32 : i32, i32
  }
  func.func @transform_4(%arg0: i32) -> (i32, i32) {
    %c0_i32 = arith.constant 0 : i32
    %c0_i32_0 = arith.constant 0 : i32
    %c0_i32_1 = arith.constant 0 : i32
    return %c0_i32, %c0_i32_0 : i32, i32
  }
  func.func @transform_5(%arg0: i32) -> (i32, i32) {
    %c0_i32 = arith.constant 0 : i32
    %c0_i32_0 = arith.constant 0 : i32
    %c0_i32_1 = arith.constant 0 : i32
    return %c0_i32, %c0_i32_0 : i32, i32
  }
  func.func @transform_6(%arg0: i32) -> (i32, i32) {
    %c0_i32 = arith.constant 0 : i32
    %c0_i32_0 = arith.constant 0 : i32
    return %arg0, %c0_i32 : i32, i32
  }
}

module attributes {stable_mosaic.version = 11 : i64} {
  func.func @_hop_mha_kernel(%arg0: i32, %arg1: memref<16x128xbf16, #tpu.memory_space<vmem>>, %arg2: memref<5x16x128xbf16, #tpu.memory_space<vmem>>, %arg3: memref<128x128xbf16, #tpu.memory_space<vmem>>, %arg4: memref<1x128xf32, #tpu.memory_space<vmem>>, %arg5: memref<128x128xbf16, #tpu.memory_space<vmem>>, %arg6: memref<1x128xf32, #tpu.memory_space<vmem>>, %arg7: memref<128x128xbf16, #tpu.memory_space<vmem>>, %arg8: memref<1x128xf32, #tpu.memory_space<vmem>>, %arg9: memref<128x8xf32, #tpu.memory_space<vmem>>, %arg10: memref<8x128xf32, #tpu.memory_space<vmem>>, %arg11: memref<128x128xbf16, #tpu.memory_space<vmem>>, %arg12: memref<1x128xf32, #tpu.memory_space<vmem>>, %arg13: memref<16x128xbf16, #tpu.memory_space<vmem>>) attributes {dimension_semantics = [#tpu.dimension_semantics<parallel>], iteration_bounds = array<i64: 1>, scalar_prefetch = 0 : i64, scratch_operands = 0 : i64, tpu.core_type = #tpu.core_type<tc>, window_params = [{transform_indices = @transform_0, window_bounds = array<i64: 16, 128>}, {transform_indices = @transform_1, window_bounds = array<i64: 5, 16, 128>}, {pipeline_mode = #tpu.pipeline_mode<synchronous>, transform_indices = @transform_2, window_bounds = array<i64: 128, 128>}, {pipeline_mode = #tpu.pipeline_mode<synchronous>, transform_indices = @transform_3, window_bounds = array<i64: 1, 128>}, {pipeline_mode = #tpu.pipeline_mode<synchronous>, transform_indices = @transform_4, window_bounds = array<i64: 128, 128>}, {pipeline_mode = #tpu.pipeline_mode<synchronous>, transform_indices = @transform_5, window_bounds = array<i64: 1, 128>}, {pipeline_mode = #tpu.pipeline_mode<synchronous>, transform_indices = @transform_6, window_bounds = array<i64: 128, 128>}, {pipeline_mode = #tpu.pipeline_mode<synchronous>, transform_indices = @transform_7, window_bounds = array<i64: 1, 128>}, {pipeline_mode = #tpu.pipeline_mode<synchronous>, transform_indices = @transform_8, window_bounds = array<i64: 128, 8>}, {pipeline_mode = #tpu.pipeline_mode<synchronous>, transform_indices = @transform_9, window_bounds = array<i64: 8, 128>}, {pipeline_mode = #tpu.pipeline_mode<synchronous>, transform_indices = @transform_10, window_bounds = array<i64: 128, 128>}, {pipeline_mode = #tpu.pipeline_mode<synchronous>, transform_indices = @transform_11, window_bounds = array<i64: 1, 128>}, {transform_indices = @transform_12, window_bounds = array<i64: 16, 128>}]} {
    %c0 = arith.constant 0 : index
    %c0_0 = arith.constant 0 : index
    %0 = vector.load %arg1[%c0, %c0_0] : memref<16x128xbf16, #tpu.memory_space<vmem>>, vector<16x128xbf16>
    %c0_1 = arith.constant 0 : index
    %c0_2 = arith.constant 0 : index
    %1 = vector.load %arg3[%c0_1, %c0_2] : memref<128x128xbf16, #tpu.memory_space<vmem>>, vector<128x128xbf16>
    %cst = arith.constant dense<0.000000e+00> : vector<16x128xf32>
    %2 = tpu.matmul %0, %1, %cst {dimension_numbers = #tpu.dot_dimension_numbers<[1], [0], [0], [1], [0, 0, 1, 1], [], []>} : vector<16x128xbf16>, vector<128x128xbf16>, vector<16x128xf32> -> vector<16x128xf32>
    %c0_3 = arith.constant 0 : index
    %c0_4 = arith.constant 0 : index
    %3 = vector.load %arg4[%c0_3, %c0_4] : memref<1x128xf32, #tpu.memory_space<vmem>>, vector<1x128xf32>
    %4 = vector.broadcast %3 : vector<1x128xf32> to vector<16x128xf32>
    %5 = arith.addf %2, %4 : vector<16x128xf32>
    %c0_5 = arith.constant 0 : index
    %c0_6 = arith.constant 0 : index
    %6 = vector.load %arg9[%c0_5, %c0_6] : memref<128x8xf32, #tpu.memory_space<vmem>>, vector<128x8xf32>
    %c0_7 = arith.constant 0 : index
    %c0_8 = arith.constant 0 : index
    %7 = vector.load %arg10[%c0_7, %c0_8] : memref<8x128xf32, #tpu.memory_space<vmem>>, vector<8x128xf32>
    %c0_9 = arith.constant 0 : index
    %c0_10 = arith.constant 0 : index
    %c0_11 = arith.constant 0 : index
    %8 = vector.load %arg2[%c0_9, %c0_10, %c0_11] : memref<5x16x128xbf16, #tpu.memory_space<vmem>>, vector<1x16x128xbf16>
    %9 = vector.shape_cast %8 : vector<1x16x128xbf16> to vector<16x128xbf16>
    %c0_12 = arith.constant 0 : index
    %c0_13 = arith.constant 0 : index
    %10 = vector.load %arg5[%c0_12, %c0_13] : memref<128x128xbf16, #tpu.memory_space<vmem>>, vector<128x128xbf16>
    %cst_14 = arith.constant dense<0.000000e+00> : vector<16x128xf32>
    %11 = tpu.matmul %9, %10, %cst_14 {dimension_numbers = #tpu.dot_dimension_numbers<[1], [0], [0], [1], [0, 0, 1, 1], [], []>} : vector<16x128xbf16>, vector<128x128xbf16>, vector<16x128xf32> -> vector<16x128xf32>
    %c0_15 = arith.constant 0 : index
    %c0_16 = arith.constant 0 : index
    %12 = vector.load %arg6[%c0_15, %c0_16] : memref<1x128xf32, #tpu.memory_space<vmem>>, vector<1x128xf32>
    %13 = vector.broadcast %12 : vector<1x128xf32> to vector<16x128xf32>
    %14 = arith.addf %11, %13 : vector<16x128xf32>
    %c0_17 = arith.constant 0 : index
    %c0_18 = arith.constant 0 : index
    %15 = vector.load %arg7[%c0_17, %c0_18] : memref<128x128xbf16, #tpu.memory_space<vmem>>, vector<128x128xbf16>
    %cst_19 = arith.constant dense<0.000000e+00> : vector<16x128xf32>
    %16 = tpu.matmul %9, %15, %cst_19 {dimension_numbers = #tpu.dot_dimension_numbers<[1], [0], [0], [1], [0, 0, 1, 1], [], []>} : vector<16x128xbf16>, vector<128x128xbf16>, vector<16x128xf32> -> vector<16x128xf32>
    %c0_20 = arith.constant 0 : index
    %c0_21 = arith.constant 0 : index
    %17 = vector.load %arg8[%c0_20, %c0_21] : memref<1x128xf32, #tpu.memory_space<vmem>>, vector<1x128xf32>
    %18 = vector.broadcast %17 : vector<1x128xf32> to vector<16x128xf32>
    %19 = arith.addf %16, %18 : vector<16x128xf32>
    %20 = arith.mulf %5, %14 : vector<16x128xf32>
    %cst_22 = arith.constant dense<0.000000e+00> : vector<16x8xf32>
    %21 = tpu.matmul %20, %6, %cst_22 {dimension_numbers = #tpu.dot_dimension_numbers<[1], [0], [0], [1], [0, 0, 1, 1], [], []>} : vector<16x128xf32>, vector<128x8xf32>, vector<16x8xf32> -> vector<16x8xf32>
    %cst_23 = arith.constant 2.500000e-01 : f32
    %22 = vector.broadcast %cst_23 : f32 to vector<16x8xf32>
    %23 = arith.mulf %21, %22 : vector<16x8xf32>
    %c1 = arith.constant 1 : index
    %c0_24 = arith.constant 0 : index
    %c0_25 = arith.constant 0 : index
    %24 = vector.load %arg2[%c1, %c0_24, %c0_25] : memref<5x16x128xbf16, #tpu.memory_space<vmem>>, vector<1x16x128xbf16>
    %25 = vector.shape_cast %24 : vector<1x16x128xbf16> to vector<16x128xbf16>
    %c0_26 = arith.constant 0 : index
    %c0_27 = arith.constant 0 : index
    %26 = vector.load %arg5[%c0_26, %c0_27] : memref<128x128xbf16, #tpu.memory_space<vmem>>, vector<128x128xbf16>
    %cst_28 = arith.constant dense<0.000000e+00> : vector<16x128xf32>
    %27 = tpu.matmul %25, %26, %cst_28 {dimension_numbers = #tpu.dot_dimension_numbers<[1], [0], [0], [1], [0, 0, 1, 1], [], []>} : vector<16x128xbf16>, vector<128x128xbf16>, vector<16x128xf32> -> vector<16x128xf32>
    %c0_29 = arith.constant 0 : index
    %c0_30 = arith.constant 0 : index
    %28 = vector.load %arg6[%c0_29, %c0_30] : memref<1x128xf32, #tpu.memory_space<vmem>>, vector<1x128xf32>
    %29 = vector.broadcast %28 : vector<1x128xf32> to vector<16x128xf32>
    %30 = arith.addf %27, %29 : vector<16x128xf32>
    %c0_31 = arith.constant 0 : index
    %c0_32 = arith.constant 0 : index
    %31 = vector.load %arg7[%c0_31, %c0_32] : memref<128x128xbf16, #tpu.memory_space<vmem>>, vector<128x128xbf16>
    %cst_33 = arith.constant dense<0.000000e+00> : vector<16x128xf32>
    %32 = tpu.matmul %25, %31, %cst_33 {dimension_numbers = #tpu.dot_dimension_numbers<[1], [0], [0], [1], [0, 0, 1, 1], [], []>} : vector<16x128xbf16>, vector<128x128xbf16>, vector<16x128xf32> -> vector<16x128xf32>
    %c0_34 = arith.constant 0 : index
    %c0_35 = arith.constant 0 : index
    %33 = vector.load %arg8[%c0_34, %c0_35] : memref<1x128xf32, #tpu.memory_space<vmem>>, vector<1x128xf32>
    %34 = vector.broadcast %33 : vector<1x128xf32> to vector<16x128xf32>
    %35 = arith.addf %32, %34 : vector<16x128xf32>
    %36 = arith.mulf %5, %30 : vector<16x128xf32>
    %cst_36 = arith.constant dense<0.000000e+00> : vector<16x8xf32>
    %37 = tpu.matmul %36, %6, %cst_36 {dimension_numbers = #tpu.dot_dimension_numbers<[1], [0], [0], [1], [0, 0, 1, 1], [], []>} : vector<16x128xf32>, vector<128x8xf32>, vector<16x8xf32> -> vector<16x8xf32>
    %cst_37 = arith.constant 2.500000e-01 : f32
    %38 = vector.broadcast %cst_37 : f32 to vector<16x8xf32>
    %39 = arith.mulf %37, %38 : vector<16x8xf32>
    %c2 = arith.constant 2 : index
    %c0_38 = arith.constant 0 : index
    %c0_39 = arith.constant 0 : index
    %40 = vector.load %arg2[%c2, %c0_38, %c0_39] : memref<5x16x128xbf16, #tpu.memory_space<vmem>>, vector<1x16x128xbf16>
    %41 = vector.shape_cast %40 : vector<1x16x128xbf16> to vector<16x128xbf16>
    %c0_40 = arith.constant 0 : index
    %c0_41 = arith.constant 0 : index
    %42 = vector.load %arg5[%c0_40, %c0_41] : memref<128x128xbf16, #tpu.memory_space<vmem>>, vector<128x128xbf16>
    %cst_42 = arith.constant dense<0.000000e+00> : vector<16x128xf32>
    %43 = tpu.matmul %41, %42, %cst_42 {dimension_numbers = #tpu.dot_dimension_numbers<[1], [0], [0], [1], [0, 0, 1, 1], [], []>} : vector<16x128xbf16>, vector<128x128xbf16>, vector<16x128xf32> -> vector<16x128xf32>
    %c0_43 = arith.constant 0 : index
    %c0_44 = arith.constant 0 : index
    %44 = vector.load %arg6[%c0_43, %c0_44] : memref<1x128xf32, #tpu.memory_space<vmem>>, vector<1x128xf32>
    %45 = vector.broadcast %44 : vector<1x128xf32> to vector<16x128xf32>
    %46 = arith.addf %43, %45 : vector<16x128xf32>
    %c0_45 = arith.constant 0 : index
    %c0_46 = arith.constant 0 : index
    %47 = vector.load %arg7[%c0_45, %c0_46] : memref<128x128xbf16, #tpu.memory_space<vmem>>, vector<128x128xbf16>
    %cst_47 = arith.constant dense<0.000000e+00> : vector<16x128xf32>
    %48 = tpu.matmul %41, %47, %cst_47 {dimension_numbers = #tpu.dot_dimension_numbers<[1], [0], [0], [1], [0, 0, 1, 1], [], []>} : vector<16x128xbf16>, vector<128x128xbf16>, vector<16x128xf32> -> vector<16x128xf32>
    %c0_48 = arith.constant 0 : index
    %c0_49 = arith.constant 0 : index
    %49 = vector.load %arg8[%c0_48, %c0_49] : memref<1x128xf32, #tpu.memory_space<vmem>>, vector<1x128xf32>
    %50 = vector.broadcast %49 : vector<1x128xf32> to vector<16x128xf32>
    %51 = arith.addf %48, %50 : vector<16x128xf32>
    %52 = arith.mulf %5, %46 : vector<16x128xf32>
    %cst_50 = arith.constant dense<0.000000e+00> : vector<16x8xf32>
    %53 = tpu.matmul %52, %6, %cst_50 {dimension_numbers = #tpu.dot_dimension_numbers<[1], [0], [0], [1], [0, 0, 1, 1], [], []>} : vector<16x128xf32>, vector<128x8xf32>, vector<16x8xf32> -> vector<16x8xf32>
    %cst_51 = arith.constant 2.500000e-01 : f32
    %54 = vector.broadcast %cst_51 : f32 to vector<16x8xf32>
    %55 = arith.mulf %53, %54 : vector<16x8xf32>
    %c3 = arith.constant 3 : index
    %c0_52 = arith.constant 0 : index
    %c0_53 = arith.constant 0 : index
    %56 = vector.load %arg2[%c3, %c0_52, %c0_53] : memref<5x16x128xbf16, #tpu.memory_space<vmem>>, vector<1x16x128xbf16>
    %57 = vector.shape_cast %56 : vector<1x16x128xbf16> to vector<16x128xbf16>
    %c0_54 = arith.constant 0 : index
    %c0_55 = arith.constant 0 : index
    %58 = vector.load %arg5[%c0_54, %c0_55] : memref<128x128xbf16, #tpu.memory_space<vmem>>, vector<128x128xbf16>
    %cst_56 = arith.constant dense<0.000000e+00> : vector<16x128xf32>
    %59 = tpu.matmul %57, %58, %cst_56 {dimension_numbers = #tpu.dot_dimension_numbers<[1], [0], [0], [1], [0, 0, 1, 1], [], []>} : vector<16x128xbf16>, vector<128x128xbf16>, vector<16x128xf32> -> vector<16x128xf32>
    %c0_57 = arith.constant 0 : index
    %c0_58 = arith.constant 0 : index
    %60 = vector.load %arg6[%c0_57, %c0_58] : memref<1x128xf32, #tpu.memory_space<vmem>>, vector<1x128xf32>
    %61 = vector.broadcast %60 : vector<1x128xf32> to vector<16x128xf32>
    %62 = arith.addf %59, %61 : vector<16x128xf32>
    %c0_59 = arith.constant 0 : index
    %c0_60 = arith.constant 0 : index
    %63 = vector.load %arg7[%c0_59, %c0_60] : memref<128x128xbf16, #tpu.memory_space<vmem>>, vector<128x128xbf16>
    %cst_61 = arith.constant dense<0.000000e+00> : vector<16x128xf32>
    %64 = tpu.matmul %57, %63, %cst_61 {dimension_numbers = #tpu.dot_dimension_numbers<[1], [0], [0], [1], [0, 0, 1, 1], [], []>} : vector<16x128xbf16>, vector<128x128xbf16>, vector<16x128xf32> -> vector<16x128xf32>
    %c0_62 = arith.constant 0 : index
    %c0_63 = arith.constant 0 : index
    %65 = vector.load %arg8[%c0_62, %c0_63] : memref<1x128xf32, #tpu.memory_space<vmem>>, vector<1x128xf32>
    %66 = vector.broadcast %65 : vector<1x128xf32> to vector<16x128xf32>
    %67 = arith.addf %64, %66 : vector<16x128xf32>
    %68 = arith.mulf %5, %62 : vector<16x128xf32>
    %cst_64 = arith.constant dense<0.000000e+00> : vector<16x8xf32>
    %69 = tpu.matmul %68, %6, %cst_64 {dimension_numbers = #tpu.dot_dimension_numbers<[1], [0], [0], [1], [0, 0, 1, 1], [], []>} : vector<16x128xf32>, vector<128x8xf32>, vector<16x8xf32> -> vector<16x8xf32>
    %cst_65 = arith.constant 2.500000e-01 : f32
    %70 = vector.broadcast %cst_65 : f32 to vector<16x8xf32>
    %71 = arith.mulf %69, %70 : vector<16x8xf32>
    %c4 = arith.constant 4 : index
    %c0_66 = arith.constant 0 : index
    %c0_67 = arith.constant 0 : index
    %72 = vector.load %arg2[%c4, %c0_66, %c0_67] : memref<5x16x128xbf16, #tpu.memory_space<vmem>>, vector<1x16x128xbf16>
    %73 = vector.shape_cast %72 : vector<1x16x128xbf16> to vector<16x128xbf16>
    %c0_68 = arith.constant 0 : index
    %c0_69 = arith.constant 0 : index
    %74 = vector.load %arg5[%c0_68, %c0_69] : memref<128x128xbf16, #tpu.memory_space<vmem>>, vector<128x128xbf16>
    %cst_70 = arith.constant dense<0.000000e+00> : vector<16x128xf32>
    %75 = tpu.matmul %73, %74, %cst_70 {dimension_numbers = #tpu.dot_dimension_numbers<[1], [0], [0], [1], [0, 0, 1, 1], [], []>} : vector<16x128xbf16>, vector<128x128xbf16>, vector<16x128xf32> -> vector<16x128xf32>
    %c0_71 = arith.constant 0 : index
    %c0_72 = arith.constant 0 : index
    %76 = vector.load %arg6[%c0_71, %c0_72] : memref<1x128xf32, #tpu.memory_space<vmem>>, vector<1x128xf32>
    %77 = vector.broadcast %76 : vector<1x128xf32> to vector<16x128xf32>
    %78 = arith.addf %75, %77 : vector<16x128xf32>
    %c0_73 = arith.constant 0 : index
    %c0_74 = arith.constant 0 : index
    %79 = vector.load %arg7[%c0_73, %c0_74] : memref<128x128xbf16, #tpu.memory_space<vmem>>, vector<128x128xbf16>
    %cst_75 = arith.constant dense<0.000000e+00> : vector<16x128xf32>
    %80 = tpu.matmul %73, %79, %cst_75 {dimension_numbers = #tpu.dot_dimension_numbers<[1], [0], [0], [1], [0, 0, 1, 1], [], []>} : vector<16x128xbf16>, vector<128x128xbf16>, vector<16x128xf32> -> vector<16x128xf32>
    %c0_76 = arith.constant 0 : index
    %c0_77 = arith.constant 0 : index
    %81 = vector.load %arg8[%c0_76, %c0_77] : memref<1x128xf32, #tpu.memory_space<vmem>>, vector<1x128xf32>
    %82 = vector.broadcast %81 : vector<1x128xf32> to vector<16x128xf32>
    %83 = arith.addf %80, %82 : vector<16x128xf32>
    %84 = arith.mulf %5, %78 : vector<16x128xf32>
    %cst_78 = arith.constant dense<0.000000e+00> : vector<16x8xf32>
    %85 = tpu.matmul %84, %6, %cst_78 {dimension_numbers = #tpu.dot_dimension_numbers<[1], [0], [0], [1], [0, 0, 1, 1], [], []>} : vector<16x128xf32>, vector<128x8xf32>, vector<16x8xf32> -> vector<16x8xf32>
    %cst_79 = arith.constant 2.500000e-01 : f32
    %86 = vector.broadcast %cst_79 : f32 to vector<16x8xf32>
    %87 = arith.mulf %85, %86 : vector<16x8xf32>
    %88 = arith.maximumf %23, %39 : vector<16x8xf32>
    %89 = arith.maximumf %88, %55 : vector<16x8xf32>
    %90 = arith.maximumf %89, %71 : vector<16x8xf32>
    %91 = arith.maximumf %90, %87 : vector<16x8xf32>
    %92 = arith.subf %23, %91 : vector<16x8xf32>
    %93 = math.exp %92 : vector<16x8xf32>
    %94 = arith.subf %39, %91 : vector<16x8xf32>
    %95 = math.exp %94 : vector<16x8xf32>
    %96 = arith.subf %55, %91 : vector<16x8xf32>
    %97 = math.exp %96 : vector<16x8xf32>
    %98 = arith.subf %71, %91 : vector<16x8xf32>
    %99 = math.exp %98 : vector<16x8xf32>
    %100 = arith.subf %87, %91 : vector<16x8xf32>
    %101 = math.exp %100 : vector<16x8xf32>
    %102 = arith.addf %93, %95 : vector<16x8xf32>
    %103 = arith.addf %102, %97 : vector<16x8xf32>
    %104 = arith.addf %103, %99 : vector<16x8xf32>
    %105 = arith.addf %104, %101 : vector<16x8xf32>
    %106 = tpu.reciprocal %105 {approx = true} : vector<16x8xf32> -> vector<16x8xf32>
    %cst_80 = arith.constant 0.000000e+00 : f32
    %107 = vector.broadcast %cst_80 : f32 to vector<16x128xf32>
    %108 = arith.mulf %93, %106 : vector<16x8xf32>
    %cst_81 = arith.constant dense<0.000000e+00> : vector<16x128xf32>
    %109 = tpu.matmul %108, %7, %cst_81 {dimension_numbers = #tpu.dot_dimension_numbers<[1], [0], [0], [1], [0, 0, 1, 1], [], []>} : vector<16x8xf32>, vector<8x128xf32>, vector<16x128xf32> -> vector<16x128xf32>
    %110 = arith.mulf %109, %19 : vector<16x128xf32>
    %111 = arith.addf %107, %110 : vector<16x128xf32>
    %112 = arith.mulf %95, %106 : vector<16x8xf32>
    %cst_82 = arith.constant dense<0.000000e+00> : vector<16x128xf32>
    %113 = tpu.matmul %112, %7, %cst_82 {dimension_numbers = #tpu.dot_dimension_numbers<[1], [0], [0], [1], [0, 0, 1, 1], [], []>} : vector<16x8xf32>, vector<8x128xf32>, vector<16x128xf32> -> vector<16x128xf32>
    %114 = arith.mulf %113, %35 : vector<16x128xf32>
    %115 = arith.addf %111, %114 : vector<16x128xf32>
    %116 = arith.mulf %97, %106 : vector<16x8xf32>
    %cst_83 = arith.constant dense<0.000000e+00> : vector<16x128xf32>
    %117 = tpu.matmul %116, %7, %cst_83 {dimension_numbers = #tpu.dot_dimension_numbers<[1], [0], [0], [1], [0, 0, 1, 1], [], []>} : vector<16x8xf32>, vector<8x128xf32>, vector<16x128xf32> -> vector<16x128xf32>
    %118 = arith.mulf %117, %51 : vector<16x128xf32>
    %119 = arith.addf %115, %118 : vector<16x128xf32>
    %120 = arith.mulf %99, %106 : vector<16x8xf32>
    %cst_84 = arith.constant dense<0.000000e+00> : vector<16x128xf32>
    %121 = tpu.matmul %120, %7, %cst_84 {dimension_numbers = #tpu.dot_dimension_numbers<[1], [0], [0], [1], [0, 0, 1, 1], [], []>} : vector<16x8xf32>, vector<8x128xf32>, vector<16x128xf32> -> vector<16x128xf32>
    %122 = arith.mulf %121, %67 : vector<16x128xf32>
    %123 = arith.addf %119, %122 : vector<16x128xf32>
    %124 = arith.mulf %101, %106 : vector<16x8xf32>
    %cst_85 = arith.constant dense<0.000000e+00> : vector<16x128xf32>
    %125 = tpu.matmul %124, %7, %cst_85 {dimension_numbers = #tpu.dot_dimension_numbers<[1], [0], [0], [1], [0, 0, 1, 1], [], []>} : vector<16x8xf32>, vector<8x128xf32>, vector<16x128xf32> -> vector<16x128xf32>
    %126 = arith.mulf %125, %83 : vector<16x128xf32>
    %127 = arith.addf %123, %126 : vector<16x128xf32>
    %128 = arith.truncf %127 : vector<16x128xf32> to vector<16x128xbf16>
    %c0_86 = arith.constant 0 : index
    %c0_87 = arith.constant 0 : index
    %129 = vector.load %arg11[%c0_86, %c0_87] : memref<128x128xbf16, #tpu.memory_space<vmem>>, vector<128x128xbf16>
    %cst_88 = arith.constant dense<0.000000e+00> : vector<16x128xf32>
    %130 = tpu.matmul %128, %129, %cst_88 {dimension_numbers = #tpu.dot_dimension_numbers<[1], [0], [0], [1], [0, 0, 1, 1], [], []>} : vector<16x128xbf16>, vector<128x128xbf16>, vector<16x128xf32> -> vector<16x128xf32>
    %c0_89 = arith.constant 0 : index
    %c0_90 = arith.constant 0 : index
    %131 = vector.load %arg12[%c0_89, %c0_90] : memref<1x128xf32, #tpu.memory_space<vmem>>, vector<1x128xf32>
    %132 = vector.broadcast %131 : vector<1x128xf32> to vector<16x128xf32>
    %133 = arith.addf %130, %132 : vector<16x128xf32>
    %134 = arith.truncf %133 : vector<16x128xf32> to vector<16x128xbf16>
    %c0_91 = arith.constant 0 : index
    %c0_92 = arith.constant 0 : index
    %135 = vector.load %arg13[%c0_91, %c0_92] : memref<16x128xbf16, #tpu.memory_space<vmem>>, vector<16x128xbf16>
    tpu.vector_store %arg13[%c0_91, %c0_92], %134 {strides = array<i32>} : memref<16x128xbf16, #tpu.memory_space<vmem>>, vector<16x128xbf16>,
    return
  }
  func.func @transform_0(%arg0: i32) -> (i32, i32) {
    %c0_i32 = arith.constant 0 : i32
    %c0_i32_0 = arith.constant 0 : i32
    return %arg0, %c0_i32 : i32, i32
  }
  func.func @transform_1(%arg0: i32) -> (i32, i32, i32) {
    %c0_i32 = arith.constant 0 : i32
    %c0_i32_0 = arith.constant 0 : i32
    %c0_i32_1 = arith.constant 0 : i32
    return %c0_i32, %arg0, %c0_i32_0 : i32, i32, i32
  }
  func.func @transform_2(%arg0: i32) -> (i32, i32) {
    %c0_i32 = arith.constant 0 : i32
    %c0_i32_0 = arith.constant 0 : i32
    %c0_i32_1 = arith.constant 0 : i32
    return %c0_i32, %c0_i32_0 : i32, i32
  }
  func.func @transform_3(%arg0: i32) -> (i32, i32) {
    %c0_i32 = arith.constant 0 : i32
    %c0_i32_0 = arith.constant 0 : i32
    %c0_i32_1 = arith.constant 0 : i32
    return %c0_i32, %c0_i32_0 : i32, i32
  }
  func.func @transform_4(%arg0: i32) -> (i32, i32) {
    %c0_i32 = arith.constant 0 : i32
    %c0_i32_0 = arith.constant 0 : i32
    %c0_i32_1 = arith.constant 0 : i32
    return %c0_i32, %c0_i32_0 : i32, i32
  }
  func.func @transform_5(%arg0: i32) -> (i32, i32) {
    %c0_i32 = arith.constant 0 : i32
    %c0_i32_0 = arith.constant 0 : i32
    %c0_i32_1 = arith.constant 0 : i32
    return %c0_i32, %c0_i32_0 : i32, i32
  }
  func.func @transform_6(%arg0: i32) -> (i32, i32) {
    %c0_i32 = arith.constant 0 : i32
    %c0_i32_0 = arith.constant 0 : i32
    %c0_i32_1 = arith.constant 0 : i32
    return %c0_i32, %c0_i32_0 : i32, i32
  }
  func.func @transform_7(%arg0: i32) -> (i32, i32) {
    %c0_i32 = arith.constant 0 : i32
    %c0_i32_0 = arith.constant 0 : i32
    %c0_i32_1 = arith.constant 0 : i32
    return %c0_i32, %c0_i32_0 : i32, i32
  }
  func.func @transform_8(%arg0: i32) -> (i32, i32) {
    %c0_i32 = arith.constant 0 : i32
    %c0_i32_0 = arith.constant 0 : i32
    %c0_i32_1 = arith.constant 0 : i32
    return %c0_i32, %c0_i32_0 : i32, i32
  }
  func.func @transform_9(%arg0: i32) -> (i32, i32) {
    %c0_i32 = arith.constant 0 : i32
    %c0_i32_0 = arith.constant 0 : i32
    %c0_i32_1 = arith.constant 0 : i32
    return %c0_i32, %c0_i32_0 : i32, i32
  }
  func.func @transform_10(%arg0: i32) -> (i32, i32) {
    %c0_i32 = arith.constant 0 : i32
    %c0_i32_0 = arith.constant 0 : i32
    %c0_i32_1 = arith.constant 0 : i32
    return %c0_i32, %c0_i32_0 : i32, i32
  }
  func.func @transform_11(%arg0: i32) -> (i32, i32) {
    %c0_i32 = arith.constant 0 : i32
    %c0_i32_0 = arith.constant 0 : i32
    %c0_i32_1 = arith.constant 0 : i32
    return %c0_i32, %c0_i32_0 : i32, i32
  }
  func.func @transform_12(%arg0: i32) -> (i32, i32) {
    %c0_i32 = arith.constant 0 : i32
    %c0_i32_0 = arith.constant 0 : i32
    return %arg0, %c0_i32 : i32, i32
  }
}

</mosaic_0001>

<llo_original>
// kernel: graphhop_forward.10
$region0: #{graphhop_forward.10}
  #allocation0 [shape = 'u32[]', space=smem, size = 0x4, offset = 0x4, fixed_abs, tag = 'smem constant byte address 0x4 - core index']
  #allocation1 [shape = 'u32[144,128]{1,0:T(1,128)}', space=vmem, size = 0x12000, scoped, tag = 'internal scratch']
  #allocation2 [shape = 'f32[16,128]{1,0:T(8,128)}', space=vmem, size = 0x2000, scoped, tag = 'scratch operand']
  %s0 = inlined_call_operand.vmem [shape: bf16[16,128], index: 0, kind: input, shape index: {}]
  %s1 = inlined_call_operand.vmem [shape: bf16[128,128], index: 1, kind: input, shape index: {}]
  %s2 = inlined_call_operand.vmem [shape: f32[1,128], index: 2, kind: input, shape index: {}]
  %s3 = inlined_call_operand.vmem [shape: bf16[16,128], index: 3, kind: output, shape index: {}]
  %s4 = sld [smem:[#allocation0]]
  $region30: #{graphhop_forward.10} parent=0
    _
  %s6 = ssub.s32 1, %s4
  %s7 = scalar_select 0, %s6, %s4
  // Predicated region
  $region2: #{graphhop_forward.10} parent=0 // pred_check
    _
  $region3: #{graphhop_forward.10} parent=0 // pred_check_branch
    %9 = sbr.rel (0) target = $region5
  $region4: #{graphhop_forward.10} parent=0 // pred_region
    _
  $region5: #{graphhop_forward.10} parent=0 // pred_fallthru
    _
  // Predicated region
  $region6: #{graphhop_forward.10} parent=0 // pred_check
    _
  $region7: #{graphhop_forward.10} parent=0 // pred_check_branch
    %11 = sbr.rel (0) target = $region9
  $region8: #{graphhop_forward.10} parent=0 // pred_region
    _
  $region9: #{graphhop_forward.10} parent=0 // pred_fallthru
    _
  // Predicated region
  $region10: #{graphhop_forward.10} parent=0 // pred_check
    _
  $region11: #{graphhop_forward.10} parent=0 // pred_check_branch
    %13 = sbr.rel (0) target = $region13
  $region12: #{graphhop_forward.10} parent=0 // pred_region
    _
  $region13: #{graphhop_forward.10} parent=0 // pred_fallthru
    _
  %p15 = scmp.eq.s32.totalorder 0, 0
  // Predicated region
  $region14: #{graphhop_forward.10} parent=0 // pred_check
    %p16 = pneg %p15
  $region15: #{graphhop_forward.10} parent=0 // pred_check_branch
    %18 = sbr.rel (%p16) target = $region17
  $region16: #{graphhop_forward.10} parent=0 // pred_region
    %19 = vst [vmem:[#allocation2] sm:$0xff] 0.0
    %20 = vst [vmem:[#allocation2 + $0x8] sm:$0xff] 0.0
  $region17: #{graphhop_forward.10} parent=0 // pred_fallthru
    _
  %v21 = vld [vmem:[#allocation2] sm:$0xff]
  %v22 = vld [vmem:[#allocation2 + $0x8] sm:$0xff]
  %v23 = vld [vmem:[%s0] sm:$0xf]
  %v24 = vld [vmem:[%s0 + $0x4] sm:$0xf]
  %v25 = vld [vmem:[%s1] sm:$0xf]
  %v26 = vld [vmem:[%s1 + $0x4] sm:$0xf]
  %v27 = vld [vmem:[%s1 + $0x8] sm:$0xf]
  %v28 = vld [vmem:[%s1 + $0xc] sm:$0xf]
  %v29 = vld [vmem:[%s1 + $0x10] sm:$0xf]
  %v30 = vld [vmem:[%s1 + $0x14] sm:$0xf]
  %v31 = vld [vmem:[%s1 + $0x18] sm:$0xf]
  %v32 = vld [vmem:[%s1 + $0x1c] sm:$0xf]
  %v33 = vld [vmem:[%s1 + $0x20] sm:$0xf]
  %v34 = vld [vmem:[%s1 + $0x24] sm:$0xf]
  %v35 = vld [vmem:[%s1 + $0x28] sm:$0xf]
  %v36 = vld [vmem:[%s1 + $0x2c] sm:$0xf]
  %v37 = vld [vmem:[%s1 + $0x30] sm:$0xf]
  %v38 = vld [vmem:[%s1 + $0x34] sm:$0xf]
  %v39 = vld [vmem:[%s1 + $0x38] sm:$0xf]
  %v40 = vld [vmem:[%s1 + $0x3c] sm:$0xf]
  %v43 = vunpack.c.l.b16 %v23
  %v44 = vunpack.c.l.b16 %v24
  %v45 = vpack.c.b16 %v44, %v43
  %v63 = vunpack.c.l.b16 %v25
  %v64 = vunpack.c.l.b16 %v26
  %v65 = vunpack.c.l.b16 %v27
  %v66 = vunpack.c.l.b16 %v28
  %v67 = vunpack.c.l.b16 %v29
  %v68 = vunpack.c.l.b16 %v30
  %v69 = vunpack.c.l.b16 %v31
  %v70 = vunpack.c.l.b16 %v32
  %v71 = vunpack.c.l.b16 %v33
  %v72 = vunpack.c.l.b16 %v34
  %v73 = vunpack.c.l.b16 %v35
  %v74 = vunpack.c.l.b16 %v36
  %v75 = vunpack.c.l.b16 %v37
  %v76 = vunpack.c.l.b16 %v38
  %v77 = vunpack.c.l.b16 %v39
  %v78 = vunpack.c.l.b16 %v40
  %v79 = vpack.c.b16 %v64, %v63
  %v80 = vpack.c.b16 %v66, %v65
  %v81 = vpack.c.b16 %v68, %v67
  %v82 = vpack.c.b16 %v70, %v69
  %v83 = vpack.c.b16 %v72, %v71
  %v84 = vpack.c.b16 %v74, %v73
  %v85 = vpack.c.b16 %v76, %v75
  %v86 = vpack.c.b16 %v78, %v77
  %95 = vmatprep.subr.bf16.mxu0 0
  %96 = vmatpush1.bf16.msra.mxu0 %v79
  %97 = vmatprep.subr.bf16.mxu0 0
  %98 = vmatpush1.bf16.msra.mxu0 %v80
  %99 = vmatprep.subr.bf16.mxu0 0
  %100 = vmatpush1.bf16.msra.mxu0 %v81
  %101 = vmatprep.subr.bf16.mxu0 0
  %102 = vmatpush1.bf16.msra.mxu0 %v82
  %103 = vmatprep.subr.bf16.mxu0 0
  %104 = vmatpush1.bf16.msra.mxu0 %v83
  %105 = vmatprep.subr.bf16.mxu0 0
  %106 = vmatpush1.bf16.msra.mxu0 %v84
  %107 = vmatprep.subr.bf16.mxu0 0
  %108 = vmatpush1.bf16.msra.mxu0 %v85
  %109 = vmatprep.subr.bf16.mxu0 0
  %110 = vmatpush1.bf16.msra.mxu0 %v86
  %111 = vmatprep.subr.bf16.mxu0 0
  %112 = vmatpush1.bf16.msra.mxu0 0
  %113 = vmatprep.subr.bf16.mxu0 0
  %114 = vmatpush1.bf16.msra.mxu0 0
  %115 = vmatprep.subr.bf16.mxu0 0
  %116 = vmatpush1.bf16.msra.mxu0 0
  %117 = vmatprep.subr.bf16.mxu0 0
  %118 = vmatpush1.bf16.msra.mxu0 0
  %119 = vmatprep.subr.bf16.mxu0 0
  %120 = vmatpush1.bf16.msra.mxu0 0
  %121 = vmatprep.subr.bf16.mxu0 0
  %122 = vmatpush1.bf16.msra.mxu0 0
  %123 = vmatprep.subr.bf16.mxu0 0
  %124 = vmatpush1.bf16.msra.mxu0 0
  %125 = vmatprep.subr.bf16.mxu0 0
  %126 = vmatpush1.bf16.msra.mxu0 0
  %127 = vmatprep.mubr.bf16.mxu0 0
  %128 = vmatmul.mubr.bf16.gmra.mrb[0].mxu0 %v45
  %v129 = vpop.f32.mrb[0].mxu0
  %v130 = vadd.f32 0.0, %v129
  %v131 = vpop.f32.mrb[0].mxu0
  %v132 = vpop.f32.mrb[0].mxu0
  %v133 = vadd.f32 0.0, %v132
  %v134 = vpop.f32.mrb[0].mxu0
  %135 = vdwg.mxu0
  %v136 = vadd.f32 %v21, %v130
  %v137 = vadd.f32 %v22, %v133
  %138 = vst [vmem:[#allocation2] sm:$0xff] %v136
  %139 = vst [vmem:[#allocation2 + $0x8] sm:$0xff] %v137
  // Predicated region
  $region18: #{graphhop_forward.10} parent=0 // pred_check
    %p140 = pneg %p15
  $region19: #{graphhop_forward.10} parent=0 // pred_check_branch
    %142 = sbr.rel (%p140) target = $region21
  $region20: #{graphhop_forward.10} parent=0 // pred_region
    %v143 = vld [vmem:[#allocation2] sm:$0xff]
    %v144 = vld [vmem:[#allocation2 + $0x8] sm:$0xff]
    %v145 = vld [vmem:[%s2] sm:$0x1]
    %v147 = vlaneseq
    %v148 = vshrl.u32 %v147, 7
    %v149 = vsub.s32 0, %v148
    %v150 = vrot.slane %v145, %v149
    %v152 = vadd.f32 %v143, %v150
    %v153 = vadd.f32 %v144, %v150
    %v154 = vpack.c.bf16 %v153, %v152
    %v156 = vunpack.c.l.b16 %v154
    %v157 = vunpack.c.h.b16 %v154
    %v158 = vpack.c.b16 %v156, %v156
    %v159 = vpack.c.b16 %v157, %v157
    %162 = vst [vmem:[%s3] sm:$0xf] %v158
    %163 = vst [vmem:[%s3 + $0x4] sm:$0xf] %v159
  $region21: #{graphhop_forward.10} parent=0 // pred_fallthru
    _
  // Predicated region
  $region22: #{graphhop_forward.10} parent=0 // pred_check
    _
  $region23: #{graphhop_forward.10} parent=0 // pred_check_branch
    %165 = sbr.rel (0) target = $region25
  $region24: #{graphhop_forward.10} parent=0 // pred_region
    _
  $region25: #{graphhop_forward.10} parent=0 // pred_fallthru
    _
  // Predicated region
  $region26: #{graphhop_forward.10} parent=0 // pred_check
    _
  $region27: #{graphhop_forward.10} parent=0 // pred_check_branch
    %167 = sbr.rel (0) target = $region29
  $region28: #{graphhop_forward.10} parent=0 // pred_region
    _
  $region29: #{graphhop_forward.10} parent=0 // pred_fallthru
    _

// kernel: graphhop_forward.11
$region0: #{graphhop_forward.11}
  #allocation0 [shape = 'u32[]', space=smem, size = 0x4, offset = 0x4, fixed_abs, tag = 'smem constant byte address 0x4 - core index']
  #allocation1 [shape = 'u32[144,128]{1,0:T(1,128)}', space=vmem, size = 0x12000, scoped, tag = 'internal scratch']
  %s0 = inlined_call_operand.vmem [shape: bf16[16,16], index: 0, kind: input, shape index: {}]
  %s1 = inlined_call_operand.vmem [shape: bf16[16,128], index: 1, kind: input, shape index: {}]
  %s2 = inlined_call_operand.vmem [shape: bf16[128,128], index: 2, kind: input, shape index: {}]
  %s3 = inlined_call_operand.vmem [shape: f32[1,128], index: 3, kind: input, shape index: {}]
  %s4 = inlined_call_operand.vmem [shape: bf16[128,128], index: 4, kind: input, shape index: {}]
  %s5 = inlined_call_operand.vmem [shape: f32[1,128], index: 5, kind: input, shape index: {}]
  %s6 = inlined_call_operand.vmem [shape: bf16[16,128], index: 6, kind: output, shape index: {}]
  %s7 = sld [smem:[#allocation0]]
  $region34: #{graphhop_forward.11} parent=0
    _
  %s9 = ssub.s32 1, %s7
  %s10 = scalar_select 0, %s9, %s7
  // Predicated region
  $region2: #{graphhop_forward.11} parent=0 // pred_check
    _
  $region3: #{graphhop_forward.11} parent=0 // pred_check_branch
    %12 = sbr.rel (0) target = $region5
  $region4: #{graphhop_forward.11} parent=0 // pred_region
    _
  $region5: #{graphhop_forward.11} parent=0 // pred_fallthru
    _
  // Predicated region
  $region6: #{graphhop_forward.11} parent=0 // pred_check
    _
  $region7: #{graphhop_forward.11} parent=0 // pred_check_branch
    %14 = sbr.rel (0) target = $region9
  $region8: #{graphhop_forward.11} parent=0 // pred_region
    _
  $region9: #{graphhop_forward.11} parent=0 // pred_fallthru
    _
  // Predicated region
  $region10: #{graphhop_forward.11} parent=0 // pred_check
    _
  $region11: #{graphhop_forward.11} parent=0 // pred_check_branch
    %16 = sbr.rel (0) target = $region13
  $region12: #{graphhop_forward.11} parent=0 // pred_region
    _
  $region13: #{graphhop_forward.11} parent=0 // pred_fallthru
    _
  // Predicated region
  $region14: #{graphhop_forward.11} parent=0 // pred_check
    _
  $region15: #{graphhop_forward.11} parent=0 // pred_check_branch
    %18 = sbr.rel (0) target = $region17
  $region16: #{graphhop_forward.11} parent=0 // pred_region
    _
  $region17: #{graphhop_forward.11} parent=0 // pred_fallthru
    _
  // Predicated region
  $region18: #{graphhop_forward.11} parent=0 // pred_check
    _
  $region19: #{graphhop_forward.11} parent=0 // pred_check_branch
    %20 = sbr.rel (0) target = $region21
  $region20: #{graphhop_forward.11} parent=0 // pred_region
    _
  $region21: #{graphhop_forward.11} parent=0 // pred_fallthru
    _
  // Predicated region
  $region22: #{graphhop_forward.11} parent=0 // pred_check
    _
  $region23: #{graphhop_forward.11} parent=0 // pred_check_branch
    %22 = sbr.rel (0) target = $region25
  $region24: #{graphhop_forward.11} parent=0 // pred_region
    _
  $region25: #{graphhop_forward.11} parent=0 // pred_fallthru
    _
  %v24 = vld [vmem:[%s0] sm:$0xf]
  %v25 = vld [vmem:[%s0 + $0x4] sm:$0xf]
  %v26 = vld [vmem:[%s1] sm:$0xf]
  %v27 = vld [vmem:[%s1 + $0x4] sm:$0xf]
  %v30 = vunpack.c.l.b16 %v24
  %v31 = vunpack.c.l.b16 %v25
  %v32 = vpack.c.b16 %v31, %v30
  %v35 = vunpack.c.l.b16 %v26
  %v36 = vunpack.c.l.b16 %v27
  %v37 = vpack.c.b16 %v36, %v35
  %vm39 = vcmask 130048
  %v41 = vsel %vm39, %v32, 0
  %43 = vmatprep.subr.bf16.mxu0 0
  %44 = vmatpush1.bf16.msra.mxu0 %v37
  %45 = vmatprep.subr.bf16.mxu0 0
  %46 = vmatpush1.bf16.msra.mxu0 0
  %47 = vmatprep.subr.bf16.mxu0 0
  %48 = vmatpush1.bf16.msra.mxu0 0
  %49 = vmatprep.subr.bf16.mxu0 0
  %50 = vmatpush1.bf16.msra.mxu0 0
  %51 = vmatprep.subr.bf16.mxu0 0
  %52 = vmatpush1.bf16.msra.mxu0 0
  %53 = vmatprep.subr.bf16.mxu0 0
  %54 = vmatpush1.bf16.msra.mxu0 0
  %55 = vmatprep.subr.bf16.mxu0 0
  %56 = vmatpush1.bf16.msra.mxu0 0
  %57 = vmatprep.subr.bf16.mxu0 0
  %58 = vmatpush1.bf16.msra.mxu0 0
  %59 = vmatprep.subr.bf16.mxu0 0
  %60 = vmatpush1.bf16.msra.mxu0 0
  %61 = vmatprep.subr.bf16.mxu0 0
  %62 = vmatpush1.bf16.msra.mxu0 0
  %63 = vmatprep.subr.bf16.mxu0 0
  %64 = vmatpush1.bf16.msra.mxu0 0
  %65 = vmatprep.subr.bf16.mxu0 0
  %66 = vmatpush1.bf16.msra.mxu0 0
  %67 = vmatprep.subr.bf16.mxu0 0
  %68 = vmatpush1.bf16.msra.mxu0 0
  %69 = vmatprep.subr.bf16.mxu0 0
  %70 = vmatpush1.bf16.msra.mxu0 0
  %71 = vmatprep.subr.bf16.mxu0 0
  %72 = vmatpush1.bf16.msra.mxu0 0
  %73 = vmatprep.subr.bf16.mxu0 0
  %74 = vmatpush1.bf16.msra.mxu0 0
  %75 = vmatprep.mubr.bf16.mxu0 0
  %76 = vmatmul.mubr.bf16.gmra.mrb[0].mxu0 %v41
  %v77 = vpop.f32.mrb[0].mxu0
  %v78 = vadd.f32 0.0, %v77
  %v79 = vpop.f32.mrb[0].mxu0
  %v80 = vpop.f32.mrb[0].mxu0
  %v81 = vadd.f32 0.0, %v80
  %v82 = vpop.f32.mrb[0].mxu0
  %83 = vdwg.mxu0
  %v84 = vpack.c.bf16 %v81, %v78
  %v85 = vld [vmem:[%s2] sm:$0xf]
  %v86 = vld [vmem:[%s2 + $0x4] sm:$0xf]
  %v87 = vld [vmem:[%s2 + $0x8] sm:$0xf]
  %v88 = vld [vmem:[%s2 + $0xc] sm:$0xf]
  %v89 = vld [vmem:[%s2 + $0x10] sm:$0xf]
  %v90 = vld [vmem:[%s2 + $0x14] sm:$0xf]
  %v91 = vld [vmem:[%s2 + $0x18] sm:$0xf]
  %v92 = vld [vmem:[%s2 + $0x1c] sm:$0xf]
  %v93 = vld [vmem:[%s2 + $0x20] sm:$0xf]
  %v94 = vld [vmem:[%s2 + $0x24] sm:$0xf]
  %v95 = vld [vmem:[%s2 + $0x28] sm:$0xf]
  %v96 = vld [vmem:[%s2 + $0x2c] sm:$0xf]
  %v97 = vld [vmem:[%s2 + $0x30] sm:$0xf]
  %v98 = vld [vmem:[%s2 + $0x34] sm:$0xf]
  %v99 = vld [vmem:[%s2 + $0x38] sm:$0xf]
  %v100 = vld [vmem:[%s2 + $0x3c] sm:$0xf]
  %v101 = vld [vmem:[%s3] sm:$0x1]
  %v103 = vlaneseq
  %v104 = vshrl.u32 %v103, 7
  %v105 = vsub.s32 0, %v104
  %v106 = vrot.slane %v101, %v105
  %v124 = vunpack.c.l.b16 %v85
  %v125 = vunpack.c.l.b16 %v86
  %v126 = vunpack.c.l.b16 %v87
  %v127 = vunpack.c.l.b16 %v88
  %v128 = vunpack.c.l.b16 %v89
  %v129 = vunpack.c.l.b16 %v90
  %v130 = vunpack.c.l.b16 %v91
  %v131 = vunpack.c.l.b16 %v92
  %v132 = vunpack.c.l.b16 %v93
  %v133 = vunpack.c.l.b16 %v94
  %v134 = vunpack.c.l.b16 %v95
  %v135 = vunpack.c.l.b16 %v96
  %v136 = vunpack.c.l.b16 %v97
  %v137 = vunpack.c.l.b16 %v98
  %v138 = vunpack.c.l.b16 %v99
  %v139 = vunpack.c.l.b16 %v100
  %v140 = vpack.c.b16 %v125, %v124
  %v141 = vpack.c.b16 %v127, %v126
  %v142 = vpack.c.b16 %v129, %v128
  %v143 = vpack.c.b16 %v131, %v130
  %v144 = vpack.c.b16 %v133, %v132
  %v145 = vpack.c.b16 %v135, %v134
  %v146 = vpack.c.b16 %v137, %v136
  %v147 = vpack.c.b16 %v139, %v138
  %156 = vmatprep.subr.bf16.mxu0 0
  %157 = vmatpush1.bf16.msra.mxu0 %v140
  %158 = vmatprep.subr.bf16.mxu0 0
  %159 = vmatpush1.bf16.msra.mxu0 %v141
  %160 = vmatprep.subr.bf16.mxu0 0
  %161 = vmatpush1.bf16.msra.mxu0 %v142
  %162 = vmatprep.subr.bf16.mxu0 0
  %163 = vmatpush1.bf16.msra.mxu0 %v143
  %164 = vmatprep.subr.bf16.mxu0 0
  %165 = vmatpush1.bf16.msra.mxu0 %v144
  %166 = vmatprep.subr.bf16.mxu0 0
  %167 = vmatpush1.bf16.msra.mxu0 %v145
  %168 = vmatprep.subr.bf16.mxu0 0
  %169 = vmatpush1.bf16.msra.mxu0 %v146
  %170 = vmatprep.subr.bf16.mxu0 0
  %171 = vmatpush1.bf16.msra.mxu0 %v147
  %172 = vmatprep.subr.bf16.mxu0 0
  %173 = vmatpush1.bf16.msra.mxu0 0
  %174 = vmatprep.subr.bf16.mxu0 0
  %175 = vmatpush1.bf16.msra.mxu0 0
  %176 = vmatprep.subr.bf16.mxu0 0
  %177 = vmatpush1.bf16.msra.mxu0 0
  %178 = vmatprep.subr.bf16.mxu0 0
  %179 = vmatpush1.bf16.msra.mxu0 0
  %180 = vmatprep.subr.bf16.mxu0 0
  %181 = vmatpush1.bf16.msra.mxu0 0
  %182 = vmatprep.subr.bf16.mxu0 0
  %183 = vmatpush1.bf16.msra.mxu0 0
  %184 = vmatprep.subr.bf16.mxu0 0
  %185 = vmatpush1.bf16.msra.mxu0 0
  %186 = vmatprep.subr.bf16.mxu0 0
  %187 = vmatpush1.bf16.msra.mxu0 0
  %188 = vmatprep.mubr.bf16.mxu0 0
  %189 = vmatmul.mubr.bf16.gmra.mrb[0].mxu0 %v84
  %v190 = vpop.f32.mrb[0].mxu0
  %v191 = vadd.f32 %v106, %v190
  %v192 = vpop.f32.mrb[0].mxu0
  %v193 = vpop.f32.mrb[0].mxu0
  %v194 = vadd.f32 %v106, %v193
  %v195 = vpop.f32.mrb[0].mxu0
  %196 = vdwg.mxu0
  %v197 = vmax.f32 %v191, 0.0
  %v198 = vmax.f32 %v194, 0.0
  %v199 = vpack.c.bf16 %v198, %v197
  %v200 = vld [vmem:[%s4] sm:$0xf]
  %v201 = vld [vmem:[%s4 + $0x4] sm:$0xf]
  %v202 = vld [vmem:[%s4 + $0x8] sm:$0xf]
  %v203 = vld [vmem:[%s4 + $0xc] sm:$0xf]
  %v204 = vld [vmem:[%s4 + $0x10] sm:$0xf]
  %v205 = vld [vmem:[%s4 + $0x14] sm:$0xf]
  %v206 = vld [vmem:[%s4 + $0x18] sm:$0xf]
  %v207 = vld [vmem:[%s4 + $0x1c] sm:$0xf]
  %v208 = vld [vmem:[%s4 + $0x20] sm:$0xf]
  %v209 = vld [vmem:[%s4 + $0x24] sm:$0xf]
  %v210 = vld [vmem:[%s4 + $0x28] sm:$0xf]
  %v211 = vld [vmem:[%s4 + $0x2c] sm:$0xf]
  %v212 = vld [vmem:[%s4 + $0x30] sm:$0xf]
  %v213 = vld [vmem:[%s4 + $0x34] sm:$0xf]
  %v214 = vld [vmem:[%s4 + $0x38] sm:$0xf]
  %v215 = vld [vmem:[%s4 + $0x3c] sm:$0xf]
  %v216 = vld [vmem:[%s5] sm:$0x1]
  %v218 = vlaneseq
  %v219 = vshrl.u32 %v218, 7
  %v220 = vsub.s32 0, %v219
  %v221 = vrot.slane %v216, %v220
  %v239 = vunpack.c.l.b16 %v200
  %v240 = vunpack.c.l.b16 %v201
  %v241 = vunpack.c.l.b16 %v202
  %v242 = vunpack.c.l.b16 %v203
  %v243 = vunpack.c.l.b16 %v204
  %v244 = vunpack.c.l.b16 %v205
  %v245 = vunpack.c.l.b16 %v206
  %v246 = vunpack.c.l.b16 %v207
  %v247 = vunpack.c.l.b16 %v208
  %v248 = vunpack.c.l.b16 %v209
  %v249 = vunpack.c.l.b16 %v210
  %v250 = vunpack.c.l.b16 %v211
  %v251 = vunpack.c.l.b16 %v212
  %v252 = vunpack.c.l.b16 %v213
  %v253 = vunpack.c.l.b16 %v214
  %v254 = vunpack.c.l.b16 %v215
  %v255 = vpack.c.b16 %v240, %v239
  %v256 = vpack.c.b16 %v242, %v241
  %v257 = vpack.c.b16 %v244, %v243
  %v258 = vpack.c.b16 %v246, %v245
  %v259 = vpack.c.b16 %v248, %v247
  %v260 = vpack.c.b16 %v250, %v249
  %v261 = vpack.c.b16 %v252, %v251
  %v262 = vpack.c.b16 %v254, %v253
  %271 = vmatprep.subr.bf16.mxu0 0
  %272 = vmatpush1.bf16.msra.mxu0 %v255
  %273 = vmatprep.subr.bf16.mxu0 0
  %274 = vmatpush1.bf16.msra.mxu0 %v256
  %275 = vmatprep.subr.bf16.mxu0 0
  %276 = vmatpush1.bf16.msra.mxu0 %v257
  %277 = vmatprep.subr.bf16.mxu0 0
  %278 = vmatpush1.bf16.msra.mxu0 %v258
  %279 = vmatprep.subr.bf16.mxu0 0
  %280 = vmatpush1.bf16.msra.mxu0 %v259
  %281 = vmatprep.subr.bf16.mxu0 0
  %282 = vmatpush1.bf16.msra.mxu0 %v260
  %283 = vmatprep.subr.bf16.mxu0 0
  %284 = vmatpush1.bf16.msra.mxu0 %v261
  %285 = vmatprep.subr.bf16.mxu0 0
  %286 = vmatpush1.bf16.msra.mxu0 %v262
  %287 = vmatprep.subr.bf16.mxu0 0
  %288 = vmatpush1.bf16.msra.mxu0 0
  %289 = vmatprep.subr.bf16.mxu0 0
  %290 = vmatpush1.bf16.msra.mxu0 0
  %291 = vmatprep.subr.bf16.mxu0 0
  %292 = vmatpush1.bf16.msra.mxu0 0
  %293 = vmatprep.subr.bf16.mxu0 0
  %294 = vmatpush1.bf16.msra.mxu0 0
  %295 = vmatprep.subr.bf16.mxu0 0
  %296 = vmatpush1.bf16.msra.mxu0 0
  %297 = vmatprep.subr.bf16.mxu0 0
  %298 = vmatpush1.bf16.msra.mxu0 0
  %299 = vmatprep.subr.bf16.mxu0 0
  %300 = vmatpush1.bf16.msra.mxu0 0
  %301 = vmatprep.subr.bf16.mxu0 0
  %302 = vmatpush1.bf16.msra.mxu0 0
  %303 = vmatprep.mubr.bf16.mxu0 0
  %304 = vmatmul.mubr.bf16.gmra.mrb[0].mxu0 %v199
  %v305 = vpop.f32.mrb[0].mxu0
  %v306 = vadd.f32 %v221, %v305
  %v307 = vpop.f32.mrb[0].mxu0
  %v308 = vpop.f32.mrb[0].mxu0
  %v309 = vadd.f32 %v221, %v308
  %v310 = vpop.f32.mrb[0].mxu0
  %311 = vdwg.mxu0
  %v312 = vmax.f32 %v306, 0.0
  %v313 = vmax.f32 %v309, 0.0
  %v314 = vpack.c.bf16 %v313, %v312
  %v316 = vunpack.c.l.b16 %v314
  %v317 = vunpack.c.h.b16 %v314
  %v318 = vpack.c.b16 %v316, %v316
  %v319 = vpack.c.b16 %v317, %v317
  %322 = vst [vmem:[%s6] sm:$0xf] %v318
  %323 = vst [vmem:[%s6 + $0x4] sm:$0xf] %v319
  // Predicated region
  $region26: #{graphhop_forward.11} parent=0 // pred_check
    _
  $region27: #{graphhop_forward.11} parent=0 // pred_check_branch
    %325 = sbr.rel (0) target = $region29
  $region28: #{graphhop_forward.11} parent=0 // pred_region
    _
  $region29: #{graphhop_forward.11} parent=0 // pred_fallthru
    _
  // Predicated region
  $region30: #{graphhop_forward.11} parent=0 // pred_check
    _
  $region31: #{graphhop_forward.11} parent=0 // pred_check_branch
    %327 = sbr.rel (0) target = $region33
  $region32: #{graphhop_forward.11} parent=0 // pred_region
    _
  $region33: #{graphhop_forward.11} parent=0 // pred_fallthru
    _

// kernel: graphhop_forward.14
$region0: #{graphhop_forward.14}
  #allocation0 [shape = 'u32[]', space=smem, size = 0x4, offset = 0x4, fixed_abs, tag = 'smem constant byte address 0x4 - core index']
  #allocation1 [shape = 'u32[144,128]{1,0:T(1,128)}', space=vmem, size = 0x12000, scoped, tag = 'internal scratch']
  #allocation2 [shape = 'f32[16,128]{1,0:T(8,128)}', space=vmem, size = 0x2000, scoped, tag = 'scratch operand']
  %s0 = inlined_call_operand.vmem [shape: bf16[5,16,128], index: 0, kind: input, shape index: {}]
  %s1 = inlined_call_operand.vmem [shape: bf16[5,128,128], index: 1, kind: input, shape index: {}]
  %s2 = inlined_call_operand.vmem [shape: bf16[16,128], index: 2, kind: output, shape index: {}]
  %s3 = sld [smem:[#allocation0]]
  $region49: #{graphhop_forward.14} parent=0
    _
  %s5 = ssub.s32 1, %s3
  %s6 = scalar_select 0, %s5, %s3
  loop: start=0, step=1, limit=7
  $region2: #{graphhop_forward.14} parent=0 // loop_pre_header
    _
  $region3: #{graphhop_forward.14} parent=0 // loop_header
    %s8 = sphi 0, %s12
    %p9 = scmp.ge.s32.totalorder %s8, 7
    %s15 = sphi 0, %s27
    %s16 = sphi 0, %s23
    %s17 = sphi 0, %s15
    %s18 = sphi 0, %s16
    %s19 = sphi 0, %s17
    %s20 = sphi 0, %s18
    %s32 = sphi 0, %s34
    %s35 = sphi 0, %s32
    %s36 = sphi 0, %s35
    %s52 = sphi 0, %s36
    %s58 = sphi 0, %s60
    %s61 = sphi 0, %s58
    %s62 = sphi 0, %s61
    %s78 = sphi 0, %s62
    %s84 = sphi 0, %s86
    %s87 = sphi 0, %s84
    %s88 = sphi 0, %s87
    %s104 = sphi 0, %s88
  $region4: #{graphhop_forward.14} parent=0 // loop_header_branch
    %11 = sbr.rel (%p9) target = $region8
  $region5: #{graphhop_forward.14} parent=0 // loop_body
    %s13 = ssub.s32 %s8, 1
    %s14 = ssub.s32 %s8, 2
    %s21 = sadd.s32 1, %s16
    %p22 = scmp.ge.s32.totalorder %s21, 5
    %s23 = scalar_select %p22, 0, %s21
    %s24 = sadd.s32 1, %s15
    %s25 = scalar_select %p22, %s24, %s15
    %p26 = scmp.ge.s32.totalorder %s25, 1
    %s27 = scalar_select %p26, 0, %s25
    %s28 = ssub.s32 %s16, %s23
    %s29 = ssub.s32 %s15, %s27
    %s30 = sor.u32 %s28, %s29
    %p31 = scmp.eq.s32.totalorder %s30, 0
    %s33 = sadd.s32 %s32, 1
    %s34 = scalar_select %p31, %s32, %s33
    %p37 = pneg %p31
    %p38 = scmp.eq.s32.totalorder %s8, 4
    %p39 = por %p37, %p38
    %p40 = scmp.ne.s32.totalorder %s32, %s35
    %p41 = scmp.eq.s32.totalorder %s8, 0
    %p42 = por %p40, %p41
    %p43 = scmp.ne.s32.totalorder %s32, %s35
    %p44 = scmp.eq.s32.totalorder %s13, 4
    %p45 = por %p43, %p44
    %p46 = scmp.ne.s32.totalorder %s35, %s36
    %p47 = scmp.eq.s32.totalorder %s13, 0
    %p48 = por %p46, %p47
    %p49 = scmp.ne.s32.totalorder %s35, %s36
    %p50 = scmp.eq.s32.totalorder %s14, 4
    %p51 = por %p49, %p50
    %p53 = scmp.ne.s32.totalorder %s36, %s52
    %p54 = scmp.eq.s32.totalorder %s14, 0
    %p55 = por %p53, %p54
    %s56 = ssub.s32 %s16, %s23
    %p57 = scmp.eq.s32.totalorder %s56, 0
    %s59 = sadd.s32 %s58, 1
    %s60 = scalar_select %p57, %s58, %s59
    %p63 = pneg %p57
    %p64 = scmp.eq.s32.totalorder %s8, 4
    %p65 = por %p63, %p64
    %p66 = scmp.ne.s32.totalorder %s58, %s61
    %p67 = scmp.eq.s32.totalorder %s8, 0
    %p68 = por %p66, %p67
    %p69 = scmp.ne.s32.totalorder %s58, %s61
    %p70 = scmp.eq.s32.totalorder %s13, 4
    %p71 = por %p69, %p70
    %p72 = scmp.ne.s32.totalorder %s61, %s62
    %p73 = scmp.eq.s32.totalorder %s13, 0
    %p74 = por %p72, %p73
    %p75 = scmp.ne.s32.totalorder %s61, %s62
    %p76 = scmp.eq.s32.totalorder %s14, 4
    %p77 = por %p75, %p76
    %p79 = scmp.ne.s32.totalorder %s62, %s78
    %p80 = scmp.eq.s32.totalorder %s14, 0
    %p81 = por %p79, %p80
    %s82 = ssub.s32 %s15, %s27
    %p83 = scmp.eq.s32.totalorder %s82, 0
    %s85 = sadd.s32 %s84, 1
    %s86 = scalar_select %p83, %s84, %s85
    %p89 = pneg %p83
    %p90 = scmp.eq.s32.totalorder %s8, 4
    %p91 = por %p89, %p90
    %p92 = scmp.ne.s32.totalorder %s84, %s87
    %p93 = scmp.eq.s32.totalorder %s8, 0
    %p94 = por %p92, %p93
    %p95 = scmp.ne.s32.totalorder %s84, %s87
    %p96 = scmp.eq.s32.totalorder %s13, 4
    %p97 = por %p95, %p96
    %p98 = scmp.ne.s32.totalorder %s87, %s88
    %p99 = scmp.eq.s32.totalorder %s13, 0
    %p100 = por %p98, %p99
    %p101 = scmp.ne.s32.totalorder %s87, %s88
    %p102 = scmp.eq.s32.totalorder %s14, 4
    %p103 = por %p101, %p102
    %p105 = scmp.ne.s32.totalorder %s88, %s104
    %p106 = scmp.eq.s32.totalorder %s14, 0
    %p107 = por %p105, %p106
    %p108 = scmp.le.s32.totalorder 1, %s8
    %p109 = scmp.lt.s32.totalorder %s8, 6
    %p110 = pnand %p108, %p109
    %p111 = pneg %p110
    // Predicated region
    $region9: #{graphhop_forward.14} parent=5 // pred_check
      _
    $region10: #{graphhop_forward.14} parent=5 // pred_check_branch
      %113 = sbr.rel (%p110) target = $region12
    $region11: #{graphhop_forward.14} parent=5 // pred_region
      %s114 = ssub.s32 %s8, 1
    $region12: #{graphhop_forward.14} parent=5 // pred_fallthru
      _
    %p115 = scmp.lt.s32.totalorder %s8, 5
    // Predicated region
    $region13: #{graphhop_forward.14} parent=5 // pred_check
      %p116 = pneg %p115
    $region14: #{graphhop_forward.14} parent=5 // pred_check_branch
      %118 = sbr.rel (%p116) target = $region16
    $region15: #{graphhop_forward.14} parent=5 // pred_region
      // Predicated region
      $region17: #{graphhop_forward.14} parent=15 // pred_check
        %p119 = pneg %p42
      $region18: #{graphhop_forward.14} parent=15 // pred_check_branch
        %121 = sbr.rel (%p119) target = $region20
      $region19: #{graphhop_forward.14} parent=15 // pred_region
        %s122 = smul.u32 2, %s15
        %p123 = scmp.lt.s32.totalorder %s16, 4
        %s124 = scalar_select %p123, %s16, 4
        %p125 = scmp.lt.s32.totalorder %s122, 1
        %s126 = scalar_select %p125, %s122, 1
        %s127 = smul.addr %s124, 2
        %s128 = sadd.s32 %s126, %s127
        %s129 = smul.addr %s128, 4
        %s130 = scalar_lea.vmem %s0, %s129
        %s131 = smul.u32 2, %s15
      $region20: #{graphhop_forward.14} parent=15 // pred_fallthru
        _
      // Predicated region
      $region21: #{graphhop_forward.14} parent=15 // pred_check
        %p132 = pneg %p68
      $region22: #{graphhop_forward.14} parent=15 // pred_check_branch
        %134 = sbr.rel (%p132) target = $region24
      $region23: #{graphhop_forward.14} parent=15 // pred_region
        %p135 = scmp.lt.s32.totalorder %s16, 4
        %s136 = scalar_select %p135, %s16, 4
        %s137 = smul.addr %s136, 16
        %s138 = smul.addr %s137, 4
        %s139 = scalar_lea.vmem %s1, %s138
      $region24: #{graphhop_forward.14} parent=15 // pred_fallthru
        _
    $region16: #{graphhop_forward.14} parent=5 // pred_fallthru
      _
    %p140 = scmp.le.s32.totalorder 1, %s8
    %p141 = scmp.lt.s32.totalorder %s8, 6
    %p142 = pnand %p140, %p141
    %p143 = pneg %p142
    // Predicated region
    $region25: #{graphhop_forward.14} parent=5 // pred_check
      _
    $region26: #{graphhop_forward.14} parent=5 // pred_check_branch
      %145 = sbr.rel (%p142) target = $region28
    $region27: #{graphhop_forward.14} parent=5 // pred_region
      %s146 = ssub.s32 %s8, 1
      %s147 = smul.u32 2, %s17
      %p148 = scmp.lt.s32.totalorder %s18, 4
      %s149 = scalar_select %p148, %s18, 4
      %p150 = scmp.lt.s32.totalorder %s147, 1
      %s151 = scalar_select %p150, %s147, 1
      %s152 = smul.addr %s149, 2
      %s153 = sadd.s32 %s151, %s152
      %s154 = smul.addr %s153, 4
      %s155 = scalar_lea.vmem %s0, %s154
      %p156 = pneg %p48
      %p157 = pneg %p45
      %p158 = scmp.lt.s32.totalorder %s18, 4
      %s159 = scalar_select %p158, %s18, 4
      %s160 = smul.addr %s159, 16
      %s161 = smul.addr %s160, 4
      %s162 = scalar_lea.vmem %s1, %s161
      %p163 = pneg %p74
      %p164 = pneg %p71
      %p165 = pneg %p100
      %p166 = pneg %p97
      %s167 = smul.u32 2, %s17
      %p168 = scmp.lt.s32.totalorder %s167, 1
      %s169 = scalar_select %p168, %s167, 1
      %s170 = smul.addr %s169, 4
      %s171 = scalar_lea.vmem %s2, %s170
      %s172 = smul.u32 2, %s17
      %p173 = scmp.lt.s32.totalorder %s18, 4
      %s174 = scalar_select %p173, %s18, 4
      %p175 = scmp.lt.s32.totalorder %s172, 1
      %s176 = scalar_select %p175, %s172, 1
      %s177 = smul.addr %s174, 2
      %s178 = sadd.s32 %s176, %s177
      %s179 = smul.addr %s178, 4
      %s180 = scalar_lea.vmem %s0, %s179
      %s181 = smul.u32 2, %s17
      %p182 = scmp.lt.s32.totalorder %s18, 4
      %s183 = scalar_select %p182, %s18, 4
      %s184 = smul.addr %s183, 16
      %s185 = smul.addr %s184, 4
      %s186 = scalar_lea.vmem %s1, %s185
      %s187 = smul.u32 2, %s17
      %p188 = scmp.lt.s32.totalorder %s187, 1
      %s189 = scalar_select %p188, %s187, 1
      %s190 = smul.addr %s189, 4
      %s191 = scalar_lea.vmem %s2, %s190
      %s192 = smul.u32 2, %s17
      %p194 = scmp.eq.s32.totalorder %s18, 0
      // Predicated region
      $region29: #{graphhop_forward.14} parent=27 // pred_check
        %p195 = pneg %p194
      $region30: #{graphhop_forward.14} parent=27 // pred_check_branch
        %197 = sbr.rel (%p195) target = $region32
      $region31: #{graphhop_forward.14} parent=27 // pred_region
        %198 = vst [vmem:[#allocation2] sm:$0xff] 0.0
        %199 = vst [vmem:[#allocation2 + $0x8] sm:$0xff] 0.0
      $region32: #{graphhop_forward.14} parent=27 // pred_fallthru
        _
      %v200 = vld [vmem:[#allocation2] sm:$0xff]
      %v201 = vld [vmem:[#allocation2 + $0x8] sm:$0xff]
      %v202 = vld [vmem:[%s180] sm:$0xf]
      %v203 = vld [vmem:[%s180 + $0x4] sm:$0xf]
      %v204 = vld [vmem:[%s186] sm:$0xf]
      %v205 = vld [vmem:[%s186 + $0x4] sm:$0xf]
      %v206 = vld [vmem:[%s186 + $0x8] sm:$0xf]
      %v207 = vld [vmem:[%s186 + $0xc] sm:$0xf]
      %v208 = vld [vmem:[%s186 + $0x10] sm:$0xf]
      %v209 = vld [vmem:[%s186 + $0x14] sm:$0xf]
      %v210 = vld [vmem:[%s186 + $0x18] sm:$0xf]
      %v211 = vld [vmem:[%s186 + $0x1c] sm:$0xf]
      %v212 = vld [vmem:[%s186 + $0x20] sm:$0xf]
      %v213 = vld [vmem:[%s186 + $0x24] sm:$0xf]
      %v214 = vld [vmem:[%s186 + $0x28] sm:$0xf]
      %v215 = vld [vmem:[%s186 + $0x2c] sm:$0xf]
      %v216 = vld [vmem:[%s186 + $0x30] sm:$0xf]
      %v217 = vld [vmem:[%s186 + $0x34] sm:$0xf]
      %v218 = vld [vmem:[%s186 + $0x38] sm:$0xf]
      %v219 = vld [vmem:[%s186 + $0x3c] sm:$0xf]
      %v222 = vunpack.c.l.b16 %v202
      %v223 = vunpack.c.l.b16 %v203
      %v224 = vpack.c.b16 %v223, %v222
      %v242 = vunpack.c.l.b16 %v204
      %v243 = vunpack.c.l.b16 %v205
      %v244 = vunpack.c.l.b16 %v206
      %v245 = vunpack.c.l.b16 %v207
      %v246 = vunpack.c.l.b16 %v208
      %v247 = vunpack.c.l.b16 %v209
      %v248 = vunpack.c.l.b16 %v210
      %v249 = vunpack.c.l.b16 %v211
      %v250 = vunpack.c.l.b16 %v212
      %v251 = vunpack.c.l.b16 %v213
      %v252 = vunpack.c.l.b16 %v214
      %v253 = vunpack.c.l.b16 %v215
      %v254 = vunpack.c.l.b16 %v216
      %v255 = vunpack.c.l.b16 %v217
      %v256 = vunpack.c.l.b16 %v218
      %v257 = vunpack.c.l.b16 %v219
      %v258 = vpack.c.b16 %v243, %v242
      %v259 = vpack.c.b16 %v245, %v244
      %v260 = vpack.c.b16 %v247, %v246
      %v261 = vpack.c.b16 %v249, %v248
      %v262 = vpack.c.b16 %v251, %v250
      %v263 = vpack.c.b16 %v253, %v252
      %v264 = vpack.c.b16 %v255, %v254
      %v265 = vpack.c.b16 %v257, %v256
      %274 = vmatprep.subr.bf16.mxu0 0
      %275 = vmatpush1.bf16.msra.mxu0 %v258
      %276 = vmatprep.subr.bf16.mxu0 0
      %277 = vmatpush1.bf16.msra.mxu0 %v259
      %278 = vmatprep.subr.bf16.mxu0 0
      %279 = vmatpush1.bf16.msra.mxu0 %v260
      %280 = vmatprep.subr.bf16.mxu0 0
      %281 = vmatpush1.bf16.msra.mxu0 %v261
      %282 = vmatprep.subr.bf16.mxu0 0
      %283 = vmatpush1.bf16.msra.mxu0 %v262
      %284 = vmatprep.subr.bf16.mxu0 0
      %285 = vmatpush1.bf16.msra.mxu0 %v263
      %286 = vmatprep.subr.bf16.mxu0 0
      %287 = vmatpush1.bf16.msra.mxu0 %v264
      %288 = vmatprep.subr.bf16.mxu0 0
      %289 = vmatpush1.bf16.msra.mxu0 %v265
      %290 = vmatprep.subr.bf16.mxu0 0
      %291 = vmatpush1.bf16.msra.mxu0 0
      %292 = vmatprep.subr.bf16.mxu0 0
      %293 = vmatpush1.bf16.msra.mxu0 0
      %294 = vmatprep.subr.bf16.mxu0 0
      %295 = vmatpush1.bf16.msra.mxu0 0
      %296 = vmatprep.subr.bf16.mxu0 0
      %297 = vmatpush1.bf16.msra.mxu0 0
      %298 = vmatprep.subr.bf16.mxu0 0
      %299 = vmatpush1.bf16.msra.mxu0 0
      %300 = vmatprep.subr.bf16.mxu0 0
      %301 = vmatpush1.bf16.msra.mxu0 0
      %302 = vmatprep.subr.bf16.mxu0 0
      %303 = vmatpush1.bf16.msra.mxu0 0
      %304 = vmatprep.subr.bf16.mxu0 0
      %305 = vmatpush1.bf16.msra.mxu0 0
      %306 = vmatprep.mubr.bf16.mxu0 0
      %307 = vmatmul.mubr.bf16.gmra.mrb[0].mxu0 %v224
      %v308 = vpop.f32.mrb[0].mxu0
      %v309 = vadd.f32 0.0, %v308
      %v310 = vpop.f32.mrb[0].mxu0
      %v311 = vpop.f32.mrb[0].mxu0
      %v312 = vadd.f32 0.0, %v311
      %v313 = vpop.f32.mrb[0].mxu0
      %314 = vdwg.mxu0
      %v315 = vadd.f32 %v200, %v309
      %v316 = vadd.f32 %v201, %v312
      %317 = vst [vmem:[#allocation2] sm:$0xff] %v315
      %318 = vst [vmem:[#allocation2 + $0x8] sm:$0xff] %v316
      %p319 = scmp.eq.s32.totalorder %s18, 4
      // Predicated region
      $region33: #{graphhop_forward.14} parent=27 // pred_check
        %p320 = pneg %p319
      $region34: #{graphhop_forward.14} parent=27 // pred_check_branch
        %322 = sbr.rel (%p320) target = $region36
      $region35: #{graphhop_forward.14} parent=27 // pred_region
        %v323 = vld [vmem:[#allocation2] sm:$0xff]
        %v324 = vld [vmem:[#allocation2 + $0x8] sm:$0xff]
        %v325 = vpack.c.bf16 %v324, %v323
        %v327 = vunpack.c.l.b16 %v325
        %v328 = vunpack.c.h.b16 %v325
        %v329 = vpack.c.b16 %v327, %v327
        %v330 = vpack.c.b16 %v328, %v328
        %333 = vst [vmem:[%s191] sm:$0xf] %v329
        %334 = vst [vmem:[%s191 + $0x4] sm:$0xf] %v330
      $region36: #{graphhop_forward.14} parent=27 // pred_fallthru
        _
      %s335 = smul.u32 2, %s17
      %p336 = scmp.lt.s32.totalorder %s335, 1
      %s337 = scalar_select %p336, %s335, 1
      %s338 = smul.addr %s337, 4
      %s339 = scalar_lea.vmem %s2, %s338
      // Predicated region
      $region37: #{graphhop_forward.14} parent=27 // pred_check
        %p340 = pneg %p97
      $region38: #{graphhop_forward.14} parent=27 // pred_check_branch
        %342 = sbr.rel (%p340) target = $region40
      $region39: #{graphhop_forward.14} parent=27 // pred_region
        %s343 = smul.u32 2, %s17
      $region40: #{graphhop_forward.14} parent=27 // pred_fallthru
        _
      // Predicated region
      $region41: #{graphhop_forward.14} parent=27 // pred_check
        %p344 = pneg %p97
      $region42: #{graphhop_forward.14} parent=27 // pred_check_branch
        %346 = sbr.rel (%p344) target = $region44
      $region43: #{graphhop_forward.14} parent=27 // pred_region
        %s347 = smul.u32 2, %s17
        %p348 = scmp.lt.s32.totalorder %s347, 1
        %s349 = scalar_select %p348, %s347, 1
        %s350 = smul.addr %s349, 4
        %s351 = scalar_lea.vmem %s2, %s350
      $region44: #{graphhop_forward.14} parent=27 // pred_fallthru
        _
    $region28: #{graphhop_forward.14} parent=5 // pred_fallthru
      _
    %p352 = scmp.le.s32.totalorder 2, %s8
    // Predicated region
    $region45: #{graphhop_forward.14} parent=5 // pred_check
      %p353 = pneg %p352
    $region46: #{graphhop_forward.14} parent=5 // pred_check_branch
      %355 = sbr.rel (%p353) target = $region48
    $region47: #{graphhop_forward.14} parent=5 // pred_region
      %s356 = ssub.s32 %s8, 2
    $region48: #{graphhop_forward.14} parent=5 // pred_fallthru
      _
  $region6: #{graphhop_forward.14} parent=0 // loop_footer
    %s12 = sadd.s32 1, %s8
  $region7: #{graphhop_forward.14} parent=0 // loop_footer_branch
    %7 = sbr.rel target = $region3
  $region8: #{graphhop_forward.14} parent=0 // loop_exit
    _

// kernel: graphhop_forward.18
$region0: #{graphhop_forward.18}
  #allocation0 [shape = 'u32[]', space=smem, size = 0x4, offset = 0x4, fixed_abs, tag = 'smem constant byte address 0x4 - core index']
  #allocation1 [shape = 'u32[144,128]{1,0:T(1,128)}', space=vmem, size = 0x12000, scoped, tag = 'internal scratch']
  %s0 = inlined_call_operand.vmem [shape: bf16[5,16,128], index: 0, kind: input, shape index: {}, may-alias: {0,7}]
  %s1 = inlined_call_operand.vmem [shape: bf16[16,16], index: 1, kind: input, shape index: {}]
  %s2 = inlined_call_operand.vmem [shape: bf16[16,128], index: 2, kind: input, shape index: {}]
  %s3 = inlined_call_operand.vmem [shape: bf16[128,128], index: 3, kind: input, shape index: {}]
  %s4 = inlined_call_operand.vmem [shape: f32[1,128], index: 4, kind: input, shape index: {}]
  %s5 = inlined_call_operand.hbm [shape: bf16[128,128], index: 5, kind: input, shape index: {}]
  %s6 = inlined_call_operand.vmem [shape: f32[1,128], index: 6, kind: input, shape index: {}]
  %s7 = inlined_call_operand.vmem [shape: bf16[5,16,128], index: 7, kind: output, shape index: {}, may-alias: {0,7}]
  %s8 = scalar_lea.vmem %s7, 32
  %s9 = sld [smem:[#allocation0]]
  $region75: #{graphhop_forward.18} parent=0
    _
  %s11 = ssub.s32 1, %s9
  %s12 = scalar_select 0, %s11, %s9
  $region1: #{graphhop_forward.18} parent=0
    #allocation2 [shape = 'u8[32768]{0}', space=vmem, size = 0x8000, scoped, tag = 'input window, operand 4, single buffered']
    #allocation3 [shape = 's32[1]{0}', space=sflag, size = 0x4, scoped, tag = 'scoped memory for graphhop_forward.18']
    #allocation4 [shape = 'u8[4096]{0}', space=vmem, size = 0x1000, scoped, tag = 'output window, operand 0, single buffered']
    %13 = vsyncpa [#allocation3], 0
    // Predicated region
    $region2: #{graphhop_forward.18} parent=1 // pred_check
      _
    $region3: #{graphhop_forward.18} parent=1 // pred_check_branch
      %15 = sbr.rel (0) target = $region5
    $region4: #{graphhop_forward.18} parent=1 // pred_region
      _
    $region5: #{graphhop_forward.18} parent=1 // pred_fallthru
      _
    // Predicated region
    $region6: #{graphhop_forward.18} parent=1 // pred_check
      _
    $region7: #{graphhop_forward.18} parent=1 // pred_check_branch
      %17 = sbr.rel (0) target = $region9
    $region8: #{graphhop_forward.18} parent=1 // pred_region
      _
    $region9: #{graphhop_forward.18} parent=1 // pred_fallthru
      _
    // Predicated region
    $region10: #{graphhop_forward.18} parent=1 // pred_check
      _
    $region11: #{graphhop_forward.18} parent=1 // pred_check_branch
      %19 = sbr.rel (0) target = $region13
    $region12: #{graphhop_forward.18} parent=1 // pred_region
      _
    $region13: #{graphhop_forward.18} parent=1 // pred_fallthru
      _
    // Predicated region
    $region14: #{graphhop_forward.18} parent=1 // pred_check
      _
    $region15: #{graphhop_forward.18} parent=1 // pred_check_branch
      %21 = sbr.rel (0) target = $region17
    $region16: #{graphhop_forward.18} parent=1 // pred_region
      _
    $region17: #{graphhop_forward.18} parent=1 // pred_fallthru
      _
    // Predicated region
    $region18: #{graphhop_forward.18} parent=1 // pred_check
      _
    $region19: #{graphhop_forward.18} parent=1 // pred_check_branch
      %23 = sbr.rel (0) target = $region21
    $region20: #{graphhop_forward.18} parent=1 // pred_region
      %s25 = ssub.s32 1024, 1024
      %26 = vsyncadd [#allocation3], %s25
      %s27 = sshll.u32 [#allocation2], 4
      %s28 = int_to_ptr.vmem [resolvable:$true] %s27
      %33 = dma.hbm_to_vmem [thread:$0]  %s5, 1024, %s28, [#allocation3], 64, 64, 4
    $region21: #{graphhop_forward.18} parent=1 // pred_fallthru
      _
    // Predicated region
    $region22: #{graphhop_forward.18} parent=1 // pred_check
      _
    $region23: #{graphhop_forward.18} parent=1 // pred_check_branch
      %35 = sbr.rel (0) target = $region25
    $region24: #{graphhop_forward.18} parent=1 // pred_region
      _
    $region25: #{graphhop_forward.18} parent=1 // pred_fallthru
      _
    // Predicated region
    $region26: #{graphhop_forward.18} parent=1 // pred_check
      _
    $region27: #{graphhop_forward.18} parent=1 // pred_check_branch
      %37 = sbr.rel (0) target = $region29
    $region28: #{graphhop_forward.18} parent=1 // pred_region
      %38 = dma.done [#allocation3], 1024
    $region29: #{graphhop_forward.18} parent=1 // pred_fallthru
      _
    %v40 = vld [vmem:[%s1] sm:$0xf]
    %v41 = vld [vmem:[%s1 + $0x4] sm:$0xf]
    %v42 = vld [vmem:[%s2] sm:$0xf]
    %v43 = vld [vmem:[%s2 + $0x4] sm:$0xf]
    %v46 = vunpack.c.l.b16 %v40
    %v47 = vunpack.c.l.b16 %v41
    %v48 = vpack.c.b16 %v47, %v46
    %v51 = vunpack.c.l.b16 %v42
    %v52 = vunpack.c.l.b16 %v43
    %v53 = vpack.c.b16 %v52, %v51
    %vm55 = vcmask 130048
    %v57 = vsel %vm55, %v48, 0
    %59 = vmatprep.subr.bf16.mxu0 0
    %60 = vmatpush1.bf16.msra.mxu0 %v53
    %61 = vmatprep.subr.bf16.mxu0 0
    %62 = vmatpush1.bf16.msra.mxu0 0
    %63 = vmatprep.subr.bf16.mxu0 0
    %64 = vmatpush1.bf16.msra.mxu0 0
    %65 = vmatprep.subr.bf16.mxu0 0
    %66 = vmatpush1.bf16.msra.mxu0 0
    %67 = vmatprep.subr.bf16.mxu0 0
    %68 = vmatpush1.bf16.msra.mxu0 0
    %69 = vmatprep.subr.bf16.mxu0 0
    %70 = vmatpush1.bf16.msra.mxu0 0
    %71 = vmatprep.subr.bf16.mxu0 0
    %72 = vmatpush1.bf16.msra.mxu0 0
    %73 = vmatprep.subr.bf16.mxu0 0
    %74 = vmatpush1.bf16.msra.mxu0 0
    %75 = vmatprep.subr.bf16.mxu0 0
    %76 = vmatpush1.bf16.msra.mxu0 0
    %77 = vmatprep.subr.bf16.mxu0 0
    %78 = vmatpush1.bf16.msra.mxu0 0
    %79 = vmatprep.subr.bf16.mxu0 0
    %80 = vmatpush1.bf16.msra.mxu0 0
    %81 = vmatprep.subr.bf16.mxu0 0
    %82 = vmatpush1.bf16.msra.mxu0 0
    %83 = vmatprep.subr.bf16.mxu0 0
    %84 = vmatpush1.bf16.msra.mxu0 0
    %85 = vmatprep.subr.bf16.mxu0 0
    %86 = vmatpush1.bf16.msra.mxu0 0
    %87 = vmatprep.subr.bf16.mxu0 0
    %88 = vmatpush1.bf16.msra.mxu0 0
    %89 = vmatprep.subr.bf16.mxu0 0
    %90 = vmatpush1.bf16.msra.mxu0 0
    %91 = vmatprep.mubr.bf16.mxu0 0
    %92 = vmatmul.mubr.bf16.gmra.mrb[0].mxu0 %v57
    %v93 = vpop.f32.mrb[0].mxu0
    %v94 = vadd.f32 0.0, %v93
    %v95 = vpop.f32.mrb[0].mxu0
    %v96 = vpop.f32.mrb[0].mxu0
    %v97 = vadd.f32 0.0, %v96
    %v98 = vpop.f32.mrb[0].mxu0
    %99 = vdwg.mxu0
    %v100 = vpack.c.bf16 %v97, %v94
    %v101 = vld [vmem:[%s3] sm:$0xf]
    %v102 = vld [vmem:[%s3 + $0x4] sm:$0xf]
    %v103 = vld [vmem:[%s3 + $0x8] sm:$0xf]
    %v104 = vld [vmem:[%s3 + $0xc] sm:$0xf]
    %v105 = vld [vmem:[%s3 + $0x10] sm:$0xf]
    %v106 = vld [vmem:[%s3 + $0x14] sm:$0xf]
    %v107 = vld [vmem:[%s3 + $0x18] sm:$0xf]
    %v108 = vld [vmem:[%s3 + $0x1c] sm:$0xf]
    %v109 = vld [vmem:[%s3 + $0x20] sm:$0xf]
    %v110 = vld [vmem:[%s3 + $0x24] sm:$0xf]
    %v111 = vld [vmem:[%s3 + $0x28] sm:$0xf]
    %v112 = vld [vmem:[%s3 + $0x2c] sm:$0xf]
    %v113 = vld [vmem:[%s3 + $0x30] sm:$0xf]
    %v114 = vld [vmem:[%s3 + $0x34] sm:$0xf]
    %v115 = vld [vmem:[%s3 + $0x38] sm:$0xf]
    %v116 = vld [vmem:[%s3 + $0x3c] sm:$0xf]
    %v117 = vld [vmem:[%s4] sm:$0x1]
    %v119 = vlaneseq
    %v120 = vshrl.u32 %v119, 7
    %v121 = vsub.s32 0, %v120
    %v122 = vrot.slane %v117, %v121
    %v140 = vunpack.c.l.b16 %v101
    %v141 = vunpack.c.l.b16 %v102
    %v142 = vunpack.c.l.b16 %v103
    %v143 = vunpack.c.l.b16 %v104
    %v144 = vunpack.c.l.b16 %v105
    %v145 = vunpack.c.l.b16 %v106
    %v146 = vunpack.c.l.b16 %v107
    %v147 = vunpack.c.l.b16 %v108
    %v148 = vunpack.c.l.b16 %v109
    %v149 = vunpack.c.l.b16 %v110
    %v150 = vunpack.c.l.b16 %v111
    %v151 = vunpack.c.l.b16 %v112
    %v152 = vunpack.c.l.b16 %v113
    %v153 = vunpack.c.l.b16 %v114
    %v154 = vunpack.c.l.b16 %v115
    %v155 = vunpack.c.l.b16 %v116
    %v156 = vpack.c.b16 %v141, %v140
    %v157 = vpack.c.b16 %v143, %v142
    %v158 = vpack.c.b16 %v145, %v144
    %v159 = vpack.c.b16 %v147, %v146
    %v160 = vpack.c.b16 %v149, %v148
    %v161 = vpack.c.b16 %v151, %v150
    %v162 = vpack.c.b16 %v153, %v152
    %v163 = vpack.c.b16 %v155, %v154
    %172 = vmatprep.subr.bf16.mxu0 0
    %173 = vmatpush1.bf16.msra.mxu0 %v156
    %174 = vmatprep.subr.bf16.mxu0 0
    %175 = vmatpush1.bf16.msra.mxu0 %v157
    %176 = vmatprep.subr.bf16.mxu0 0
    %177 = vmatpush1.bf16.msra.mxu0 %v158
    %178 = vmatprep.subr.bf16.mxu0 0
    %179 = vmatpush1.bf16.msra.mxu0 %v159
    %180 = vmatprep.subr.bf16.mxu0 0
    %181 = vmatpush1.bf16.msra.mxu0 %v160
    %182 = vmatprep.subr.bf16.mxu0 0
    %183 = vmatpush1.bf16.msra.mxu0 %v161
    %184 = vmatprep.subr.bf16.mxu0 0
    %185 = vmatpush1.bf16.msra.mxu0 %v162
    %186 = vmatprep.subr.bf16.mxu0 0
    %187 = vmatpush1.bf16.msra.mxu0 %v163
    %188 = vmatprep.subr.bf16.mxu0 0
    %189 = vmatpush1.bf16.msra.mxu0 0
    %190 = vmatprep.subr.bf16.mxu0 0
    %191 = vmatpush1.bf16.msra.mxu0 0
    %192 = vmatprep.subr.bf16.mxu0 0
    %193 = vmatpush1.bf16.msra.mxu0 0
    %194 = vmatprep.subr.bf16.mxu0 0
    %195 = vmatpush1.bf16.msra.mxu0 0
    %196 = vmatprep.subr.bf16.mxu0 0
    %197 = vmatpush1.bf16.msra.mxu0 0
    %198 = vmatprep.subr.bf16.mxu0 0
    %199 = vmatpush1.bf16.msra.mxu0 0
    %200 = vmatprep.subr.bf16.mxu0 0
    %201 = vmatpush1.bf16.msra.mxu0 0
    %202 = vmatprep.subr.bf16.mxu0 0
    %203 = vmatpush1.bf16.msra.mxu0 0
    %204 = vmatprep.mubr.bf16.mxu0 0
    %205 = vmatmul.mubr.bf16.gmra.mrb[0].mxu0 %v100
    %v206 = vpop.f32.mrb[0].mxu0
    %v207 = vadd.f32 %v122, %v206
    %v208 = vpop.f32.mrb[0].mxu0
    %v209 = vpop.f32.mrb[0].mxu0
    %v210 = vadd.f32 %v122, %v209
    %v211 = vpop.f32.mrb[0].mxu0
    %212 = vdwg.mxu0
    %v213 = vmax.f32 %v207, 0.0
    %v214 = vmax.f32 %v210, 0.0
    %v215 = vpack.c.bf16 %v214, %v213
    %v216 = vld [vmem:[#allocation2] sm:$0xf]
    %v217 = vld [vmem:[#allocation2 + $0x4] sm:$0xf]
    %v218 = vld [vmem:[#allocation2 + $0x8] sm:$0xf]
    %v219 = vld [vmem:[#allocation2 + $0xc] sm:$0xf]
    %v220 = vld [vmem:[#allocation2 + $0x10] sm:$0xf]
    %v221 = vld [vmem:[#allocation2 + $0x14] sm:$0xf]
    %v222 = vld [vmem:[#allocation2 + $0x18] sm:$0xf]
    %v223 = vld [vmem:[#allocation2 + $0x1c] sm:$0xf]
    %v224 = vld [vmem:[#allocation2 + $0x20] sm:$0xf]
    %v225 = vld [vmem:[#allocation2 + $0x24] sm:$0xf]
    %v226 = vld [vmem:[#allocation2 + $0x28] sm:$0xf]
    %v227 = vld [vmem:[#allocation2 + $0x2c] sm:$0xf]
    %v228 = vld [vmem:[#allocation2 + $0x30] sm:$0xf]
    %v229 = vld [vmem:[#allocation2 + $0x34] sm:$0xf]
    %v230 = vld [vmem:[#allocation2 + $0x38] sm:$0xf]
    %v231 = vld [vmem:[#allocation2 + $0x3c] sm:$0xf]
    %v232 = vld [vmem:[%s6] sm:$0x1]
    %v234 = vlaneseq
    %v235 = vshrl.u32 %v234, 7
    %v236 = vsub.s32 0, %v235
    %v237 = vrot.slane %v232, %v236
    %v255 = vunpack.c.l.b16 %v216
    %v256 = vunpack.c.l.b16 %v217
    %v257 = vunpack.c.l.b16 %v218
    %v258 = vunpack.c.l.b16 %v219
    %v259 = vunpack.c.l.b16 %v220
    %v260 = vunpack.c.l.b16 %v221
    %v261 = vunpack.c.l.b16 %v222
    %v262 = vunpack.c.l.b16 %v223
    %v263 = vunpack.c.l.b16 %v224
    %v264 = vunpack.c.l.b16 %v225
    %v265 = vunpack.c.l.b16 %v226
    %v266 = vunpack.c.l.b16 %v227
    %v267 = vunpack.c.l.b16 %v228
    %v268 = vunpack.c.l.b16 %v229
    %v269 = vunpack.c.l.b16 %v230
    %v270 = vunpack.c.l.b16 %v231
    %v271 = vpack.c.b16 %v256, %v255
    %v272 = vpack.c.b16 %v258, %v257
    %v273 = vpack.c.b16 %v260, %v259
    %v274 = vpack.c.b16 %v262, %v261
    %v275 = vpack.c.b16 %v264, %v263
    %v276 = vpack.c.b16 %v266, %v265
    %v277 = vpack.c.b16 %v268, %v267
    %v278 = vpack.c.b16 %v270, %v269
    %287 = vmatprep.subr.bf16.mxu0 0
    %288 = vmatpush1.bf16.msra.mxu0 %v271
    %289 = vmatprep.subr.bf16.mxu0 0
    %290 = vmatpush1.bf16.msra.mxu0 %v272
    %291 = vmatprep.subr.bf16.mxu0 0
    %292 = vmatpush1.bf16.msra.mxu0 %v273
    %293 = vmatprep.subr.bf16.mxu0 0
    %294 = vmatpush1.bf16.msra.mxu0 %v274
    %295 = vmatprep.subr.bf16.mxu0 0
    %296 = vmatpush1.bf16.msra.mxu0 %v275
    %297 = vmatprep.subr.bf16.mxu0 0
    %298 = vmatpush1.bf16.msra.mxu0 %v276
    %299 = vmatprep.subr.bf16.mxu0 0
    %300 = vmatpush1.bf16.msra.mxu0 %v277
    %301 = vmatprep.subr.bf16.mxu0 0
    %302 = vmatpush1.bf16.msra.mxu0 %v278
    %303 = vmatprep.subr.bf16.mxu0 0
    %304 = vmatpush1.bf16.msra.mxu0 0
    %305 = vmatprep.subr.bf16.mxu0 0
    %306 = vmatpush1.bf16.msra.mxu0 0
    %307 = vmatprep.subr.bf16.mxu0 0
    %308 = vmatpush1.bf16.msra.mxu0 0
    %309 = vmatprep.subr.bf16.mxu0 0
    %310 = vmatpush1.bf16.msra.mxu0 0
    %311 = vmatprep.subr.bf16.mxu0 0
    %312 = vmatpush1.bf16.msra.mxu0 0
    %313 = vmatprep.subr.bf16.mxu0 0
    %314 = vmatpush1.bf16.msra.mxu0 0
    %315 = vmatprep.subr.bf16.mxu0 0
    %316 = vmatpush1.bf16.msra.mxu0 0
    %317 = vmatprep.subr.bf16.mxu0 0
    %318 = vmatpush1.bf16.msra.mxu0 0
    %319 = vmatprep.mubr.bf16.mxu0 0
    %320 = vmatmul.mubr.bf16.gmra.mrb[0].mxu0 %v215
    %v321 = vpop.f32.mrb[0].mxu0
    %v322 = vadd.f32 %v237, %v321
    %v323 = vpop.f32.mrb[0].mxu0
    %v324 = vpop.f32.mrb[0].mxu0
    %v325 = vadd.f32 %v237, %v324
    %v326 = vpop.f32.mrb[0].mxu0
    %327 = vdwg.mxu0
    %v328 = vmax.f32 %v322, 0.0
    %v329 = vmax.f32 %v325, 0.0
    %v330 = vpack.c.bf16 %v329, %v328
    %v332 = vunpack.c.l.b16 %v330
    %v333 = vunpack.c.h.b16 %v330
    %v334 = vpack.c.b16 %v332, %v332
    %v335 = vpack.c.b16 %v333, %v333
    %338 = vst [vmem:[#allocation4] sm:$0xf] %v334
    %339 = vst [vmem:[#allocation4 + $0x4] sm:$0xf] %v335
    // Predicated region
    $region30: #{graphhop_forward.18} parent=1 // pred_check
      _
    $region31: #{graphhop_forward.18} parent=1 // pred_check_branch
      %341 = sbr.rel (0) target = $region33
    $region32: #{graphhop_forward.18} parent=1 // pred_region
      // Predicated region
      $region34: #{graphhop_forward.18} parent=32 // pred_check
        _
      $region35: #{graphhop_forward.18} parent=32 // pred_check_branch
        %343 = sbr.rel (0) target = $region37
      $region36: #{graphhop_forward.18} parent=32 // pred_region
        // Predicated region
        $region38: #{graphhop_forward.18} parent=36 // pred_check
          _
        $region39: #{graphhop_forward.18} parent=36 // pred_check_branch
          %345 = sbr.rel target = $region41
        $region40: #{graphhop_forward.18} parent=36 // pred_region
          // Predicated region
          $region53: #{graphhop_forward.18} parent=40 // pred_check
            _
          $region54: #{graphhop_forward.18} parent=40 // pred_check_branch
            %362 = sbr.rel (0) target = $region56
          $region55: #{graphhop_forward.18} parent=40 // pred_region
            loop: start=0, step=1, limit=1
            $region57: #{graphhop_forward.18} parent=55 // loop_pre_header
              _
            $region58: #{graphhop_forward.18} parent=55 // loop_header
              %s364 = sphi 0, %s368
              %p365 = scmp.ge.s32.totalorder %s364, 1
              %s369 = sphi [#allocation4], [#allocation4]
              %s370 = sphi %s8, %s8
            $region59: #{graphhop_forward.18} parent=55 // loop_header_branch
              %367 = sbr.rel (%p365) target = $region63
            $region60: #{graphhop_forward.18} parent=55 // loop_body
              _
            $region61: #{graphhop_forward.18} parent=55 // loop_footer
              %s368 = sadd.s32 1, %s364
            $region62: #{graphhop_forward.18} parent=55 // loop_footer_branch
              %363 = sbr.rel target = $region58
            $region63: #{graphhop_forward.18} parent=55 // loop_exit
              _
            loop: start=0, step=1, limit=1
            $region64: #{graphhop_forward.18} parent=55 // loop_pre_header
              _
            $region65: #{graphhop_forward.18} parent=55 // loop_header
              %s373 = sphi 0, %s377
              %p374 = scmp.ge.s32.totalorder %s373, 1
              %s378 = sphi [#allocation4], [#allocation4]
              %s379 = sphi %s8, %s8
            $region66: #{graphhop_forward.18} parent=55 // loop_header_branch
              %376 = sbr.rel (%p374) target = $region70
            $region67: #{graphhop_forward.18} parent=55 // loop_body
              %v380 = vld [vmem:[%s378] sm:$0xf]
              %381 = vst [vmem:[%s379] sm:$0xf] %v380
              %v382 = vld [vmem:[%s378 + $0x4] sm:$0xf]
              %383 = vst [vmem:[%s379 + $0x4] sm:$0xf] %v382
            $region68: #{graphhop_forward.18} parent=55 // loop_footer
              %s377 = sadd.s32 1, %s373
            $region69: #{graphhop_forward.18} parent=55 // loop_footer_branch
              %372 = sbr.rel target = $region65
            $region70: #{graphhop_forward.18} parent=55 // loop_exit
              _
          $region56: #{graphhop_forward.18} parent=40 // pred_fallthru
            _
        $region41: #{graphhop_forward.18} parent=36 // pred_fallthru
          _
        // Predicated region
        $region42: #{graphhop_forward.18} parent=36 // pred_check
          _
        $region43: #{graphhop_forward.18} parent=36 // pred_check_branch
          %347 = sbr.rel (0) target = $region45
        $region44: #{graphhop_forward.18} parent=36 // pred_region
          loop: start=0, step=1, limit=1
          $region46: #{graphhop_forward.18} parent=44 // loop_pre_header
            _
          $region47: #{graphhop_forward.18} parent=44 // loop_header
            %s350 = sphi 0, %s354
            %p351 = scmp.ge.s32.totalorder %s350, 1
            %s355 = sphi [#allocation4], [#allocation4]
            %s356 = sphi %s8, %s8
          $region48: #{graphhop_forward.18} parent=44 // loop_header_branch
            %353 = sbr.rel (%p351) target = $region52
          $region49: #{graphhop_forward.18} parent=44 // loop_body
            %v357 = vld [vmem:[%s355] sm:$0xf]
            %358 = vst [vmem:[%s356] sm:$0xf] %v357
            %v359 = vld [vmem:[%s355 + $0x4] sm:$0xf]
            %360 = vst [vmem:[%s356 + $0x4] sm:$0xf] %v359
          $region50: #{graphhop_forward.18} parent=44 // loop_footer
            %s354 = sadd.s32 1, %s350
          $region51: #{graphhop_forward.18} parent=44 // loop_footer_branch
            %349 = sbr.rel target = $region47
          $region52: #{graphhop_forward.18} parent=44 // loop_exit
            _
        $region45: #{graphhop_forward.18} parent=36 // pred_fallthru
          _
      $region37: #{graphhop_forward.18} parent=32 // pred_fallthru
        _
      %384 = vnop
    $region33: #{graphhop_forward.18} parent=1 // pred_fallthru
      _
    // Predicated region
    $region71: #{graphhop_forward.18} parent=1 // pred_check
      _
    $region72: #{graphhop_forward.18} parent=1 // pred_check_branch
      %386 = sbr.rel (0) target = $region74
    $region73: #{graphhop_forward.18} parent=1 // pred_region
      _
    $region74: #{graphhop_forward.18} parent=1 // pred_fallthru
      _
    %387 = vsyncpa [#allocation3], 1

// kernel: graphhop_forward.17
$region0: #{graphhop_forward.17}
  #allocation0 [shape = 'u32[]', space=smem, size = 0x4, offset = 0x4, fixed_abs, tag = 'smem constant byte address 0x4 - core index']
  #allocation1 [shape = 'u32[144,128]{1,0:T(1,128)}', space=vmem, size = 0x12000, scoped, tag = 'internal scratch']
  %s0 = inlined_call_operand.vmem [shape: bf16[8,16], index: 0, kind: input, shape index: {}]
  %s1 = inlined_call_operand.vmem [shape: bf16[16,128], index: 1, kind: input, shape index: {}]
  %s2 = inlined_call_operand.vmem [shape: bf16[128,128], index: 2, kind: input, shape index: {}]
  %s3 = inlined_call_operand.vmem [shape: f32[1,128], index: 3, kind: input, shape index: {}]
  %s4 = inlined_call_operand.vmem [shape: f32[8,128], index: 4, kind: output, shape index: {}]
  %s5 = sld [smem:[#allocation0]]
  $region26: #{graphhop_forward.17} parent=0
    _
  %s7 = ssub.s32 1, %s5
  %s8 = scalar_select 0, %s7, %s5
  // Predicated region
  $region2: #{graphhop_forward.17} parent=0 // pred_check
    _
  $region3: #{graphhop_forward.17} parent=0 // pred_check_branch
    %10 = sbr.rel (0) target = $region5
  $region4: #{graphhop_forward.17} parent=0 // pred_region
    _
  $region5: #{graphhop_forward.17} parent=0 // pred_fallthru
    _
  // Predicated region
  $region6: #{graphhop_forward.17} parent=0 // pred_check
    _
  $region7: #{graphhop_forward.17} parent=0 // pred_check_branch
    %12 = sbr.rel (0) target = $region9
  $region8: #{graphhop_forward.17} parent=0 // pred_region
    _
  $region9: #{graphhop_forward.17} parent=0 // pred_fallthru
    _
  // Predicated region
  $region10: #{graphhop_forward.17} parent=0 // pred_check
    _
  $region11: #{graphhop_forward.17} parent=0 // pred_check_branch
    %14 = sbr.rel (0) target = $region13
  $region12: #{graphhop_forward.17} parent=0 // pred_region
    _
  $region13: #{graphhop_forward.17} parent=0 // pred_fallthru
    _
  // Predicated region
  $region14: #{graphhop_forward.17} parent=0 // pred_check
    _
  $region15: #{graphhop_forward.17} parent=0 // pred_check_branch
    %16 = sbr.rel (0) target = $region17
  $region16: #{graphhop_forward.17} parent=0 // pred_region
    _
  $region17: #{graphhop_forward.17} parent=0 // pred_fallthru
    _
  %v18 = vld [vmem:[%s0] sm:$0xf]
  %v19 = vld [vmem:[%s1] sm:$0xf]
  %v20 = vld [vmem:[%s1 + $0x4] sm:$0xf]
  %v23 = vunpack.c.l.b16 %v19
  %v24 = vunpack.c.l.b16 %v20
  %v25 = vpack.c.b16 %v24, %v23
  %vm27 = vcmask 130048
  %v29 = vsel %vm27, %v18, 0
  %31 = vmatprep.subr.bf16.mxu0 0
  %32 = vmatpush1.bf16.msra.mxu0 %v25
  %33 = vmatprep.subr.bf16.mxu0 0
  %34 = vmatpush1.bf16.msra.mxu0 0
  %35 = vmatprep.subr.bf16.mxu0 0
  %36 = vmatpush1.bf16.msra.mxu0 0
  %37 = vmatprep.subr.bf16.mxu0 0
  %38 = vmatpush1.bf16.msra.mxu0 0
  %39 = vmatprep.subr.bf16.mxu0 0
  %40 = vmatpush1.bf16.msra.mxu0 0
  %41 = vmatprep.subr.bf16.mxu0 0
  %42 = vmatpush1.bf16.msra.mxu0 0
  %43 = vmatprep.subr.bf16.mxu0 0
  %44 = vmatpush1.bf16.msra.mxu0 0
  %45 = vmatprep.subr.bf16.mxu0 0
  %46 = vmatpush1.bf16.msra.mxu0 0
  %47 = vmatprep.subr.bf16.mxu0 0
  %48 = vmatpush1.bf16.msra.mxu0 0
  %49 = vmatprep.subr.bf16.mxu0 0
  %50 = vmatpush1.bf16.msra.mxu0 0
  %51 = vmatprep.subr.bf16.mxu0 0
  %52 = vmatpush1.bf16.msra.mxu0 0
  %53 = vmatprep.subr.bf16.mxu0 0
  %54 = vmatpush1.bf16.msra.mxu0 0
  %55 = vmatprep.subr.bf16.mxu0 0
  %56 = vmatpush1.bf16.msra.mxu0 0
  %57 = vmatprep.subr.bf16.mxu0 0
  %58 = vmatpush1.bf16.msra.mxu0 0
  %59 = vmatprep.subr.bf16.mxu0 0
  %60 = vmatpush1.bf16.msra.mxu0 0
  %61 = vmatprep.subr.bf16.mxu0 0
  %62 = vmatpush1.bf16.msra.mxu0 0
  %63 = vmatprep.mubr.bf16.mxu0 0
  %64 = vmatmul.mubr.bf16.gmra.mrb[0].mxu0 %v29
  %v65 = vpop.f32.mrb[0].mxu0
  %v66 = vadd.f32 0.0, %v65
  %v67 = vpop.f32.mrb[0].mxu0
  %v68 = vpop.f32.mrb[0].mxu0
  %v69 = vpop.f32.mrb[0].mxu0
  %70 = vdwg.mxu0
  %v71 = vpack.c.bf16 %v66, %v66
  %v72 = vld [vmem:[%s2] sm:$0xf]
  %v73 = vld [vmem:[%s2 + $0x4] sm:$0xf]
  %v74 = vld [vmem:[%s2 + $0x8] sm:$0xf]
  %v75 = vld [vmem:[%s2 + $0xc] sm:$0xf]
  %v76 = vld [vmem:[%s2 + $0x10] sm:$0xf]
  %v77 = vld [vmem:[%s2 + $0x14] sm:$0xf]
  %v78 = vld [vmem:[%s2 + $0x18] sm:$0xf]
  %v79 = vld [vmem:[%s2 + $0x1c] sm:$0xf]
  %v80 = vld [vmem:[%s2 + $0x20] sm:$0xf]
  %v81 = vld [vmem:[%s2 + $0x24] sm:$0xf]
  %v82 = vld [vmem:[%s2 + $0x28] sm:$0xf]
  %v83 = vld [vmem:[%s2 + $0x2c] sm:$0xf]
  %v84 = vld [vmem:[%s2 + $0x30] sm:$0xf]
  %v85 = vld [vmem:[%s2 + $0x34] sm:$0xf]
  %v86 = vld [vmem:[%s2 + $0x38] sm:$0xf]
  %v87 = vld [vmem:[%s2 + $0x3c] sm:$0xf]
  %v88 = vld [vmem:[%s3] sm:$0x1]
  %v90 = vlaneseq
  %v91 = vshrl.u32 %v90, 7
  %v92 = vsub.s32 0, %v91
  %v93 = vrot.slane %v88, %v92
  %v111 = vunpack.c.l.b16 %v72
  %v112 = vunpack.c.l.b16 %v73
  %v113 = vunpack.c.l.b16 %v74
  %v114 = vunpack.c.l.b16 %v75
  %v115 = vunpack.c.l.b16 %v76
  %v116 = vunpack.c.l.b16 %v77
  %v117 = vunpack.c.l.b16 %v78
  %v118 = vunpack.c.l.b16 %v79
  %v119 = vunpack.c.l.b16 %v80
  %v120 = vunpack.c.l.b16 %v81
  %v121 = vunpack.c.l.b16 %v82
  %v122 = vunpack.c.l.b16 %v83
  %v123 = vunpack.c.l.b16 %v84
  %v124 = vunpack.c.l.b16 %v85
  %v125 = vunpack.c.l.b16 %v86
  %v126 = vunpack.c.l.b16 %v87
  %v127 = vpack.c.b16 %v112, %v111
  %v128 = vpack.c.b16 %v114, %v113
  %v129 = vpack.c.b16 %v116, %v115
  %v130 = vpack.c.b16 %v118, %v117
  %v131 = vpack.c.b16 %v120, %v119
  %v132 = vpack.c.b16 %v122, %v121
  %v133 = vpack.c.b16 %v124, %v123
  %v134 = vpack.c.b16 %v126, %v125
  %143 = vmatprep.subr.bf16.mxu0 0
  %144 = vmatpush1.bf16.msra.mxu0 %v127
  %145 = vmatprep.subr.bf16.mxu0 0
  %146 = vmatpush1.bf16.msra.mxu0 %v128
  %147 = vmatprep.subr.bf16.mxu0 0
  %148 = vmatpush1.bf16.msra.mxu0 %v129
  %149 = vmatprep.subr.bf16.mxu0 0
  %150 = vmatpush1.bf16.msra.mxu0 %v130
  %151 = vmatprep.subr.bf16.mxu0 0
  %152 = vmatpush1.bf16.msra.mxu0 %v131
  %153 = vmatprep.subr.bf16.mxu0 0
  %154 = vmatpush1.bf16.msra.mxu0 %v132
  %155 = vmatprep.subr.bf16.mxu0 0
  %156 = vmatpush1.bf16.msra.mxu0 %v133
  %157 = vmatprep.subr.bf16.mxu0 0
  %158 = vmatpush1.bf16.msra.mxu0 %v134
  %159 = vmatprep.subr.bf16.mxu0 0
  %160 = vmatpush1.bf16.msra.mxu0 0
  %161 = vmatprep.subr.bf16.mxu0 0
  %162 = vmatpush1.bf16.msra.mxu0 0
  %163 = vmatprep.subr.bf16.mxu0 0
  %164 = vmatpush1.bf16.msra.mxu0 0
  %165 = vmatprep.subr.bf16.mxu0 0
  %166 = vmatpush1.bf16.msra.mxu0 0
  %167 = vmatprep.subr.bf16.mxu0 0
  %168 = vmatpush1.bf16.msra.mxu0 0
  %169 = vmatprep.subr.bf16.mxu0 0
  %170 = vmatpush1.bf16.msra.mxu0 0
  %171 = vmatprep.subr.bf16.mxu0 0
  %172 = vmatpush1.bf16.msra.mxu0 0
  %173 = vmatprep.subr.bf16.mxu0 0
  %174 = vmatpush1.bf16.msra.mxu0 0
  %175 = vmatprep.mubr.bf16.mxu0 0
  %176 = vmatmul.mubr.bf16.gmra.mrb[0].mxu0 %v71
  %v177 = vpop.f32.mrb[0].mxu0
  %v178 = vadd.f32 %v93, %v177
  %v179 = vpop.f32.mrb[0].mxu0
  %v180 = vpop.f32.mrb[0].mxu0
  %v181 = vpop.f32.mrb[0].mxu0
  %182 = vdwg.mxu0
  %183 = vst [vmem:[%s4] sm:$0xff] %v178
  // Predicated region
  $region18: #{graphhop_forward.17} parent=0 // pred_check
    _
  $region19: #{graphhop_forward.17} parent=0 // pred_check_branch
    %185 = sbr.rel (0) target = $region21
  $region20: #{graphhop_forward.17} parent=0 // pred_region
    _
  $region21: #{graphhop_forward.17} parent=0 // pred_fallthru
    _
  // Predicated region
  $region22: #{graphhop_forward.17} parent=0 // pred_check
    _
  $region23: #{graphhop_forward.17} parent=0 // pred_check_branch
    %187 = sbr.rel (0) target = $region25
  $region24: #{graphhop_forward.17} parent=0 // pred_region
    _
  $region25: #{graphhop_forward.17} parent=0 // pred_fallthru
    _

// kernel: graphhop_forward.15
$region0: #{graphhop_forward.15}
  #allocation0 [shape = 'u32[]', space=smem, size = 0x4, offset = 0x4, fixed_abs, tag = 'smem constant byte address 0x4 - core index']
  #allocation1 [shape = 'u32[144,128]{1,0:T(1,128)}', space=vmem, size = 0x12000, scoped, tag = 'internal scratch']
  %s0 = inlined_call_operand.vmem [shape: f32[16,4], index: 0, kind: input, shape index: {}]
  %s1 = inlined_call_operand.vmem [shape: f32[4,16], index: 1, kind: input, shape index: {}]
  %s2 = inlined_call_operand.vmem [shape: bf16[16,128], index: 2, kind: input, shape index: {}]
  %s3 = inlined_call_operand.vmem [shape: bf16[16,16], index: 3, kind: input, shape index: {}]
  %s4 = inlined_call_operand.vmem [shape: f32[4,128], index: 4, kind: input, shape index: {}]
  %s5 = inlined_call_operand.vmem [shape: f32[1,128], index: 5, kind: input, shape index: {}]
  %s6 = inlined_call_operand.vmem [shape: bf16[16,128], index: 6, kind: output, shape index: {}]
  %s7 = sld [smem:[#allocation0]]
  $region34: #{graphhop_forward.15} parent=0
    _
  %s9 = ssub.s32 1, %s7
  %s10 = scalar_select 0, %s9, %s7
  // Predicated region
  $region2: #{graphhop_forward.15} parent=0 // pred_check
    _
  $region3: #{graphhop_forward.15} parent=0 // pred_check_branch
    %12 = sbr.rel (0) target = $region5
  $region4: #{graphhop_forward.15} parent=0 // pred_region
    _
  $region5: #{graphhop_forward.15} parent=0 // pred_fallthru
    _
  // Predicated region
  $region6: #{graphhop_forward.15} parent=0 // pred_check
    _
  $region7: #{graphhop_forward.15} parent=0 // pred_check_branch
    %14 = sbr.rel (0) target = $region9
  $region8: #{graphhop_forward.15} parent=0 // pred_region
    _
  $region9: #{graphhop_forward.15} parent=0 // pred_fallthru
    _
  // Predicated region
  $region10: #{graphhop_forward.15} parent=0 // pred_check
    _
  $region11: #{graphhop_forward.15} parent=0 // pred_check_branch
    %16 = sbr.rel (0) target = $region13
  $region12: #{graphhop_forward.15} parent=0 // pred_region
    _
  $region13: #{graphhop_forward.15} parent=0 // pred_fallthru
    _
  // Predicated region
  $region14: #{graphhop_forward.15} parent=0 // pred_check
    _
  $region15: #{graphhop_forward.15} parent=0 // pred_check_branch
    %18 = sbr.rel (0) target = $region17
  $region16: #{graphhop_forward.15} parent=0 // pred_region
    _
  $region17: #{graphhop_forward.15} parent=0 // pred_fallthru
    _
  // Predicated region
  $region18: #{graphhop_forward.15} parent=0 // pred_check
    _
  $region19: #{graphhop_forward.15} parent=0 // pred_check_branch
    %20 = sbr.rel (0) target = $region21
  $region20: #{graphhop_forward.15} parent=0 // pred_region
    _
  $region21: #{graphhop_forward.15} parent=0 // pred_fallthru
    _
  // Predicated region
  $region22: #{graphhop_forward.15} parent=0 // pred_check
    _
  $region23: #{graphhop_forward.15} parent=0 // pred_check_branch
    %22 = sbr.rel (0) target = $region25
  $region24: #{graphhop_forward.15} parent=0 // pred_region
    _
  $region25: #{graphhop_forward.15} parent=0 // pred_fallthru
    _
  %v23 = vld [vmem:[%s3] sm:$0xf]
  %v24 = vld [vmem:[%s3 + $0x4] sm:$0xf]
  %v25 = vunpack.c.l.bf16 %v23
  %v26 = vunpack.c.l.bf16 %v24
  %v27 = vsub.f32 1.0, %v25
  %v28 = vsub.f32 1.0, %v26
  %v29 = vmul.f32 %v27, -1e+09
  %v30 = vmul.f32 %v28, -1e+09
  %v31 = vld [vmem:[%s2] sm:$0xf]
  %v32 = vld [vmem:[%s2 + $0x4] sm:$0xf]
  %v33 = vunpack.c.l.bf16 %v31
  %v34 = vunpack.c.l.bf16 %v32
  %v35 = vld [vmem:[%s0] sm:$0xff]
  %v36 = vld [vmem:[%s0 + $0x8] sm:$0xff]
  %v37 = vld [vmem:[%s1] sm:$0x1]
  %39 = vset.pattern.permute.xlu0 0
  %40 = vperm.xlu0 %39, %v35
  %v41 = vpop.permute.xlu0 %40
  %44 = vset.pattern.permute.xlu0 0
  %45 = vperm.xlu0 %44, %v36
  %v46 = vpop.permute.xlu0 %45
  %v48 = vlaneseq
  %v49 = vshrl.u32 %v48, 7
  %v50 = vsub.s32 0, %v49
  %v51 = vrot.slane %v37, %v50
  %v52 = vadd.f32 %v41, %v51
  %v53 = vadd.f32 %v46, %v51
  %vm54 = vcmp.gt.f32.partialorder %v52, 0.0
  %vm55 = vcmp.gt.f32.partialorder %v53, 0.0
  %v56 = vmul.f32 %v52, 0.2
  %v57 = vmul.f32 %v53, 0.2
  %v58 = vsel %vm54, %v52, %v56
  %v59 = vsel %vm55, %v53, %v57
  %v60 = vadd.f32 %v58, %v29
  %v61 = vadd.f32 %v59, %v30
  %vm62 = vcmask 130048
  %v63 = vsel %vm62, %v60, -inf
  %64 = vmax.xlane.f32.xlu0 %v63
  %v65 = vpop.xlane.xlu0 %64
  %v66 = vsel %vm62, %v61, -inf
  %67 = vmax.xlane.f32.xlu0 %v66
  %v68 = vpop.xlane.xlu0 %67
  %v69 = vsub.f32 %v60, %v65
  %v70 = vsub.f32 %v61, %v68
  %v71 = vmul.f32 %v69, 1.442695
  %v72 = vpow.pop %v71
  %v73 = vmul.f32 %v70, 1.442695
  %v74 = vpow.pop %v73
  %v75 = vmul.f32 %v72, %v25
  %v76 = vmul.f32 %v74, %v26
  %v77 = vsel %vm62, %v75, 0.0
  %78 = vadd.xlane.f32.xlu0 %v77
  %v79 = vpop.xlane.xlu0 %78
  %v80 = vsel %vm62, %v76, 0.0
  %81 = vadd.xlane.f32.xlu0 %v80
  %v82 = vpop.xlane.xlu0 %81
  %v83 = vrcp.pop %v79
  %v84 = vrcp.pop %v82
  %v85 = vmul.f32 %v75, %v83
  %v86 = vmul.f32 %v76, %v84
  %v87 = vld [vmem:[%s4] sm:$0x1]
  %v88 = vlaneseq
  %v89 = vshrl.u32 %v88, 7
  %v90 = vsub.s32 0, %v89
  %v91 = vrot.slane %v87, %v90
  %v92 = vmul.f32 %v33, %v91
  %v93 = vmul.f32 %v34, %v91
  %v94 = vld [vmem:[%s1 + $0x1] sm:$0x1]
  %95 = vset.pattern.permute.xlu0 1
  %96 = vperm.xlu0 %95, %v35
  %v97 = vpop.permute.xlu0 %96
  %99 = vset.pattern.permute.xlu0 1
  %100 = vperm.xlu0 %99, %v36
  %v101 = vpop.permute.xlu0 %100
  %v103 = vlaneseq
  %v104 = vshrl.u32 %v103, 7
  %v105 = vsub.s32 0, %v104
  %v106 = vrot.slane %v94, %v105
  %v107 = vadd.f32 %v97, %v106
  %v108 = vadd.f32 %v101, %v106
  %vm109 = vcmp.gt.f32.partialorder %v107, 0.0
  %vm110 = vcmp.gt.f32.partialorder %v108, 0.0
  %v111 = vmul.f32 %v107, 0.2
  %v112 = vmul.f32 %v108, 0.2
  %v113 = vsel %vm109, %v107, %v111
  %v114 = vsel %vm110, %v108, %v112
  %v115 = vadd.f32 %v113, %v29
  %v116 = vadd.f32 %v114, %v30
  %v117 = vsel %vm62, %v115, -inf
  %118 = vmax.xlane.f32.xlu0 %v117
  %v119 = vpop.xlane.xlu0 %118
  %v120 = vsel %vm62, %v116, -inf
  %121 = vmax.xlane.f32.xlu0 %v120
  %v122 = vpop.xlane.xlu0 %121
  %v123 = vsub.f32 %v115, %v119
  %v124 = vsub.f32 %v116, %v122
  %v125 = vmul.f32 %v123, 1.442695
  %v126 = vpow.pop %v125
  %v127 = vmul.f32 %v124, 1.442695
  %v128 = vpow.pop %v127
  %v129 = vmul.f32 %v126, %v25
  %v130 = vmul.f32 %v128, %v26
  %v131 = vsel %vm62, %v129, 0.0
  %132 = vadd.xlane.f32.xlu0 %v131
  %v133 = vpop.xlane.xlu0 %132
  %v134 = vsel %vm62, %v130, 0.0
  %135 = vadd.xlane.f32.xlu0 %v134
  %v136 = vpop.xlane.xlu0 %135
  %v137 = vrcp.pop %v133
  %v138 = vrcp.pop %v136
  %v139 = vmul.f32 %v129, %v137
  %v140 = vmul.f32 %v130, %v138
  %v141 = vld [vmem:[%s4 + $0x1] sm:$0x1]
  %v142 = vlaneseq
  %v143 = vshrl.u32 %v142, 7
  %v144 = vsub.s32 0, %v143
  %v145 = vrot.slane %v141, %v144
  %v146 = vmul.f32 %v33, %v145
  %v147 = vmul.f32 %v34, %v145
  %v149 = vsel %vm62, %v139, 0
  %v152 = vsel %vm62, %v140, 0
  %154 = vmatprep.subr.mxu0 0.0
  %155 = vmatpush1.msra.mxu0 %v146
  %156 = vmatprep.subr.mxu0 0.0
  %157 = vmatpush1.msra.mxu0 %v147
  %158 = vmatprep.subr.mxu0 0.0
  %159 = vmatpush1.msra.mxu0 0.0
  %160 = vmatprep.subr.mxu0 0.0
  %161 = vmatpush1.msra.mxu0 0.0
  %162 = vmatprep.subr.mxu0 0.0
  %163 = vmatpush1.msra.mxu0 0.0
  %164 = vmatprep.subr.mxu0 0.0
  %165 = vmatpush1.msra.mxu0 0.0
  %166 = vmatprep.subr.mxu0 0.0
  %167 = vmatpush1.msra.mxu0 0.0
  %168 = vmatprep.subr.mxu0 0.0
  %169 = vmatpush1.msra.mxu0 0.0
  %170 = vmatprep.subr.mxu0 0.0
  %171 = vmatpush1.msra.mxu0 0.0
  %172 = vmatprep.subr.mxu0 0.0
  %173 = vmatpush1.msra.mxu0 0.0
  %174 = vmatprep.subr.mxu0 0.0
  %175 = vmatpush1.msra.mxu0 0.0
  %176 = vmatprep.subr.mxu0 0.0
  %177 = vmatpush1.msra.mxu0 0.0
  %178 = vmatprep.subr.mxu0 0.0
  %179 = vmatpush1.msra.mxu0 0.0
  %180 = vmatprep.subr.mxu0 0.0
  %181 = vmatpush1.msra.mxu0 0.0
  %182 = vmatprep.subr.mxu0 0.0
  %183 = vmatpush1.msra.mxu0 0.0
  %184 = vmatprep.subr.mxu0 0.0
  %185 = vmatpush1.msra.mxu0 0.0
  %186 = vmatprep.subr.mxu0 0.0
  %187 = vmatpush1.msra.mxu0 0.0
  %188 = vmatprep.subr.mxu0 0.0
  %189 = vmatpush1.msra.mxu0 0.0
  %190 = vmatprep.subr.mxu0 0.0
  %191 = vmatpush1.msra.mxu0 0.0
  %192 = vmatprep.subr.mxu0 0.0
  %193 = vmatpush1.msra.mxu0 0.0
  %194 = vmatprep.subr.mxu0 0.0
  %195 = vmatpush1.msra.mxu0 0.0
  %196 = vmatprep.subr.mxu0 0.0
  %197 = vmatpush1.msra.mxu0 0.0
  %198 = vmatprep.subr.mxu0 0.0
  %199 = vmatpush1.msra.mxu0 0.0
  %200 = vmatprep.subr.mxu0 0.0
  %201 = vmatpush1.msra.mxu0 0.0
  %202 = vmatprep.subr.mxu0 0.0
  %203 = vmatpush1.msra.mxu0 0.0
  %204 = vmatprep.subr.mxu0 0.0
  %205 = vmatpush1.msra.mxu0 0.0
  %206 = vmatprep.subr.mxu0 0.0
  %207 = vmatpush1.msra.mxu0 0.0
  %208 = vmatprep.subr.mxu0 0.0
  %209 = vmatpush1.msra.mxu0 0.0
  %210 = vmatprep.subr.mxu0 0.0
  %211 = vmatpush1.msra.mxu0 0.0
  %212 = vmatprep.subr.mxu0 0.0
  %213 = vmatpush1.msra.mxu0 0.0
  %214 = vmatprep.subr.mxu0 0.0
  %215 = vmatpush1.msra.mxu0 0.0
  %216 = vmatprep.subr.mxu0 0.0
  %217 = vmatpush1.msra.mxu0 0.0
  %218 = vmatprep.mubr.f32.mxu0 0.0
  %219 = vmatmul.mubr.f32.gmra.mrb[0].mxu0 %v149
  %v220 = vpop.f32.mrb[0].mxu0
  %v221 = vadd.f32 0.0, %v220
  %v222 = vpop.f32.mrb[0].mxu0
  %223 = vmatprep.mubr.f32.mxu0 0.0
  %224 = vmatmul.mubr.f32.gmra.mrb[0].mxu0 %v152
  %v225 = vpop.f32.mrb[0].mxu0
  %v226 = vadd.f32 0.0, %v225
  %v227 = vpop.f32.mrb[0].mxu0
  %228 = vdwg.mxu0
  %v230 = vsel %vm62, %v85, 0
  %v233 = vsel %vm62, %v86, 0
  %235 = vmatprep.subr.mxu0 0.0
  %236 = vmatpush1.msra.mxu0 %v92
  %237 = vmatprep.subr.mxu0 0.0
  %238 = vmatpush1.msra.mxu0 %v93
  %239 = vmatprep.subr.mxu0 0.0
  %240 = vmatpush1.msra.mxu0 0.0
  %241 = vmatprep.subr.mxu0 0.0
  %242 = vmatpush1.msra.mxu0 0.0
  %243 = vmatprep.subr.mxu0 0.0
  %244 = vmatpush1.msra.mxu0 0.0
  %245 = vmatprep.subr.mxu0 0.0
  %246 = vmatpush1.msra.mxu0 0.0
  %247 = vmatprep.subr.mxu0 0.0
  %248 = vmatpush1.msra.mxu0 0.0
  %249 = vmatprep.subr.mxu0 0.0
  %250 = vmatpush1.msra.mxu0 0.0
  %251 = vmatprep.subr.mxu0 0.0
  %252 = vmatpush1.msra.mxu0 0.0
  %253 = vmatprep.subr.mxu0 0.0
  %254 = vmatpush1.msra.mxu0 0.0
  %255 = vmatprep.subr.mxu0 0.0
  %256 = vmatpush1.msra.mxu0 0.0
  %257 = vmatprep.subr.mxu0 0.0
  %258 = vmatpush1.msra.mxu0 0.0
  %259 = vmatprep.subr.mxu0 0.0
  %260 = vmatpush1.msra.mxu0 0.0
  %261 = vmatprep.subr.mxu0 0.0
  %262 = vmatpush1.msra.mxu0 0.0
  %263 = vmatprep.subr.mxu0 0.0
  %264 = vmatpush1.msra.mxu0 0.0
  %265 = vmatprep.subr.mxu0 0.0
  %266 = vmatpush1.msra.mxu0 0.0
  %267 = vmatprep.subr.mxu0 0.0
  %268 = vmatpush1.msra.mxu0 0.0
  %269 = vmatprep.subr.mxu0 0.0
  %270 = vmatpush1.msra.mxu0 0.0
  %271 = vmatprep.subr.mxu0 0.0
  %272 = vmatpush1.msra.mxu0 0.0
  %273 = vmatprep.subr.mxu0 0.0
  %274 = vmatpush1.msra.mxu0 0.0
  %275 = vmatprep.subr.mxu0 0.0
  %276 = vmatpush1.msra.mxu0 0.0
  %277 = vmatprep.subr.mxu0 0.0
  %278 = vmatpush1.msra.mxu0 0.0
  %279 = vmatprep.subr.mxu0 0.0
  %280 = vmatpush1.msra.mxu0 0.0
  %281 = vmatprep.subr.mxu0 0.0
  %282 = vmatpush1.msra.mxu0 0.0
  %283 = vmatprep.subr.mxu0 0.0
  %284 = vmatpush1.msra.mxu0 0.0
  %285 = vmatprep.subr.mxu0 0.0
  %286 = vmatpush1.msra.mxu0 0.0
  %287 = vmatprep.subr.mxu0 0.0
  %288 = vmatpush1.msra.mxu0 0.0
  %289 = vmatprep.subr.mxu0 0.0
  %290 = vmatpush1.msra.mxu0 0.0
  %291 = vmatprep.subr.mxu0 0.0
  %292 = vmatpush1.msra.mxu0 0.0
  %293 = vmatprep.subr.mxu0 0.0
  %294 = vmatpush1.msra.mxu0 0.0
  %295 = vmatprep.subr.mxu0 0.0
  %296 = vmatpush1.msra.mxu0 0.0
  %297 = vmatprep.subr.mxu0 0.0
  %298 = vmatpush1.msra.mxu0 0.0
  %299 = vmatprep.mubr.f32.mxu0 0.0
  %300 = vmatmul.mubr.f32.gmra.mrb[0].mxu0 %v230
  %v301 = vpop.f32.mrb[0].mxu0
  %v302 = vadd.f32 %v221, %v301
  %v303 = vpop.f32.mrb[0].mxu0
  %304 = vmatprep.mubr.f32.mxu0 0.0
  %305 = vmatmul.mubr.f32.gmra.mrb[0].mxu0 %v233
  %v306 = vpop.f32.mrb[0].mxu0
  %v307 = vadd.f32 %v226, %v306
  %v308 = vpop.f32.mrb[0].mxu0
  %309 = vdwg.mxu0
  %v310 = vld [vmem:[%s1 + $0x2] sm:$0x1]
  %311 = vset.pattern.permute.xlu0 2
  %312 = vperm.xlu0 %311, %v35
  %v313 = vpop.permute.xlu0 %312
  %315 = vset.pattern.permute.xlu0 2
  %316 = vperm.xlu0 %315, %v36
  %v317 = vpop.permute.xlu0 %316
  %v319 = vlaneseq
  %v320 = vshrl.u32 %v319, 7
  %v321 = vsub.s32 0, %v320
  %v322 = vrot.slane %v310, %v321
  %v323 = vadd.f32 %v313, %v322
  %v324 = vadd.f32 %v317, %v322
  %vm325 = vcmp.gt.f32.partialorder %v323, 0.0
  %vm326 = vcmp.gt.f32.partialorder %v324, 0.0
  %v327 = vmul.f32 %v323, 0.2
  %v328 = vmul.f32 %v324, 0.2
  %v329 = vsel %vm325, %v323, %v327
  %v330 = vsel %vm326, %v324, %v328
  %v331 = vadd.f32 %v329, %v29
  %v332 = vadd.f32 %v330, %v30
  %v333 = vsel %vm62, %v331, -inf
  %334 = vmax.xlane.f32.xlu0 %v333
  %v335 = vpop.xlane.xlu0 %334
  %v336 = vsel %vm62, %v332, -inf
  %337 = vmax.xlane.f32.xlu0 %v336
  %v338 = vpop.xlane.xlu0 %337
  %v339 = vsub.f32 %v331, %v335
  %v340 = vsub.f32 %v332, %v338
  %v341 = vmul.f32 %v339, 1.442695
  %v342 = vpow.pop %v341
  %v343 = vmul.f32 %v340, 1.442695
  %v344 = vpow.pop %v343
  %v345 = vmul.f32 %v342, %v25
  %v346 = vmul.f32 %v344, %v26
  %v347 = vsel %vm62, %v345, 0.0
  %348 = vadd.xlane.f32.xlu0 %v347
  %v349 = vpop.xlane.xlu0 %348
  %v350 = vsel %vm62, %v346, 0.0
  %351 = vadd.xlane.f32.xlu0 %v350
  %v352 = vpop.xlane.xlu0 %351
  %v353 = vrcp.pop %v349
  %v354 = vrcp.pop %v352
  %v355 = vmul.f32 %v345, %v353
  %v356 = vmul.f32 %v346, %v354
  %v357 = vld [vmem:[%s4 + $0x2] sm:$0x1]
  %v358 = vlaneseq
  %v359 = vshrl.u32 %v358, 7
  %v360 = vsub.s32 0, %v359
  %v361 = vrot.slane %v357, %v360
  %v362 = vmul.f32 %v33, %v361
  %v363 = vmul.f32 %v34, %v361
  %v365 = vsel %vm62, %v355, 0
  %v368 = vsel %vm62, %v356, 0
  %370 = vmatprep.subr.mxu0 0.0
  %371 = vmatpush1.msra.mxu0 %v362
  %372 = vmatprep.subr.mxu0 0.0
  %373 = vmatpush1.msra.mxu0 %v363
  %374 = vmatprep.subr.mxu0 0.0
  %375 = vmatpush1.msra.mxu0 0.0
  %376 = vmatprep.subr.mxu0 0.0
  %377 = vmatpush1.msra.mxu0 0.0
  %378 = vmatprep.subr.mxu0 0.0
  %379 = vmatpush1.msra.mxu0 0.0
  %380 = vmatprep.subr.mxu0 0.0
  %381 = vmatpush1.msra.mxu0 0.0
  %382 = vmatprep.subr.mxu0 0.0
  %383 = vmatpush1.msra.mxu0 0.0
  %384 = vmatprep.subr.mxu0 0.0
  %385 = vmatpush1.msra.mxu0 0.0
  %386 = vmatprep.subr.mxu0 0.0
  %387 = vmatpush1.msra.mxu0 0.0
  %388 = vmatprep.subr.mxu0 0.0
  %389 = vmatpush1.msra.mxu0 0.0
  %390 = vmatprep.subr.mxu0 0.0
  %391 = vmatpush1.msra.mxu0 0.0
  %392 = vmatprep.subr.mxu0 0.0
  %393 = vmatpush1.msra.mxu0 0.0
  %394 = vmatprep.subr.mxu0 0.0
  %395 = vmatpush1.msra.mxu0 0.0
  %396 = vmatprep.subr.mxu0 0.0
  %397 = vmatpush1.msra.mxu0 0.0
  %398 = vmatprep.subr.mxu0 0.0
  %399 = vmatpush1.msra.mxu0 0.0
  %400 = vmatprep.subr.mxu0 0.0
  %401 = vmatpush1.msra.mxu0 0.0
  %402 = vmatprep.subr.mxu0 0.0
  %403 = vmatpush1.msra.mxu0 0.0
  %404 = vmatprep.subr.mxu0 0.0
  %405 = vmatpush1.msra.mxu0 0.0
  %406 = vmatprep.subr.mxu0 0.0
  %407 = vmatpush1.msra.mxu0 0.0
  %408 = vmatprep.subr.mxu0 0.0
  %409 = vmatpush1.msra.mxu0 0.0
  %410 = vmatprep.subr.mxu0 0.0
  %411 = vmatpush1.msra.mxu0 0.0
  %412 = vmatprep.subr.mxu0 0.0
  %413 = vmatpush1.msra.mxu0 0.0
  %414 = vmatprep.subr.mxu0 0.0
  %415 = vmatpush1.msra.mxu0 0.0
  %416 = vmatprep.subr.mxu0 0.0
  %417 = vmatpush1.msra.mxu0 0.0
  %418 = vmatprep.subr.mxu0 0.0
  %419 = vmatpush1.msra.mxu0 0.0
  %420 = vmatprep.subr.mxu0 0.0
  %421 = vmatpush1.msra.mxu0 0.0
  %422 = vmatprep.subr.mxu0 0.0
  %423 = vmatpush1.msra.mxu0 0.0
  %424 = vmatprep.subr.mxu0 0.0
  %425 = vmatpush1.msra.mxu0 0.0
  %426 = vmatprep.subr.mxu0 0.0
  %427 = vmatpush1.msra.mxu0 0.0
  %428 = vmatprep.subr.mxu0 0.0
  %429 = vmatpush1.msra.mxu0 0.0
  %430 = vmatprep.subr.mxu0 0.0
  %431 = vmatpush1.msra.mxu0 0.0
  %432 = vmatprep.subr.mxu0 0.0
  %433 = vmatpush1.msra.mxu0 0.0
  %434 = vmatprep.mubr.f32.mxu0 0.0
  %435 = vmatmul.mubr.f32.gmra.mrb[0].mxu0 %v365
  %v436 = vpop.f32.mrb[0].mxu0
  %v437 = vadd.f32 0.0, %v436
  %v438 = vpop.f32.mrb[0].mxu0
  %439 = vmatprep.mubr.f32.mxu0 0.0
  %440 = vmatmul.mubr.f32.gmra.mrb[0].mxu0 %v368
  %v441 = vpop.f32.mrb[0].mxu0
  %v442 = vadd.f32 0.0, %v441
  %v443 = vpop.f32.mrb[0].mxu0
  %444 = vdwg.mxu0
  %v445 = vadd.f32 %v302, %v437
  %v446 = vadd.f32 %v307, %v442
  %v447 = vld [vmem:[%s1 + $0x3] sm:$0x1]
  %448 = vset.pattern.permute.xlu0 3
  %449 = vperm.xlu0 %448, %v35
  %v450 = vpop.permute.xlu0 %449
  %452 = vset.pattern.permute.xlu0 3
  %453 = vperm.xlu0 %452, %v36
  %v454 = vpop.permute.xlu0 %453
  %v456 = vlaneseq
  %v457 = vshrl.u32 %v456, 7
  %v458 = vsub.s32 0, %v457
  %v459 = vrot.slane %v447, %v458
  %v460 = vadd.f32 %v450, %v459
  %v461 = vadd.f32 %v454, %v459
  %vm462 = vcmp.gt.f32.partialorder %v460, 0.0
  %vm463 = vcmp.gt.f32.partialorder %v461, 0.0
  %v464 = vmul.f32 %v460, 0.2
  %v465 = vmul.f32 %v461, 0.2
  %v466 = vsel %vm462, %v460, %v464
  %v467 = vsel %vm463, %v461, %v465
  %v468 = vadd.f32 %v466, %v29
  %v469 = vadd.f32 %v467, %v30
  %v470 = vsel %vm62, %v468, -inf
  %471 = vmax.xlane.f32.xlu0 %v470
  %v472 = vpop.xlane.xlu0 %471
  %v473 = vsel %vm62, %v469, -inf
  %474 = vmax.xlane.f32.xlu0 %v473
  %v475 = vpop.xlane.xlu0 %474
  %v476 = vsub.f32 %v468, %v472
  %v477 = vsub.f32 %v469, %v475
  %v478 = vmul.f32 %v476, 1.442695
  %v479 = vpow.pop %v478
  %v480 = vmul.f32 %v477, 1.442695
  %v481 = vpow.pop %v480
  %v482 = vmul.f32 %v479, %v25
  %v483 = vmul.f32 %v481, %v26
  %v484 = vsel %vm62, %v482, 0.0
  %485 = vadd.xlane.f32.xlu0 %v484
  %v486 = vpop.xlane.xlu0 %485
  %v487 = vsel %vm62, %v483, 0.0
  %488 = vadd.xlane.f32.xlu0 %v487
  %v489 = vpop.xlane.xlu0 %488
  %v490 = vrcp.pop %v486
  %v491 = vrcp.pop %v489
  %v492 = vmul.f32 %v482, %v490
  %v493 = vmul.f32 %v483, %v491
  %v494 = vld [vmem:[%s4 + $0x3] sm:$0x1]
  %v495 = vlaneseq
  %v496 = vshrl.u32 %v495, 7
  %v497 = vsub.s32 0, %v496
  %v498 = vrot.slane %v494, %v497
  %v499 = vmul.f32 %v33, %v498
  %v500 = vmul.f32 %v34, %v498
  %v502 = vsel %vm62, %v492, 0
  %v505 = vsel %vm62, %v493, 0
  %507 = vmatprep.subr.mxu0 0.0
  %508 = vmatpush1.msra.mxu0 %v499
  %509 = vmatprep.subr.mxu0 0.0
  %510 = vmatpush1.msra.mxu0 %v500
  %511 = vmatprep.subr.mxu0 0.0
  %512 = vmatpush1.msra.mxu0 0.0
  %513 = vmatprep.subr.mxu0 0.0
  %514 = vmatpush1.msra.mxu0 0.0
  %515 = vmatprep.subr.mxu0 0.0
  %516 = vmatpush1.msra.mxu0 0.0
  %517 = vmatprep.subr.mxu0 0.0
  %518 = vmatpush1.msra.mxu0 0.0
  %519 = vmatprep.subr.mxu0 0.0
  %520 = vmatpush1.msra.mxu0 0.0
  %521 = vmatprep.subr.mxu0 0.0
  %522 = vmatpush1.msra.mxu0 0.0
  %523 = vmatprep.subr.mxu0 0.0
  %524 = vmatpush1.msra.mxu0 0.0
  %525 = vmatprep.subr.mxu0 0.0
  %526 = vmatpush1.msra.mxu0 0.0
  %527 = vmatprep.subr.mxu0 0.0
  %528 = vmatpush1.msra.mxu0 0.0
  %529 = vmatprep.subr.mxu0 0.0
  %530 = vmatpush1.msra.mxu0 0.0
  %531 = vmatprep.subr.mxu0 0.0
  %532 = vmatpush1.msra.mxu0 0.0
  %533 = vmatprep.subr.mxu0 0.0
  %534 = vmatpush1.msra.mxu0 0.0
  %535 = vmatprep.subr.mxu0 0.0
  %536 = vmatpush1.msra.mxu0 0.0
  %537 = vmatprep.subr.mxu0 0.0
  %538 = vmatpush1.msra.mxu0 0.0
  %539 = vmatprep.subr.mxu0 0.0
  %540 = vmatpush1.msra.mxu0 0.0
  %541 = vmatprep.subr.mxu0 0.0
  %542 = vmatpush1.msra.mxu0 0.0
  %543 = vmatprep.subr.mxu0 0.0
  %544 = vmatpush1.msra.mxu0 0.0
  %545 = vmatprep.subr.mxu0 0.0
  %546 = vmatpush1.msra.mxu0 0.0
  %547 = vmatprep.subr.mxu0 0.0
  %548 = vmatpush1.msra.mxu0 0.0
  %549 = vmatprep.subr.mxu0 0.0
  %550 = vmatpush1.msra.mxu0 0.0
  %551 = vmatprep.subr.mxu0 0.0
  %552 = vmatpush1.msra.mxu0 0.0
  %553 = vmatprep.subr.mxu0 0.0
  %554 = vmatpush1.msra.mxu0 0.0
  %555 = vmatprep.subr.mxu0 0.0
  %556 = vmatpush1.msra.mxu0 0.0
  %557 = vmatprep.subr.mxu0 0.0
  %558 = vmatpush1.msra.mxu0 0.0
  %559 = vmatprep.subr.mxu0 0.0
  %560 = vmatpush1.msra.mxu0 0.0
  %561 = vmatprep.subr.mxu0 0.0
  %562 = vmatpush1.msra.mxu0 0.0
  %563 = vmatprep.subr.mxu0 0.0
  %564 = vmatpush1.msra.mxu0 0.0
  %565 = vmatprep.subr.mxu0 0.0
  %566 = vmatpush1.msra.mxu0 0.0
  %567 = vmatprep.subr.mxu0 0.0
  %568 = vmatpush1.msra.mxu0 0.0
  %569 = vmatprep.subr.mxu0 0.0
  %570 = vmatpush1.msra.mxu0 0.0
  %571 = vmatprep.mubr.f32.mxu0 0.0
  %572 = vmatmul.mubr.f32.gmra.mrb[0].mxu0 %v502
  %v573 = vpop.f32.mrb[0].mxu0
  %v574 = vadd.f32 0.0, %v573
  %v575 = vpop.f32.mrb[0].mxu0
  %576 = vmatprep.mubr.f32.mxu0 0.0
  %577 = vmatmul.mubr.f32.gmra.mrb[0].mxu0 %v505
  %v578 = vpop.f32.mrb[0].mxu0
  %v579 = vadd.f32 0.0, %v578
  %v580 = vpop.f32.mrb[0].mxu0
  %581 = vdwg.mxu0
  %v582 = vadd.f32 %v445, %v574
  %v583 = vadd.f32 %v446, %v579
  %v584 = vld [vmem:[%s5] sm:$0x1]
  %v586 = vlaneseq
  %v587 = vshrl.u32 %v586, 7
  %v588 = vsub.s32 0, %v587
  %v589 = vrot.slane %v584, %v588
  %v591 = vadd.f32 %v582, %v589
  %v592 = vadd.f32 %v583, %v589
  %v593 = vmax.f32 %v591, 0.0
  %v594 = vmax.f32 %v592, 0.0
  %v595 = vpack.c.bf16 %v594, %v593
  %v597 = vunpack.c.l.b16 %v595
  %v598 = vunpack.c.h.b16 %v595
  %v599 = vpack.c.b16 %v597, %v597
  %v600 = vpack.c.b16 %v598, %v598
  %603 = vst [vmem:[%s6] sm:$0xf] %v599
  %604 = vst [vmem:[%s6 + $0x4] sm:$0xf] %v600
  // Predicated region
  $region26: #{graphhop_forward.15} parent=0 // pred_check
    _
  $region27: #{graphhop_forward.15} parent=0 // pred_check_branch
    %606 = sbr.rel (0) target = $region29
  $region28: #{graphhop_forward.15} parent=0 // pred_region
    _
  $region29: #{graphhop_forward.15} parent=0 // pred_fallthru
    _
  // Predicated region
  $region30: #{graphhop_forward.15} parent=0 // pred_check
    _
  $region31: #{graphhop_forward.15} parent=0 // pred_check_branch
    %608 = sbr.rel (0) target = $region33
  $region32: #{graphhop_forward.15} parent=0 // pred_region
    _
  $region33: #{graphhop_forward.15} parent=0 // pred_fallthru
    _

// kernel: graphhop_forward.16
$region0: #{graphhop_forward.16}
  #allocation0 [shape = 'u32[]', space=smem, size = 0x4, offset = 0x4, fixed_abs, tag = 'smem constant byte address 0x4 - core index']
  #allocation1 [shape = 'u32[144,128]{1,0:T(1,128)}', space=vmem, size = 0x12000, scoped, tag = 'internal scratch']
  %s0 = inlined_call_operand.vmem [shape: bf16[16,128], index: 0, kind: input, shape index: {}]
  %s1 = inlined_call_operand.vmem [shape: bf16[5,16,128], index: 1, kind: input, shape index: {}]
  %s2 = inlined_call_operand.vmem [shape: bf16[128,128], index: 2, kind: input, shape index: {}]
  %s3 = inlined_call_operand.vmem [shape: f32[1,128], index: 3, kind: input, shape index: {}]
  %s4 = inlined_call_operand.vmem [shape: bf16[128,128], index: 4, kind: input, shape index: {}]
  %s5 = inlined_call_operand.vmem [shape: f32[1,128], index: 5, kind: input, shape index: {}]
  %s6 = inlined_call_operand.vmem [shape: bf16[128,128], index: 6, kind: input, shape index: {}]
  %s7 = inlined_call_operand.vmem [shape: f32[1,128], index: 7, kind: input, shape index: {}]
  %s8 = inlined_call_operand.vmem [shape: f32[128,8], index: 8, kind: input, shape index: {}]
  %s9 = inlined_call_operand.vmem [shape: f32[8,128], index: 9, kind: input, shape index: {}]
  %s10 = inlined_call_operand.vmem [shape: bf16[128,128], index: 10, kind: input, shape index: {}]
  %s11 = inlined_call_operand.vmem [shape: f32[1,128], index: 11, kind: input, shape index: {}]
  %s12 = inlined_call_operand.vmem [shape: bf16[16,128], index: 12, kind: output, shape index: {}]
  %s13 = sld [smem:[#allocation0]]
  $region58: #{graphhop_forward.16} parent=0
    _
  %s15 = ssub.s32 1, %s13
  %s16 = scalar_select 0, %s15, %s13
  // Predicated region
  $region2: #{graphhop_forward.16} parent=0 // pred_check
    _
  $region3: #{graphhop_forward.16} parent=0 // pred_check_branch
    %18 = sbr.rel (0) target = $region5
  $region4: #{graphhop_forward.16} parent=0 // pred_region
    _
  $region5: #{graphhop_forward.16} parent=0 // pred_fallthru
    _
  // Predicated region
  $region6: #{graphhop_forward.16} parent=0 // pred_check
    _
  $region7: #{graphhop_forward.16} parent=0 // pred_check_branch
    %20 = sbr.rel (0) target = $region9
  $region8: #{graphhop_forward.16} parent=0 // pred_region
    _
  $region9: #{graphhop_forward.16} parent=0 // pred_fallthru
    _
  // Predicated region
  $region10: #{graphhop_forward.16} parent=0 // pred_check
    _
  $region11: #{graphhop_forward.16} parent=0 // pred_check_branch
    %22 = sbr.rel (0) target = $region13
  $region12: #{graphhop_forward.16} parent=0 // pred_region
    _
  $region13: #{graphhop_forward.16} parent=0 // pred_fallthru
    _
  // Predicated region
  $region14: #{graphhop_forward.16} parent=0 // pred_check
    _
  $region15: #{graphhop_forward.16} parent=0 // pred_check_branch
    %24 = sbr.rel (0) target = $region17
  $region16: #{graphhop_forward.16} parent=0 // pred_region
    _
  $region17: #{graphhop_forward.16} parent=0 // pred_fallthru
    _
  // Predicated region
  $region18: #{graphhop_forward.16} parent=0 // pred_check
    _
  $region19: #{graphhop_forward.16} parent=0 // pred_check_branch
    %26 = sbr.rel (0) target = $region21
  $region20: #{graphhop_forward.16} parent=0 // pred_region
    _
  $region21: #{graphhop_forward.16} parent=0 // pred_fallthru
    _
  // Predicated region
  $region22: #{graphhop_forward.16} parent=0 // pred_check
    _
  $region23: #{graphhop_forward.16} parent=0 // pred_check_branch
    %28 = sbr.rel (0) target = $region25
  $region24: #{graphhop_forward.16} parent=0 // pred_region
    _
  $region25: #{graphhop_forward.16} parent=0 // pred_fallthru
    _
  // Predicated region
  $region26: #{graphhop_forward.16} parent=0 // pred_check
    _
  $region27: #{graphhop_forward.16} parent=0 // pred_check_branch
    %30 = sbr.rel (0) target = $region29
  $region28: #{graphhop_forward.16} parent=0 // pred_region
    _
  $region29: #{graphhop_forward.16} parent=0 // pred_fallthru
    _
  // Predicated region
  $region30: #{graphhop_forward.16} parent=0 // pred_check
    _
  $region31: #{graphhop_forward.16} parent=0 // pred_check_branch
    %32 = sbr.rel (0) target = $region33
  $region32: #{graphhop_forward.16} parent=0 // pred_region
    _
  $region33: #{graphhop_forward.16} parent=0 // pred_fallthru
    _
  // Predicated region
  $region34: #{graphhop_forward.16} parent=0 // pred_check
    _
  $region35: #{graphhop_forward.16} parent=0 // pred_check_branch
    %34 = sbr.rel (0) target = $region37
  $region36: #{graphhop_forward.16} parent=0 // pred_region
    _
  $region37: #{graphhop_forward.16} parent=0 // pred_fallthru
    _
  // Predicated region
  $region38: #{graphhop_forward.16} parent=0 // pred_check
    _
  $region39: #{graphhop_forward.16} parent=0 // pred_check_branch
    %36 = sbr.rel (0) target = $region41
  $region40: #{graphhop_forward.16} parent=0 // pred_region
    _
  $region41: #{graphhop_forward.16} parent=0 // pred_fallthru
    _
  // Predicated region
  $region42: #{graphhop_forward.16} parent=0 // pred_check
    _
  $region43: #{graphhop_forward.16} parent=0 // pred_check_branch
    %38 = sbr.rel (0) target = $region45
  $region44: #{graphhop_forward.16} parent=0 // pred_region
    _
  $region45: #{graphhop_forward.16} parent=0 // pred_fallthru
    _
  // Predicated region
  $region46: #{graphhop_forward.16} parent=0 // pred_check
    _
  $region47: #{graphhop_forward.16} parent=0 // pred_check_branch
    %40 = sbr.rel (0) target = $region49
  $region48: #{graphhop_forward.16} parent=0 // pred_region
    _
  $region49: #{graphhop_forward.16} parent=0 // pred_fallthru
    _
  %v42 = vld [vmem:[%s0] sm:$0xf]
  %v43 = vld [vmem:[%s0 + $0x4] sm:$0xf]
  %v44 = vld [vmem:[%s2] sm:$0xf]
  %v45 = vld [vmem:[%s2 + $0x4] sm:$0xf]
  %v46 = vld [vmem:[%s2 + $0x8] sm:$0xf]
  %v47 = vld [vmem:[%s2 + $0xc] sm:$0xf]
  %v48 = vld [vmem:[%s2 + $0x10] sm:$0xf]
  %v49 = vld [vmem:[%s2 + $0x14] sm:$0xf]
  %v50 = vld [vmem:[%s2 + $0x18] sm:$0xf]
  %v51 = vld [vmem:[%s2 + $0x1c] sm:$0xf]
  %v52 = vld [vmem:[%s2 + $0x20] sm:$0xf]
  %v53 = vld [vmem:[%s2 + $0x24] sm:$0xf]
  %v54 = vld [vmem:[%s2 + $0x28] sm:$0xf]
  %v55 = vld [vmem:[%s2 + $0x2c] sm:$0xf]
  %v56 = vld [vmem:[%s2 + $0x30] sm:$0xf]
  %v57 = vld [vmem:[%s2 + $0x34] sm:$0xf]
  %v58 = vld [vmem:[%s2 + $0x38] sm:$0xf]
  %v59 = vld [vmem:[%s2 + $0x3c] sm:$0xf]
  %v60 = vld [vmem:[%s3] sm:$0x1]
  %v62 = vlaneseq
  %v63 = vshrl.u32 %v62, 7
  %v64 = vsub.s32 0, %v63
  %v65 = vrot.slane %v60, %v64
  %v69 = vunpack.c.l.b16 %v42
  %v70 = vunpack.c.l.b16 %v43
  %v71 = vpack.c.b16 %v70, %v69
  %v89 = vunpack.c.l.b16 %v44
  %v90 = vunpack.c.l.b16 %v45
  %v91 = vunpack.c.l.b16 %v46
  %v92 = vunpack.c.l.b16 %v47
  %v93 = vunpack.c.l.b16 %v48
  %v94 = vunpack.c.l.b16 %v49
  %v95 = vunpack.c.l.b16 %v50
  %v96 = vunpack.c.l.b16 %v51
  %v97 = vunpack.c.l.b16 %v52
  %v98 = vunpack.c.l.b16 %v53
  %v99 = vunpack.c.l.b16 %v54
  %v100 = vunpack.c.l.b16 %v55
  %v101 = vunpack.c.l.b16 %v56
  %v102 = vunpack.c.l.b16 %v57
  %v103 = vunpack.c.l.b16 %v58
  %v104 = vunpack.c.l.b16 %v59
  %v105 = vpack.c.b16 %v90, %v89
  %v106 = vpack.c.b16 %v92, %v91
  %v107 = vpack.c.b16 %v94, %v93
  %v108 = vpack.c.b16 %v96, %v95
  %v109 = vpack.c.b16 %v98, %v97
  %v110 = vpack.c.b16 %v100, %v99
  %v111 = vpack.c.b16 %v102, %v101
  %v112 = vpack.c.b16 %v104, %v103
  %121 = vmatprep.subr.bf16.mxu0 0
  %122 = vmatpush1.bf16.msra.mxu0 %v105
  %123 = vmatprep.subr.bf16.mxu0 0
  %124 = vmatpush1.bf16.msra.mxu0 %v106
  %125 = vmatprep.subr.bf16.mxu0 0
  %126 = vmatpush1.bf16.msra.mxu0 %v107
  %127 = vmatprep.subr.bf16.mxu0 0
  %128 = vmatpush1.bf16.msra.mxu0 %v108
  %129 = vmatprep.subr.bf16.mxu0 0
  %130 = vmatpush1.bf16.msra.mxu0 %v109
  %131 = vmatprep.subr.bf16.mxu0 0
  %132 = vmatpush1.bf16.msra.mxu0 %v110
  %133 = vmatprep.subr.bf16.mxu0 0
  %134 = vmatpush1.bf16.msra.mxu0 %v111
  %135 = vmatprep.subr.bf16.mxu0 0
  %136 = vmatpush1.bf16.msra.mxu0 %v112
  %137 = vmatprep.subr.bf16.mxu0 0
  %138 = vmatpush1.bf16.msra.mxu0 0
  %139 = vmatprep.subr.bf16.mxu0 0
  %140 = vmatpush1.bf16.msra.mxu0 0
  %141 = vmatprep.subr.bf16.mxu0 0
  %142 = vmatpush1.bf16.msra.mxu0 0
  %143 = vmatprep.subr.bf16.mxu0 0
  %144 = vmatpush1.bf16.msra.mxu0 0
  %145 = vmatprep.subr.bf16.mxu0 0
  %146 = vmatpush1.bf16.msra.mxu0 0
  %147 = vmatprep.subr.bf16.mxu0 0
  %148 = vmatpush1.bf16.msra.mxu0 0
  %149 = vmatprep.subr.bf16.mxu0 0
  %150 = vmatpush1.bf16.msra.mxu0 0
  %151 = vmatprep.subr.bf16.mxu0 0
  %152 = vmatpush1.bf16.msra.mxu0 0
  %153 = vmatprep.mubr.bf16.mxu0 0
  %154 = vmatmul.mubr.bf16.gmra.mrb[0].mxu0 %v71
  %v155 = vpop.f32.mrb[0].mxu0
  %v156 = vadd.f32 %v65, %v155
  %v157 = vpop.f32.mrb[0].mxu0
  %v158 = vpop.f32.mrb[0].mxu0
  %v159 = vadd.f32 %v65, %v158
  %v160 = vpop.f32.mrb[0].mxu0
  %161 = vdwg.mxu0
  %v162 = vld [vmem:[%s8] sm:$0xff]
  %v163 = vld [vmem:[%s8 + $0x8] sm:$0xff]
  %v164 = vld [vmem:[%s8 + $0x10] sm:$0xff]
  %v165 = vld [vmem:[%s8 + $0x18] sm:$0xff]
  %v166 = vld [vmem:[%s8 + $0x20] sm:$0xff]
  %v167 = vld [vmem:[%s8 + $0x28] sm:$0xff]
  %v168 = vld [vmem:[%s8 + $0x30] sm:$0xff]
  %v169 = vld [vmem:[%s8 + $0x38] sm:$0xff]
  %v170 = vld [vmem:[%s8 + $0x40] sm:$0xff]
  %v171 = vld [vmem:[%s8 + $0x48] sm:$0xff]
  %v172 = vld [vmem:[%s8 + $0x50] sm:$0xff]
  %v173 = vld [vmem:[%s8 + $0x58] sm:$0xff]
  %v174 = vld [vmem:[%s8 + $0x60] sm:$0xff]
  %v175 = vld [vmem:[%s8 + $0x68] sm:$0xff]
  %v176 = vld [vmem:[%s8 + $0x70] sm:$0xff]
  %v177 = vld [vmem:[%s8 + $0x78] sm:$0xff]
  %v178 = vld [vmem:[%s9] sm:$0xff]
  %v179 = vld [vmem:[%s1] sm:$0xf]
  %v180 = vld [vmem:[%s1 + $0x4] sm:$0xf]
  %v181 = vld [vmem:[%s4] sm:$0xf]
  %v182 = vld [vmem:[%s4 + $0x4] sm:$0xf]
  %v183 = vld [vmem:[%s4 + $0x8] sm:$0xf]
  %v184 = vld [vmem:[%s4 + $0xc] sm:$0xf]
  %v185 = vld [vmem:[%s4 + $0x10] sm:$0xf]
  %v186 = vld [vmem:[%s4 + $0x14] sm:$0xf]
  %v187 = vld [vmem:[%s4 + $0x18] sm:$0xf]
  %v188 = vld [vmem:[%s4 + $0x1c] sm:$0xf]
  %v189 = vld [vmem:[%s4 + $0x20] sm:$0xf]
  %v190 = vld [vmem:[%s4 + $0x24] sm:$0xf]
  %v191 = vld [vmem:[%s4 + $0x28] sm:$0xf]
  %v192 = vld [vmem:[%s4 + $0x2c] sm:$0xf]
  %v193 = vld [vmem:[%s4 + $0x30] sm:$0xf]
  %v194 = vld [vmem:[%s4 + $0x34] sm:$0xf]
  %v195 = vld [vmem:[%s4 + $0x38] sm:$0xf]
  %v196 = vld [vmem:[%s4 + $0x3c] sm:$0xf]
  %v197 = vld [vmem:[%s5] sm:$0x1]
  %v199 = vlaneseq
  %v200 = vshrl.u32 %v199, 7
  %v201 = vsub.s32 0, %v200
  %v202 = vrot.slane %v197, %v201
  %v206 = vunpack.c.l.b16 %v179
  %v207 = vunpack.c.l.b16 %v180
  %v208 = vpack.c.b16 %v207, %v206
  %v226 = vunpack.c.l.b16 %v181
  %v227 = vunpack.c.l.b16 %v182
  %v228 = vunpack.c.l.b16 %v183
  %v229 = vunpack.c.l.b16 %v184
  %v230 = vunpack.c.l.b16 %v185
  %v231 = vunpack.c.l.b16 %v186
  %v232 = vunpack.c.l.b16 %v187
  %v233 = vunpack.c.l.b16 %v188
  %v234 = vunpack.c.l.b16 %v189
  %v235 = vunpack.c.l.b16 %v190
  %v236 = vunpack.c.l.b16 %v191
  %v237 = vunpack.c.l.b16 %v192
  %v238 = vunpack.c.l.b16 %v193
  %v239 = vunpack.c.l.b16 %v194
  %v240 = vunpack.c.l.b16 %v195
  %v241 = vunpack.c.l.b16 %v196
  %v242 = vpack.c.b16 %v227, %v226
  %v243 = vpack.c.b16 %v229, %v228
  %v244 = vpack.c.b16 %v231, %v230
  %v245 = vpack.c.b16 %v233, %v232
  %v246 = vpack.c.b16 %v235, %v234
  %v247 = vpack.c.b16 %v237, %v236
  %v248 = vpack.c.b16 %v239, %v238
  %v249 = vpack.c.b16 %v241, %v240
  %258 = vmatprep.subr.bf16.mxu0 0
  %259 = vmatpush1.bf16.msra.mxu0 %v242
  %260 = vmatprep.subr.bf16.mxu0 0
  %261 = vmatpush1.bf16.msra.mxu0 %v243
  %262 = vmatprep.subr.bf16.mxu0 0
  %263 = vmatpush1.bf16.msra.mxu0 %v244
  %264 = vmatprep.subr.bf16.mxu0 0
  %265 = vmatpush1.bf16.msra.mxu0 %v245
  %266 = vmatprep.subr.bf16.mxu0 0
  %267 = vmatpush1.bf16.msra.mxu0 %v246
  %268 = vmatprep.subr.bf16.mxu0 0
  %269 = vmatpush1.bf16.msra.mxu0 %v247
  %270 = vmatprep.subr.bf16.mxu0 0
  %271 = vmatpush1.bf16.msra.mxu0 %v248
  %272 = vmatprep.subr.bf16.mxu0 0
  %273 = vmatpush1.bf16.msra.mxu0 %v249
  %274 = vmatprep.subr.bf16.mxu0 0
  %275 = vmatpush1.bf16.msra.mxu0 0
  %276 = vmatprep.subr.bf16.mxu0 0
  %277 = vmatpush1.bf16.msra.mxu0 0
  %278 = vmatprep.subr.bf16.mxu0 0
  %279 = vmatpush1.bf16.msra.mxu0 0
  %280 = vmatprep.subr.bf16.mxu0 0
  %281 = vmatpush1.bf16.msra.mxu0 0
  %282 = vmatprep.subr.bf16.mxu0 0
  %283 = vmatpush1.bf16.msra.mxu0 0
  %284 = vmatprep.subr.bf16.mxu0 0
  %285 = vmatpush1.bf16.msra.mxu0 0
  %286 = vmatprep.subr.bf16.mxu0 0
  %287 = vmatpush1.bf16.msra.mxu0 0
  %288 = vmatprep.subr.bf16.mxu0 0
  %289 = vmatpush1.bf16.msra.mxu0 0
  %290 = vmatprep.mubr.bf16.mxu0 0
  %291 = vmatmul.mubr.bf16.gmra.mrb[0].mxu0 %v208
  %v292 = vpop.f32.mrb[0].mxu0
  %v293 = vadd.f32 %v202, %v292
  %v294 = vpop.f32.mrb[0].mxu0
  %v295 = vpop.f32.mrb[0].mxu0
  %v296 = vadd.f32 %v202, %v295
  %v297 = vpop.f32.mrb[0].mxu0
  %298 = vdwg.mxu0
  %v299 = vld [vmem:[%s6] sm:$0xf]
  %v300 = vld [vmem:[%s6 + $0x4] sm:$0xf]
  %v301 = vld [vmem:[%s6 + $0x8] sm:$0xf]
  %v302 = vld [vmem:[%s6 + $0xc] sm:$0xf]
  %v303 = vld [vmem:[%s6 + $0x10] sm:$0xf]
  %v304 = vld [vmem:[%s6 + $0x14] sm:$0xf]
  %v305 = vld [vmem:[%s6 + $0x18] sm:$0xf]
  %v306 = vld [vmem:[%s6 + $0x1c] sm:$0xf]
  %v307 = vld [vmem:[%s6 + $0x20] sm:$0xf]
  %v308 = vld [vmem:[%s6 + $0x24] sm:$0xf]
  %v309 = vld [vmem:[%s6 + $0x28] sm:$0xf]
  %v310 = vld [vmem:[%s6 + $0x2c] sm:$0xf]
  %v311 = vld [vmem:[%s6 + $0x30] sm:$0xf]
  %v312 = vld [vmem:[%s6 + $0x34] sm:$0xf]
  %v313 = vld [vmem:[%s6 + $0x38] sm:$0xf]
  %v314 = vld [vmem:[%s6 + $0x3c] sm:$0xf]
  %v315 = vld [vmem:[%s7] sm:$0x1]
  %v317 = vlaneseq
  %v318 = vshrl.u32 %v317, 7
  %v319 = vsub.s32 0, %v318
  %v320 = vrot.slane %v315, %v319
  %v338 = vunpack.c.l.b16 %v299
  %v339 = vunpack.c.l.b16 %v300
  %v340 = vunpack.c.l.b16 %v301
  %v341 = vunpack.c.l.b16 %v302
  %v342 = vunpack.c.l.b16 %v303
  %v343 = vunpack.c.l.b16 %v304
  %v344 = vunpack.c.l.b16 %v305
  %v345 = vunpack.c.l.b16 %v306
  %v346 = vunpack.c.l.b16 %v307
  %v347 = vunpack.c.l.b16 %v308
  %v348 = vunpack.c.l.b16 %v309
  %v349 = vunpack.c.l.b16 %v310
  %v350 = vunpack.c.l.b16 %v311
  %v351 = vunpack.c.l.b16 %v312
  %v352 = vunpack.c.l.b16 %v313
  %v353 = vunpack.c.l.b16 %v314
  %v354 = vpack.c.b16 %v339, %v338
  %v355 = vpack.c.b16 %v341, %v340
  %v356 = vpack.c.b16 %v343, %v342
  %v357 = vpack.c.b16 %v345, %v344
  %v358 = vpack.c.b16 %v347, %v346
  %v359 = vpack.c.b16 %v349, %v348
  %v360 = vpack.c.b16 %v351, %v350
  %v361 = vpack.c.b16 %v353, %v352
  %370 = vmatprep.subr.bf16.mxu0 0
  %371 = vmatpush1.bf16.msra.mxu0 %v354
  %372 = vmatprep.subr.bf16.mxu0 0
  %373 = vmatpush1.bf16.msra.mxu0 %v355
  %374 = vmatprep.subr.bf16.mxu0 0
  %375 = vmatpush1.bf16.msra.mxu0 %v356
  %376 = vmatprep.subr.bf16.mxu0 0
  %377 = vmatpush1.bf16.msra.mxu0 %v357
  %378 = vmatprep.subr.bf16.mxu0 0
  %379 = vmatpush1.bf16.msra.mxu0 %v358
  %380 = vmatprep.subr.bf16.mxu0 0
  %381 = vmatpush1.bf16.msra.mxu0 %v359
  %382 = vmatprep.subr.bf16.mxu0 0
  %383 = vmatpush1.bf16.msra.mxu0 %v360
  %384 = vmatprep.subr.bf16.mxu0 0
  %385 = vmatpush1.bf16.msra.mxu0 %v361
  %386 = vmatprep.subr.bf16.mxu0 0
  %387 = vmatpush1.bf16.msra.mxu0 0
  %388 = vmatprep.subr.bf16.mxu0 0
  %389 = vmatpush1.bf16.msra.mxu0 0
  %390 = vmatprep.subr.bf16.mxu0 0
  %391 = vmatpush1.bf16.msra.mxu0 0
  %392 = vmatprep.subr.bf16.mxu0 0
  %393 = vmatpush1.bf16.msra.mxu0 0
  %394 = vmatprep.subr.bf16.mxu0 0
  %395 = vmatpush1.bf16.msra.mxu0 0
  %396 = vmatprep.subr.bf16.mxu0 0
  %397 = vmatpush1.bf16.msra.mxu0 0
  %398 = vmatprep.subr.bf16.mxu0 0
  %399 = vmatpush1.bf16.msra.mxu0 0
  %400 = vmatprep.subr.bf16.mxu0 0
  %401 = vmatpush1.bf16.msra.mxu0 0
  %402 = vmatprep.mubr.bf16.mxu0 0
  %403 = vmatmul.mubr.bf16.gmra.mrb[0].mxu0 %v208
  %v404 = vpop.f32.mrb[0].mxu0
  %v405 = vadd.f32 %v320, %v404
  %v406 = vpop.f32.mrb[0].mxu0
  %v407 = vpop.f32.mrb[0].mxu0
  %v408 = vadd.f32 %v320, %v407
  %v409 = vpop.f32.mrb[0].mxu0
  %410 = vdwg.mxu0
  %v411 = vmul.f32 %v156, %v293
  %v412 = vmul.f32 %v159, %v296
  %413 = vmatprep.subr.mxu0 0.0
  %414 = vmatpush1.msra.mxu0 %v162
  %415 = vmatprep.subr.mxu0 0.0
  %416 = vmatpush1.msra.mxu0 %v163
  %417 = vmatprep.subr.mxu0 0.0
  %418 = vmatpush1.msra.mxu0 %v164
  %419 = vmatprep.subr.mxu0 0.0
  %420 = vmatpush1.msra.mxu0 %v165
  %421 = vmatprep.subr.mxu0 0.0
  %422 = vmatpush1.msra.mxu0 %v166
  %423 = vmatprep.subr.mxu0 0.0
  %424 = vmatpush1.msra.mxu0 %v167
  %425 = vmatprep.subr.mxu0 0.0
  %426 = vmatpush1.msra.mxu0 %v168
  %427 = vmatprep.subr.mxu0 0.0
  %428 = vmatpush1.msra.mxu0 %v169
  %429 = vmatprep.subr.mxu0 0.0
  %430 = vmatpush1.msra.mxu0 %v170
  %431 = vmatprep.subr.mxu0 0.0
  %432 = vmatpush1.msra.mxu0 %v171
  %433 = vmatprep.subr.mxu0 0.0
  %434 = vmatpush1.msra.mxu0 %v172
  %435 = vmatprep.subr.mxu0 0.0
  %436 = vmatpush1.msra.mxu0 %v173
  %437 = vmatprep.subr.mxu0 0.0
  %438 = vmatpush1.msra.mxu0 %v174
  %439 = vmatprep.subr.mxu0 0.0
  %440 = vmatpush1.msra.mxu0 %v175
  %441 = vmatprep.subr.mxu0 0.0
  %442 = vmatpush1.msra.mxu0 %v176
  %443 = vmatprep.subr.mxu0 0.0
  %444 = vmatpush1.msra.mxu0 %v177
  %445 = vmatprep.subr.mxu0 0.0
  %446 = vmatpush1.msra.mxu0 0.0
  %447 = vmatprep.subr.mxu0 0.0
  %448 = vmatpush1.msra.mxu0 0.0
  %449 = vmatprep.subr.mxu0 0.0
  %450 = vmatpush1.msra.mxu0 0.0
  %451 = vmatprep.subr.mxu0 0.0
  %452 = vmatpush1.msra.mxu0 0.0
  %453 = vmatprep.subr.mxu0 0.0
  %454 = vmatpush1.msra.mxu0 0.0
  %455 = vmatprep.subr.mxu0 0.0
  %456 = vmatpush1.msra.mxu0 0.0
  %457 = vmatprep.subr.mxu0 0.0
  %458 = vmatpush1.msra.mxu0 0.0
  %459 = vmatprep.subr.mxu0 0.0
  %460 = vmatpush1.msra.mxu0 0.0
  %461 = vmatprep.subr.mxu0 0.0
  %462 = vmatpush1.msra.mxu0 0.0
  %463 = vmatprep.subr.mxu0 0.0
  %464 = vmatpush1.msra.mxu0 0.0
  %465 = vmatprep.subr.mxu0 0.0
  %466 = vmatpush1.msra.mxu0 0.0
  %467 = vmatprep.subr.mxu0 0.0
  %468 = vmatpush1.msra.mxu0 0.0
  %469 = vmatprep.subr.mxu0 0.0
  %470 = vmatpush1.msra.mxu0 0.0
  %471 = vmatprep.subr.mxu0 0.0
  %472 = vmatpush1.msra.mxu0 0.0
  %473 = vmatprep.subr.mxu0 0.0
  %474 = vmatpush1.msra.mxu0 0.0
  %475 = vmatprep.subr.mxu0 0.0
  %476 = vmatpush1.msra.mxu0 0.0
  %477 = vmatprep.mubr.f32.mxu0 0.0
  %478 = vmatmul.mubr.f32.gmra.mrb[0].mxu0 %v411
  %v479 = vpop.f32.mrb[0].mxu0
  %v480 = vadd.f32 0.0, %v479
  %v481 = vpop.f32.mrb[0].mxu0
  %482 = vmatprep.mubr.f32.mxu0 0.0
  %483 = vmatmul.mubr.f32.gmra.mrb[0].mxu0 %v412
  %v484 = vpop.f32.mrb[0].mxu0
  %v485 = vadd.f32 0.0, %v484
  %v486 = vpop.f32.mrb[0].mxu0
  %487 = vdwg.mxu0
  %v488 = vmul.f32 %v480, 0.25
  %v489 = vmul.f32 %v485, 0.25
  %s490 = scalar_lea.vmem %s1, 8
  %v491 = vld [vmem:[%s490] sm:$0xf]
  %v492 = vld [vmem:[%s490 + $0x4] sm:$0xf]
  %v495 = vunpack.c.l.b16 %v491
  %v496 = vunpack.c.l.b16 %v492
  %v497 = vpack.c.b16 %v496, %v495
  %499 = vmatprep.subr.bf16.mxu0 0
  %500 = vmatpush1.bf16.msra.mxu0 %v242
  %501 = vmatprep.subr.bf16.mxu0 0
  %502 = vmatpush1.bf16.msra.mxu0 %v243
  %503 = vmatprep.subr.bf16.mxu0 0
  %504 = vmatpush1.bf16.msra.mxu0 %v244
  %505 = vmatprep.subr.bf16.mxu0 0
  %506 = vmatpush1.bf16.msra.mxu0 %v245
  %507 = vmatprep.subr.bf16.mxu0 0
  %508 = vmatpush1.bf16.msra.mxu0 %v246
  %509 = vmatprep.subr.bf16.mxu0 0
  %510 = vmatpush1.bf16.msra.mxu0 %v247
  %511 = vmatprep.subr.bf16.mxu0 0
  %512 = vmatpush1.bf16.msra.mxu0 %v248
  %513 = vmatprep.subr.bf16.mxu0 0
  %514 = vmatpush1.bf16.msra.mxu0 %v249
  %515 = vmatprep.subr.bf16.mxu0 0
  %516 = vmatpush1.bf16.msra.mxu0 0
  %517 = vmatprep.subr.bf16.mxu0 0
  %518 = vmatpush1.bf16.msra.mxu0 0
  %519 = vmatprep.subr.bf16.mxu0 0
  %520 = vmatpush1.bf16.msra.mxu0 0
  %521 = vmatprep.subr.bf16.mxu0 0
  %522 = vmatpush1.bf16.msra.mxu0 0
  %523 = vmatprep.subr.bf16.mxu0 0
  %524 = vmatpush1.bf16.msra.mxu0 0
  %525 = vmatprep.subr.bf16.mxu0 0
  %526 = vmatpush1.bf16.msra.mxu0 0
  %527 = vmatprep.subr.bf16.mxu0 0
  %528 = vmatpush1.bf16.msra.mxu0 0
  %529 = vmatprep.subr.bf16.mxu0 0
  %530 = vmatpush1.bf16.msra.mxu0 0
  %531 = vmatprep.mubr.bf16.mxu0 0
  %532 = vmatmul.mubr.bf16.gmra.mrb[0].mxu0 %v497
  %v533 = vpop.f32.mrb[0].mxu0
  %v534 = vadd.f32 %v202, %v533
  %v535 = vpop.f32.mrb[0].mxu0
  %v536 = vpop.f32.mrb[0].mxu0
  %v537 = vadd.f32 %v202, %v536
  %v538 = vpop.f32.mrb[0].mxu0
  %539 = vdwg.mxu0
  %540 = vmatprep.subr.bf16.mxu0 0
  %541 = vmatpush1.bf16.msra.mxu0 %v354
  %542 = vmatprep.subr.bf16.mxu0 0
  %543 = vmatpush1.bf16.msra.mxu0 %v355
  %544 = vmatprep.subr.bf16.mxu0 0
  %545 = vmatpush1.bf16.msra.mxu0 %v356
  %546 = vmatprep.subr.bf16.mxu0 0
  %547 = vmatpush1.bf16.msra.mxu0 %v357
  %548 = vmatprep.subr.bf16.mxu0 0
  %549 = vmatpush1.bf16.msra.mxu0 %v358
  %550 = vmatprep.subr.bf16.mxu0 0
  %551 = vmatpush1.bf16.msra.mxu0 %v359
  %552 = vmatprep.subr.bf16.mxu0 0
  %553 = vmatpush1.bf16.msra.mxu0 %v360
  %554 = vmatprep.subr.bf16.mxu0 0
  %555 = vmatpush1.bf16.msra.mxu0 %v361
  %556 = vmatprep.subr.bf16.mxu0 0
  %557 = vmatpush1.bf16.msra.mxu0 0
  %558 = vmatprep.subr.bf16.mxu0 0
  %559 = vmatpush1.bf16.msra.mxu0 0
  %560 = vmatprep.subr.bf16.mxu0 0
  %561 = vmatpush1.bf16.msra.mxu0 0
  %562 = vmatprep.subr.bf16.mxu0 0
  %563 = vmatpush1.bf16.msra.mxu0 0
  %564 = vmatprep.subr.bf16.mxu0 0
  %565 = vmatpush1.bf16.msra.mxu0 0
  %566 = vmatprep.subr.bf16.mxu0 0
  %567 = vmatpush1.bf16.msra.mxu0 0
  %568 = vmatprep.subr.bf16.mxu0 0
  %569 = vmatpush1.bf16.msra.mxu0 0
  %570 = vmatprep.subr.bf16.mxu0 0
  %571 = vmatpush1.bf16.msra.mxu0 0
  %572 = vmatprep.mubr.bf16.mxu0 0
  %573 = vmatmul.mubr.bf16.gmra.mrb[0].mxu0 %v497
  %v574 = vpop.f32.mrb[0].mxu0
  %v575 = vadd.f32 %v320, %v574
  %v576 = vpop.f32.mrb[0].mxu0
  %v577 = vpop.f32.mrb[0].mxu0
  %v578 = vadd.f32 %v320, %v577
  %v579 = vpop.f32.mrb[0].mxu0
  %580 = vdwg.mxu0
  %v581 = vmul.f32 %v156, %v534
  %v582 = vmul.f32 %v159, %v537
  %583 = vmatprep.subr.mxu0 0.0
  %584 = vmatpush1.msra.mxu0 %v162
  %585 = vmatprep.subr.mxu0 0.0
  %586 = vmatpush1.msra.mxu0 %v163
  %587 = vmatprep.subr.mxu0 0.0
  %588 = vmatpush1.msra.mxu0 %v164
  %589 = vmatprep.subr.mxu0 0.0
  %590 = vmatpush1.msra.mxu0 %v165
  %591 = vmatprep.subr.mxu0 0.0
  %592 = vmatpush1.msra.mxu0 %v166
  %593 = vmatprep.subr.mxu0 0.0
  %594 = vmatpush1.msra.mxu0 %v167
  %595 = vmatprep.subr.mxu0 0.0
  %596 = vmatpush1.msra.mxu0 %v168
  %597 = vmatprep.subr.mxu0 0.0
  %598 = vmatpush1.msra.mxu0 %v169
  %599 = vmatprep.subr.mxu0 0.0
  %600 = vmatpush1.msra.mxu0 %v170
  %601 = vmatprep.subr.mxu0 0.0
  %602 = vmatpush1.msra.mxu0 %v171
  %603 = vmatprep.subr.mxu0 0.0
  %604 = vmatpush1.msra.mxu0 %v172
  %605 = vmatprep.subr.mxu0 0.0
  %606 = vmatpush1.msra.mxu0 %v173
  %607 = vmatprep.subr.mxu0 0.0
  %608 = vmatpush1.msra.mxu0 %v174
  %609 = vmatprep.subr.mxu0 0.0
  %610 = vmatpush1.msra.mxu0 %v175
  %611 = vmatprep.subr.mxu0 0.0
  %612 = vmatpush1.msra.mxu0 %v176
  %613 = vmatprep.subr.mxu0 0.0
  %614 = vmatpush1.msra.mxu0 %v177
  %615 = vmatprep.subr.mxu0 0.0
  %616 = vmatpush1.msra.mxu0 0.0
  %617 = vmatprep.subr.mxu0 0.0
  %618 = vmatpush1.msra.mxu0 0.0
  %619 = vmatprep.subr.mxu0 0.0
  %620 = vmatpush1.msra.mxu0 0.0
  %621 = vmatprep.subr.mxu0 0.0
  %622 = vmatpush1.msra.mxu0 0.0
  %623 = vmatprep.subr.mxu0 0.0
  %624 = vmatpush1.msra.mxu0 0.0
  %625 = vmatprep.subr.mxu0 0.0
  %626 = vmatpush1.msra.mxu0 0.0
  %627 = vmatprep.subr.mxu0 0.0
  %628 = vmatpush1.msra.mxu0 0.0
  %629 = vmatprep.subr.mxu0 0.0
  %630 = vmatpush1.msra.mxu0 0.0
  %631 = vmatprep.subr.mxu0 0.0
  %632 = vmatpush1.msra.mxu0 0.0
  %633 = vmatprep.subr.mxu0 0.0
  %634 = vmatpush1.msra.mxu0 0.0
  %635 = vmatprep.subr.mxu0 0.0
  %636 = vmatpush1.msra.mxu0 0.0
  %637 = vmatprep.subr.mxu0 0.0
  %638 = vmatpush1.msra.mxu0 0.0
  %639 = vmatprep.subr.mxu0 0.0
  %640 = vmatpush1.msra.mxu0 0.0
  %641 = vmatprep.subr.mxu0 0.0
  %642 = vmatpush1.msra.mxu0 0.0
  %643 = vmatprep.subr.mxu0 0.0
  %644 = vmatpush1.msra.mxu0 0.0
  %645 = vmatprep.subr.mxu0 0.0
  %646 = vmatpush1.msra.mxu0 0.0
  %647 = vmatprep.mubr.f32.mxu0 0.0
  %648 = vmatmul.mubr.f32.gmra.mrb[0].mxu0 %v581
  %v649 = vpop.f32.mrb[0].mxu0
  %v650 = vadd.f32 0.0, %v649
  %v651 = vpop.f32.mrb[0].mxu0
  %652 = vmatprep.mubr.f32.mxu0 0.0
  %653 = vmatmul.mubr.f32.gmra.mrb[0].mxu0 %v582
  %v654 = vpop.f32.mrb[0].mxu0
  %v655 = vadd.f32 0.0, %v654
  %v656 = vpop.f32.mrb[0].mxu0
  %657 = vdwg.mxu0
  %v658 = vmul.f32 %v650, 0.25
  %v659 = vmul.f32 %v655, 0.25
  %s660 = scalar_lea.vmem %s1, 16
  %v661 = vld [vmem:[%s660] sm:$0xf]
  %v662 = vld [vmem:[%s660 + $0x4] sm:$0xf]
  %v665 = vunpack.c.l.b16 %v661
  %v666 = vunpack.c.l.b16 %v662
  %v667 = vpack.c.b16 %v666, %v665
  %669 = vmatprep.subr.bf16.mxu0 0
  %670 = vmatpush1.bf16.msra.mxu0 %v242
  %671 = vmatprep.subr.bf16.mxu0 0
  %672 = vmatpush1.bf16.msra.mxu0 %v243
  %673 = vmatprep.subr.bf16.mxu0 0
  %674 = vmatpush1.bf16.msra.mxu0 %v244
  %675 = vmatprep.subr.bf16.mxu0 0
  %676 = vmatpush1.bf16.msra.mxu0 %v245
  %677 = vmatprep.subr.bf16.mxu0 0
  %678 = vmatpush1.bf16.msra.mxu0 %v246
  %679 = vmatprep.subr.bf16.mxu0 0
  %680 = vmatpush1.bf16.msra.mxu0 %v247
  %681 = vmatprep.subr.bf16.mxu0 0
  %682 = vmatpush1.bf16.msra.mxu0 %v248
  %683 = vmatprep.subr.bf16.mxu0 0
  %684 = vmatpush1.bf16.msra.mxu0 %v249
  %685 = vmatprep.subr.bf16.mxu0 0
  %686 = vmatpush1.bf16.msra.mxu0 0
  %687 = vmatprep.subr.bf16.mxu0 0
  %688 = vmatpush1.bf16.msra.mxu0 0
  %689 = vmatprep.subr.bf16.mxu0 0
  %690 = vmatpush1.bf16.msra.mxu0 0
  %691 = vmatprep.subr.bf16.mxu0 0
  %692 = vmatpush1.bf16.msra.mxu0 0
  %693 = vmatprep.subr.bf16.mxu0 0
  %694 = vmatpush1.bf16.msra.mxu0 0
  %695 = vmatprep.subr.bf16.mxu0 0
  %696 = vmatpush1.bf16.msra.mxu0 0
  %697 = vmatprep.subr.bf16.mxu0 0
  %698 = vmatpush1.bf16.msra.mxu0 0
  %699 = vmatprep.subr.bf16.mxu0 0
  %700 = vmatpush1.bf16.msra.mxu0 0
  %701 = vmatprep.mubr.bf16.mxu0 0
  %702 = vmatmul.mubr.bf16.gmra.mrb[0].mxu0 %v667
  %v703 = vpop.f32.mrb[0].mxu0
  %v704 = vadd.f32 %v202, %v703
  %v705 = vpop.f32.mrb[0].mxu0
  %v706 = vpop.f32.mrb[0].mxu0
  %v707 = vadd.f32 %v202, %v706
  %v708 = vpop.f32.mrb[0].mxu0
  %709 = vdwg.mxu0
  %710 = vmatprep.subr.bf16.mxu0 0
  %711 = vmatpush1.bf16.msra.mxu0 %v354
  %712 = vmatprep.subr.bf16.mxu0 0
  %713 = vmatpush1.bf16.msra.mxu0 %v355
  %714 = vmatprep.subr.bf16.mxu0 0
  %715 = vmatpush1.bf16.msra.mxu0 %v356
  %716 = vmatprep.subr.bf16.mxu0 0
  %717 = vmatpush1.bf16.msra.mxu0 %v357
  %718 = vmatprep.subr.bf16.mxu0 0
  %719 = vmatpush1.bf16.msra.mxu0 %v358
  %720 = vmatprep.subr.bf16.mxu0 0
  %721 = vmatpush1.bf16.msra.mxu0 %v359
  %722 = vmatprep.subr.bf16.mxu0 0
  %723 = vmatpush1.bf16.msra.mxu0 %v360
  %724 = vmatprep.subr.bf16.mxu0 0
  %725 = vmatpush1.bf16.msra.mxu0 %v361
  %726 = vmatprep.subr.bf16.mxu0 0
  %727 = vmatpush1.bf16.msra.mxu0 0
  %728 = vmatprep.subr.bf16.mxu0 0
  %729 = vmatpush1.bf16.msra.mxu0 0
  %730 = vmatprep.subr.bf16.mxu0 0
  %731 = vmatpush1.bf16.msra.mxu0 0
  %732 = vmatprep.subr.bf16.mxu0 0
  %733 = vmatpush1.bf16.msra.mxu0 0
  %734 = vmatprep.subr.bf16.mxu0 0
  %735 = vmatpush1.bf16.msra.mxu0 0
  %736 = vmatprep.subr.bf16.mxu0 0
  %737 = vmatpush1.bf16.msra.mxu0 0
  %738 = vmatprep.subr.bf16.mxu0 0
  %739 = vmatpush1.bf16.msra.mxu0 0
  %740 = vmatprep.subr.bf16.mxu0 0
  %741 = vmatpush1.bf16.msra.mxu0 0
  %742 = vmatprep.mubr.bf16.mxu0 0
  %743 = vmatmul.mubr.bf16.gmra.mrb[0].mxu0 %v667
  %v744 = vpop.f32.mrb[0].mxu0
  %v745 = vadd.f32 %v320, %v744
  %v746 = vpop.f32.mrb[0].mxu0
  %v747 = vpop.f32.mrb[0].mxu0
  %v748 = vadd.f32 %v320, %v747
  %v749 = vpop.f32.mrb[0].mxu0
  %750 = vdwg.mxu0
  %v751 = vmul.f32 %v156, %v704
  %v752 = vmul.f32 %v159, %v707
  %753 = vmatprep.subr.mxu0 0.0
  %754 = vmatpush1.msra.mxu0 %v162
  %755 = vmatprep.subr.mxu0 0.0
  %756 = vmatpush1.msra.mxu0 %v163
  %757 = vmatprep.subr.mxu0 0.0
  %758 = vmatpush1.msra.mxu0 %v164
  %759 = vmatprep.subr.mxu0 0.0
  %760 = vmatpush1.msra.mxu0 %v165
  %761 = vmatprep.subr.mxu0 0.0
  %762 = vmatpush1.msra.mxu0 %v166
  %763 = vmatprep.subr.mxu0 0.0
  %764 = vmatpush1.msra.mxu0 %v167
  %765 = vmatprep.subr.mxu0 0.0
  %766 = vmatpush1.msra.mxu0 %v168
  %767 = vmatprep.subr.mxu0 0.0
  %768 = vmatpush1.msra.mxu0 %v169
  %769 = vmatprep.subr.mxu0 0.0
  %770 = vmatpush1.msra.mxu0 %v170
  %771 = vmatprep.subr.mxu0 0.0
  %772 = vmatpush1.msra.mxu0 %v171
  %773 = vmatprep.subr.mxu0 0.0
  %774 = vmatpush1.msra.mxu0 %v172
  %775 = vmatprep.subr.mxu0 0.0
  %776 = vmatpush1.msra.mxu0 %v173
  %777 = vmatprep.subr.mxu0 0.0
  %778 = vmatpush1.msra.mxu0 %v174
  %779 = vmatprep.subr.mxu0 0.0
  %780 = vmatpush1.msra.mxu0 %v175
  %781 = vmatprep.subr.mxu0 0.0
  %782 = vmatpush1.msra.mxu0 %v176
  %783 = vmatprep.subr.mxu0 0.0
  %784 = vmatpush1.msra.mxu0 %v177
  %785 = vmatprep.subr.mxu0 0.0
  %786 = vmatpush1.msra.mxu0 0.0
  %787 = vmatprep.subr.mxu0 0.0
  %788 = vmatpush1.msra.mxu0 0.0
  %789 = vmatprep.subr.mxu0 0.0
  %790 = vmatpush1.msra.mxu0 0.0
  %791 = vmatprep.subr.mxu0 0.0
  %792 = vmatpush1.msra.mxu0 0.0
  %793 = vmatprep.subr.mxu0 0.0
  %794 = vmatpush1.msra.mxu0 0.0
  %795 = vmatprep.subr.mxu0 0.0
  %796 = vmatpush1.msra.mxu0 0.0
  %797 = vmatprep.subr.mxu0 0.0
  %798 = vmatpush1.msra.mxu0 0.0
  %799 = vmatprep.subr.mxu0 0.0
  %800 = vmatpush1.msra.mxu0 0.0
  %801 = vmatprep.subr.mxu0 0.0
  %802 = vmatpush1.msra.mxu0 0.0
  %803 = vmatprep.subr.mxu0 0.0
  %804 = vmatpush1.msra.mxu0 0.0
  %805 = vmatprep.subr.mxu0 0.0
  %806 = vmatpush1.msra.mxu0 0.0
  %807 = vmatprep.subr.mxu0 0.0
  %808 = vmatpush1.msra.mxu0 0.0
  %809 = vmatprep.subr.mxu0 0.0
  %810 = vmatpush1.msra.mxu0 0.0
  %811 = vmatprep.subr.mxu0 0.0
  %812 = vmatpush1.msra.mxu0 0.0
  %813 = vmatprep.subr.mxu0 0.0
  %814 = vmatpush1.msra.mxu0 0.0
  %815 = vmatprep.subr.mxu0 0.0
  %816 = vmatpush1.msra.mxu0 0.0
  %817 = vmatprep.mubr.f32.mxu0 0.0
  %818 = vmatmul.mubr.f32.gmra.mrb[0].mxu0 %v751
  %v819 = vpop.f32.mrb[0].mxu0
  %v820 = vadd.f32 0.0, %v819
  %v821 = vpop.f32.mrb[0].mxu0
  %822 = vmatprep.mubr.f32.mxu0 0.0
  %823 = vmatmul.mubr.f32.gmra.mrb[0].mxu0 %v752
  %v824 = vpop.f32.mrb[0].mxu0
  %v825 = vadd.f32 0.0, %v824
  %v826 = vpop.f32.mrb[0].mxu0
  %827 = vdwg.mxu0
  %v828 = vmul.f32 %v820, 0.25
  %v829 = vmul.f32 %v825, 0.25
  %s830 = scalar_lea.vmem %s1, 24
  %v831 = vld [vmem:[%s830] sm:$0xf]
  %v832 = vld [vmem:[%s830 + $0x4] sm:$0xf]
  %v835 = vunpack.c.l.b16 %v831
  %v836 = vunpack.c.l.b16 %v832
  %v837 = vpack.c.b16 %v836, %v835
  %839 = vmatprep.subr.bf16.mxu0 0
  %840 = vmatpush1.bf16.msra.mxu0 %v242
  %841 = vmatprep.subr.bf16.mxu0 0
  %842 = vmatpush1.bf16.msra.mxu0 %v243
  %843 = vmatprep.subr.bf16.mxu0 0
  %844 = vmatpush1.bf16.msra.mxu0 %v244
  %845 = vmatprep.subr.bf16.mxu0 0
  %846 = vmatpush1.bf16.msra.mxu0 %v245
  %847 = vmatprep.subr.bf16.mxu0 0
  %848 = vmatpush1.bf16.msra.mxu0 %v246
  %849 = vmatprep.subr.bf16.mxu0 0
  %850 = vmatpush1.bf16.msra.mxu0 %v247
  %851 = vmatprep.subr.bf16.mxu0 0
  %852 = vmatpush1.bf16.msra.mxu0 %v248
  %853 = vmatprep.subr.bf16.mxu0 0
  %854 = vmatpush1.bf16.msra.mxu0 %v249
  %855 = vmatprep.subr.bf16.mxu0 0
  %856 = vmatpush1.bf16.msra.mxu0 0
  %857 = vmatprep.subr.bf16.mxu0 0
  %858 = vmatpush1.bf16.msra.mxu0 0
  %859 = vmatprep.subr.bf16.mxu0 0
  %860 = vmatpush1.bf16.msra.mxu0 0
  %861 = vmatprep.subr.bf16.mxu0 0
  %862 = vmatpush1.bf16.msra.mxu0 0
  %863 = vmatprep.subr.bf16.mxu0 0
  %864 = vmatpush1.bf16.msra.mxu0 0
  %865 = vmatprep.subr.bf16.mxu0 0
  %866 = vmatpush1.bf16.msra.mxu0 0
  %867 = vmatprep.subr.bf16.mxu0 0
  %868 = vmatpush1.bf16.msra.mxu0 0
  %869 = vmatprep.subr.bf16.mxu0 0
  %870 = vmatpush1.bf16.msra.mxu0 0
  %871 = vmatprep.mubr.bf16.mxu0 0
  %872 = vmatmul.mubr.bf16.gmra.mrb[0].mxu0 %v837
  %v873 = vpop.f32.mrb[0].mxu0
  %v874 = vadd.f32 %v202, %v873
  %v875 = vpop.f32.mrb[0].mxu0
  %v876 = vpop.f32.mrb[0].mxu0
  %v877 = vadd.f32 %v202, %v876
  %v878 = vpop.f32.mrb[0].mxu0
  %879 = vdwg.mxu0
  %880 = vmatprep.subr.bf16.mxu0 0
  %881 = vmatpush1.bf16.msra.mxu0 %v354
  %882 = vmatprep.subr.bf16.mxu0 0
  %883 = vmatpush1.bf16.msra.mxu0 %v355
  %884 = vmatprep.subr.bf16.mxu0 0
  %885 = vmatpush1.bf16.msra.mxu0 %v356
  %886 = vmatprep.subr.bf16.mxu0 0
  %887 = vmatpush1.bf16.msra.mxu0 %v357
  %888 = vmatprep.subr.bf16.mxu0 0
  %889 = vmatpush1.bf16.msra.mxu0 %v358
  %890 = vmatprep.subr.bf16.mxu0 0
  %891 = vmatpush1.bf16.msra.mxu0 %v359
  %892 = vmatprep.subr.bf16.mxu0 0
  %893 = vmatpush1.bf16.msra.mxu0 %v360
  %894 = vmatprep.subr.bf16.mxu0 0
  %895 = vmatpush1.bf16.msra.mxu0 %v361
  %896 = vmatprep.subr.bf16.mxu0 0
  %897 = vmatpush1.bf16.msra.mxu0 0
  %898 = vmatprep.subr.bf16.mxu0 0
  %899 = vmatpush1.bf16.msra.mxu0 0
  %900 = vmatprep.subr.bf16.mxu0 0
  %901 = vmatpush1.bf16.msra.mxu0 0
  %902 = vmatprep.subr.bf16.mxu0 0
  %903 = vmatpush1.bf16.msra.mxu0 0
  %904 = vmatprep.subr.bf16.mxu0 0
  %905 = vmatpush1.bf16.msra.mxu0 0
  %906 = vmatprep.subr.bf16.mxu0 0
  %907 = vmatpush1.bf16.msra.mxu0 0
  %908 = vmatprep.subr.bf16.mxu0 0
  %909 = vmatpush1.bf16.msra.mxu0 0
  %910 = vmatprep.subr.bf16.mxu0 0
  %911 = vmatpush1.bf16.msra.mxu0 0
  %912 = vmatprep.mubr.bf16.mxu0 0
  %913 = vmatmul.mubr.bf16.gmra.mrb[0].mxu0 %v837
  %v914 = vpop.f32.mrb[0].mxu0
  %v915 = vadd.f32 %v320, %v914
  %v916 = vpop.f32.mrb[0].mxu0
  %v917 = vpop.f32.mrb[0].mxu0
  %v918 = vadd.f32 %v320, %v917
  %v919 = vpop.f32.mrb[0].mxu0
  %920 = vdwg.mxu0
  %v921 = vmul.f32 %v156, %v874
  %v922 = vmul.f32 %v159, %v877
  %923 = vmatprep.subr.mxu0 0.0
  %924 = vmatpush1.msra.mxu0 %v162
  %925 = vmatprep.subr.mxu0 0.0
  %926 = vmatpush1.msra.mxu0 %v163
  %927 = vmatprep.subr.mxu0 0.0
  %928 = vmatpush1.msra.mxu0 %v164
  %929 = vmatprep.subr.mxu0 0.0
  %930 = vmatpush1.msra.mxu0 %v165
  %931 = vmatprep.subr.mxu0 0.0
  %932 = vmatpush1.msra.mxu0 %v166
  %933 = vmatprep.subr.mxu0 0.0
  %934 = vmatpush1.msra.mxu0 %v167
  %935 = vmatprep.subr.mxu0 0.0
  %936 = vmatpush1.msra.mxu0 %v168
  %937 = vmatprep.subr.mxu0 0.0
  %938 = vmatpush1.msra.mxu0 %v169
  %939 = vmatprep.subr.mxu0 0.0
  %940 = vmatpush1.msra.mxu0 %v170
  %941 = vmatprep.subr.mxu0 0.0
  %942 = vmatpush1.msra.mxu0 %v171
  %943 = vmatprep.subr.mxu0 0.0
  %944 = vmatpush1.msra.mxu0 %v172
  %945 = vmatprep.subr.mxu0 0.0
  %946 = vmatpush1.msra.mxu0 %v173
  %947 = vmatprep.subr.mxu0 0.0
  %948 = vmatpush1.msra.mxu0 %v174
  %949 = vmatprep.subr.mxu0 0.0
  %950 = vmatpush1.msra.mxu0 %v175
  %951 = vmatprep.subr.mxu0 0.0
  %952 = vmatpush1.msra.mxu0 %v176
  %953 = vmatprep.subr.mxu0 0.0
  %954 = vmatpush1.msra.mxu0 %v177
  %955 = vmatprep.subr.mxu0 0.0
  %956 = vmatpush1.msra.mxu0 0.0
  %957 = vmatprep.subr.mxu0 0.0
  %958 = vmatpush1.msra.mxu0 0.0
  %959 = vmatprep.subr.mxu0 0.0
  %960 = vmatpush1.msra.mxu0 0.0
  %961 = vmatprep.subr.mxu0 0.0
  %962 = vmatpush1.msra.mxu0 0.0
  %963 = vmatprep.subr.mxu0 0.0
  %964 = vmatpush1.msra.mxu0 0.0
  %965 = vmatprep.subr.mxu0 0.0
  %966 = vmatpush1.msra.mxu0 0.0
  %967 = vmatprep.subr.mxu0 0.0
  %968 = vmatpush1.msra.mxu0 0.0
  %969 = vmatprep.subr.mxu0 0.0
  %970 = vmatpush1.msra.mxu0 0.0
  %971 = vmatprep.subr.mxu0 0.0
  %972 = vmatpush1.msra.mxu0 0.0
  %973 = vmatprep.subr.mxu0 0.0
  %974 = vmatpush1.msra.mxu0 0.0
  %975 = vmatprep.subr.mxu0 0.0
  %976 = vmatpush1.msra.mxu0 0.0
  %977 = vmatprep.subr.mxu0 0.0
  %978 = vmatpush1.msra.mxu0 0.0
  %979 = vmatprep.subr.mxu0 0.0
  %980 = vmatpush1.msra.mxu0 0.0
  %981 = vmatprep.subr.mxu0 0.0
  %982 = vmatpush1.msra.mxu0 0.0
  %983 = vmatprep.subr.mxu0 0.0
  %984 = vmatpush1.msra.mxu0 0.0
  %985 = vmatprep.subr.mxu0 0.0
  %986 = vmatpush1.msra.mxu0 0.0
  %987 = vmatprep.mubr.f32.mxu0 0.0
  %988 = vmatmul.mubr.f32.gmra.mrb[0].mxu0 %v921
  %v989 = vpop.f32.mrb[0].mxu0
  %v990 = vadd.f32 0.0, %v989
  %v991 = vpop.f32.mrb[0].mxu0
  %992 = vmatprep.mubr.f32.mxu0 0.0
  %993 = vmatmul.mubr.f32.gmra.mrb[0].mxu0 %v922
  %v994 = vpop.f32.mrb[0].mxu0
  %v995 = vadd.f32 0.0, %v994
  %v996 = vpop.f32.mrb[0].mxu0
  %997 = vdwg.mxu0
  %v998 = vmul.f32 %v990, 0.25
  %v999 = vmul.f32 %v995, 0.25
  %s1000 = scalar_lea.vmem %s1, 32
  %v1001 = vld [vmem:[%s1000] sm:$0xf]
  %v1002 = vld [vmem:[%s1000 + $0x4] sm:$0xf]
  %v1005 = vunpack.c.l.b16 %v1001
  %v1006 = vunpack.c.l.b16 %v1002
  %v1007 = vpack.c.b16 %v1006, %v1005
  %1009 = vmatprep.subr.bf16.mxu0 0
  %1010 = vmatpush1.bf16.msra.mxu0 %v242
  %1011 = vmatprep.subr.bf16.mxu0 0
  %1012 = vmatpush1.bf16.msra.mxu0 %v243
  %1013 = vmatprep.subr.bf16.mxu0 0
  %1014 = vmatpush1.bf16.msra.mxu0 %v244
  %1015 = vmatprep.subr.bf16.mxu0 0
  %1016 = vmatpush1.bf16.msra.mxu0 %v245
  %1017 = vmatprep.subr.bf16.mxu0 0
  %1018 = vmatpush1.bf16.msra.mxu0 %v246
  %1019 = vmatprep.subr.bf16.mxu0 0
  %1020 = vmatpush1.bf16.msra.mxu0 %v247
  %1021 = vmatprep.subr.bf16.mxu0 0
  %1022 = vmatpush1.bf16.msra.mxu0 %v248
  %1023 = vmatprep.subr.bf16.mxu0 0
  %1024 = vmatpush1.bf16.msra.mxu0 %v249
  %1025 = vmatprep.subr.bf16.mxu0 0
  %1026 = vmatpush1.bf16.msra.mxu0 0
  %1027 = vmatprep.subr.bf16.mxu0 0
  %1028 = vmatpush1.bf16.msra.mxu0 0
  %1029 = vmatprep.subr.bf16.mxu0 0
  %1030 = vmatpush1.bf16.msra.mxu0 0
  %1031 = vmatprep.subr.bf16.mxu0 0
  %1032 = vmatpush1.bf16.msra.mxu0 0
  %1033 = vmatprep.subr.bf16.mxu0 0
  %1034 = vmatpush1.bf16.msra.mxu0 0
  %1035 = vmatprep.subr.bf16.mxu0 0
  %1036 = vmatpush1.bf16.msra.mxu0 0
  %1037 = vmatprep.subr.bf16.mxu0 0
  %1038 = vmatpush1.bf16.msra.mxu0 0
  %1039 = vmatprep.subr.bf16.mxu0 0
  %1040 = vmatpush1.bf16.msra.mxu0 0
  %1041 = vmatprep.mubr.bf16.mxu0 0
  %1042 = vmatmul.mubr.bf16.gmra.mrb[0].mxu0 %v1007
  %v1043 = vpop.f32.mrb[0].mxu0
  %v1044 = vadd.f32 %v202, %v1043
  %v1045 = vpop.f32.mrb[0].mxu0
  %v1046 = vpop.f32.mrb[0].mxu0
  %v1047 = vadd.f32 %v202, %v1046
  %v1048 = vpop.f32.mrb[0].mxu0
  %1049 = vdwg.mxu0
  %1050 = vmatprep.subr.bf16.mxu0 0
  %1051 = vmatpush1.bf16.msra.mxu0 %v354
  %1052 = vmatprep.subr.bf16.mxu0 0
  %1053 = vmatpush1.bf16.msra.mxu0 %v355
  %1054 = vmatprep.subr.bf16.mxu0 0
  %1055 = vmatpush1.bf16.msra.mxu0 %v356
  %1056 = vmatprep.subr.bf16.mxu0 0
  %1057 = vmatpush1.bf16.msra.mxu0 %v357
  %1058 = vmatprep.subr.bf16.mxu0 0
  %1059 = vmatpush1.bf16.msra.mxu0 %v358
  %1060 = vmatprep.subr.bf16.mxu0 0
  %1061 = vmatpush1.bf16.msra.mxu0 %v359
  %1062 = vmatprep.subr.bf16.mxu0 0
  %1063 = vmatpush1.bf16.msra.mxu0 %v360
  %1064 = vmatprep.subr.bf16.mxu0 0
  %1065 = vmatpush1.bf16.msra.mxu0 %v361
  %1066 = vmatprep.subr.bf16.mxu0 0
  %1067 = vmatpush1.bf16.msra.mxu0 0
  %1068 = vmatprep.subr.bf16.mxu0 0
  %1069 = vmatpush1.bf16.msra.mxu0 0
  %1070 = vmatprep.subr.bf16.mxu0 0
  %1071 = vmatpush1.bf16.msra.mxu0 0
  %1072 = vmatprep.subr.bf16.mxu0 0
  %1073 = vmatpush1.bf16.msra.mxu0 0
  %1074 = vmatprep.subr.bf16.mxu0 0
  %1075 = vmatpush1.bf16.msra.mxu0 0
  %1076 = vmatprep.subr.bf16.mxu0 0
  %1077 = vmatpush1.bf16.msra.mxu0 0
  %1078 = vmatprep.subr.bf16.mxu0 0
  %1079 = vmatpush1.bf16.msra.mxu0 0
  %1080 = vmatprep.subr.bf16.mxu0 0
  %1081 = vmatpush1.bf16.msra.mxu0 0
  %1082 = vmatprep.mubr.bf16.mxu0 0
  %1083 = vmatmul.mubr.bf16.gmra.mrb[0].mxu0 %v1007
  %v1084 = vpop.f32.mrb[0].mxu0
  %v1085 = vadd.f32 %v320, %v1084
  %v1086 = vpop.f32.mrb[0].mxu0
  %v1087 = vpop.f32.mrb[0].mxu0
  %v1088 = vadd.f32 %v320, %v1087
  %v1089 = vpop.f32.mrb[0].mxu0
  %1090 = vdwg.mxu0
  %v1091 = vmul.f32 %v156, %v1044
  %v1092 = vmul.f32 %v159, %v1047
  %1093 = vmatprep.subr.mxu0 0.0
  %1094 = vmatpush1.msra.mxu0 %v162
  %1095 = vmatprep.subr.mxu0 0.0
  %1096 = vmatpush1.msra.mxu0 %v163
  %1097 = vmatprep.subr.mxu0 0.0
  %1098 = vmatpush1.msra.mxu0 %v164
  %1099 = vmatprep.subr.mxu0 0.0
  %1100 = vmatpush1.msra.mxu0 %v165
  %1101 = vmatprep.subr.mxu0 0.0
  %1102 = vmatpush1.msra.mxu0 %v166
  %1103 = vmatprep.subr.mxu0 0.0
  %1104 = vmatpush1.msra.mxu0 %v167
  %1105 = vmatprep.subr.mxu0 0.0
  %1106 = vmatpush1.msra.mxu0 %v168
  %1107 = vmatprep.subr.mxu0 0.0
  %1108 = vmatpush1.msra.mxu0 %v169
  %1109 = vmatprep.subr.mxu0 0.0
  %1110 = vmatpush1.msra.mxu0 %v170
  %1111 = vmatprep.subr.mxu0 0.0
  %1112 = vmatpush1.msra.mxu0 %v171
  %1113 = vmatprep.subr.mxu0 0.0
  %1114 = vmatpush1.msra.mxu0 %v172
  %1115 = vmatprep.subr.mxu0 0.0
  %1116 = vmatpush1.msra.mxu0 %v173
  %1117 = vmatprep.subr.mxu0 0.0
  %1118 = vmatpush1.msra.mxu0 %v174
  %1119 = vmatprep.subr.mxu0 0.0
  %1120 = vmatpush1.msra.mxu0 %v175
  %1121 = vmatprep.subr.mxu0 0.0
  %1122 = vmatpush1.msra.mxu0 %v176
  %1123 = vmatprep.subr.mxu0 0.0
  %1124 = vmatpush1.msra.mxu0 %v177
  %1125 = vmatprep.subr.mxu0 0.0
  %1126 = vmatpush1.msra.mxu0 0.0
  %1127 = vmatprep.subr.mxu0 0.0
  %1128 = vmatpush1.msra.mxu0 0.0
  %1129 = vmatprep.subr.mxu0 0.0
  %1130 = vmatpush1.msra.mxu0 0.0
  %1131 = vmatprep.subr.mxu0 0.0
  %1132 = vmatpush1.msra.mxu0 0.0
  %1133 = vmatprep.subr.mxu0 0.0
  %1134 = vmatpush1.msra.mxu0 0.0
  %1135 = vmatprep.subr.mxu0 0.0
  %1136 = vmatpush1.msra.mxu0 0.0
  %1137 = vmatprep.subr.mxu0 0.0
  %1138 = vmatpush1.msra.mxu0 0.0
  %1139 = vmatprep.subr.mxu0 0.0
  %1140 = vmatpush1.msra.mxu0 0.0
  %1141 = vmatprep.subr.mxu0 0.0
  %1142 = vmatpush1.msra.mxu0 0.0
  %1143 = vmatprep.subr.mxu0 0.0
  %1144 = vmatpush1.msra.mxu0 0.0
  %1145 = vmatprep.subr.mxu0 0.0
  %1146 = vmatpush1.msra.mxu0 0.0
  %1147 = vmatprep.subr.mxu0 0.0
  %1148 = vmatpush1.msra.mxu0 0.0
  %1149 = vmatprep.subr.mxu0 0.0
  %1150 = vmatpush1.msra.mxu0 0.0
  %1151 = vmatprep.subr.mxu0 0.0
  %1152 = vmatpush1.msra.mxu0 0.0
  %1153 = vmatprep.subr.mxu0 0.0
  %1154 = vmatpush1.msra.mxu0 0.0
  %1155 = vmatprep.subr.mxu0 0.0
  %1156 = vmatpush1.msra.mxu0 0.0
  %1157 = vmatprep.mubr.f32.mxu0 0.0
  %1158 = vmatmul.mubr.f32.gmra.mrb[0].mxu0 %v1091
  %v1159 = vpop.f32.mrb[0].mxu0
  %v1160 = vadd.f32 0.0, %v1159
  %v1161 = vpop.f32.mrb[0].mxu0
  %1162 = vmatprep.mubr.f32.mxu0 0.0
  %1163 = vmatmul.mubr.f32.gmra.mrb[0].mxu0 %v1092
  %v1164 = vpop.f32.mrb[0].mxu0
  %v1165 = vadd.f32 0.0, %v1164
  %v1166 = vpop.f32.mrb[0].mxu0
  %1167 = vdwg.mxu0
  %v1168 = vmul.f32 %v1160, 0.25
  %v1169 = vmul.f32 %v1165, 0.25
  %v1170 = vmax.f32 %v488, %v658
  %v1171 = vmax.f32 %v489, %v659
  %v1172 = vmax.f32 %v1170, %v828
  %v1173 = vmax.f32 %v1171, %v829
  %v1174 = vmax.f32 %v1172, %v998
  %v1175 = vmax.f32 %v1173, %v999
  %v1176 = vmax.f32 %v1174, %v1168
  %v1177 = vmax.f32 %v1175, %v1169
  %v1178 = vsub.f32 %v488, %v1176
  %v1179 = vsub.f32 %v489, %v1177
  %v1180 = vmul.f32 %v1178, 1.442695
  %v1181 = vpow.pop %v1180
  %v1182 = vmul.f32 %v1179, 1.442695
  %v1183 = vpow.pop %v1182
  %v1184 = vsub.f32 %v658, %v1176
  %v1185 = vsub.f32 %v659, %v1177
  %v1186 = vmul.f32 %v1184, 1.442695
  %v1187 = vpow.pop %v1186
  %v1188 = vmul.f32 %v1185, 1.442695
  %v1189 = vpow.pop %v1188
  %v1190 = vsub.f32 %v828, %v1176
  %v1191 = vsub.f32 %v829, %v1177
  %v1192 = vmul.f32 %v1190, 1.442695
  %v1193 = vpow.pop %v1192
  %v1194 = vmul.f32 %v1191, 1.442695
  %v1195 = vpow.pop %v1194
  %v1196 = vsub.f32 %v998, %v1176
  %v1197 = vsub.f32 %v999, %v1177
  %v1198 = vmul.f32 %v1196, 1.442695
  %v1199 = vpow.pop %v1198
  %v1200 = vmul.f32 %v1197, 1.442695
  %v1201 = vpow.pop %v1200
  %v1202 = vsub.f32 %v1168, %v1176
  %v1203 = vsub.f32 %v1169, %v1177
  %v1204 = vmul.f32 %v1202, 1.442695
  %v1205 = vpow.pop %v1204
  %v1206 = vmul.f32 %v1203, 1.442695
  %v1207 = vpow.pop %v1206
  %v1208 = vadd.f32 %v1181, %v1187
  %v1209 = vadd.f32 %v1183, %v1189
  %v1210 = vadd.f32 %v1208, %v1193
  %v1211 = vadd.f32 %v1209, %v1195
  %v1212 = vadd.f32 %v1210, %v1199
  %v1213 = vadd.f32 %v1211, %v1201
  %v1214 = vadd.f32 %v1212, %v1205
  %v1215 = vadd.f32 %v1213, %v1207
  %v1216 = vrcp.pop %v1214
  %v1217 = vrcp.pop %v1215
  %v1218 = vmul.f32 %v1181, %v1216
  %v1219 = vmul.f32 %v1183, %v1217
  %vm1220 = vcmask 64512
  %v1222 = vsel %vm1220, %v1218, 0
  %v1225 = vsel %vm1220, %v1219, 0
  %1227 = vmatprep.subr.mxu0 0.0
  %1228 = vmatpush1.msra.mxu0 %v178
  %1229 = vmatprep.subr.mxu0 0.0
  %1230 = vmatpush1.msra.mxu0 0.0
  %1231 = vmatprep.subr.mxu0 0.0
  %1232 = vmatpush1.msra.mxu0 0.0
  %1233 = vmatprep.subr.mxu0 0.0
  %1234 = vmatpush1.msra.mxu0 0.0
  %1235 = vmatprep.subr.mxu0 0.0
  %1236 = vmatpush1.msra.mxu0 0.0
  %1237 = vmatprep.subr.mxu0 0.0
  %1238 = vmatpush1.msra.mxu0 0.0
  %1239 = vmatprep.subr.mxu0 0.0
  %1240 = vmatpush1.msra.mxu0 0.0
  %1241 = vmatprep.subr.mxu0 0.0
  %1242 = vmatpush1.msra.mxu0 0.0
  %1243 = vmatprep.subr.mxu0 0.0
  %1244 = vmatpush1.msra.mxu0 0.0
  %1245 = vmatprep.subr.mxu0 0.0
  %1246 = vmatpush1.msra.mxu0 0.0
  %1247 = vmatprep.subr.mxu0 0.0
  %1248 = vmatpush1.msra.mxu0 0.0
  %1249 = vmatprep.subr.mxu0 0.0
  %1250 = vmatpush1.msra.mxu0 0.0
  %1251 = vmatprep.subr.mxu0 0.0
  %1252 = vmatpush1.msra.mxu0 0.0
  %1253 = vmatprep.subr.mxu0 0.0
  %1254 = vmatpush1.msra.mxu0 0.0
  %1255 = vmatprep.subr.mxu0 0.0
  %1256 = vmatpush1.msra.mxu0 0.0
  %1257 = vmatprep.subr.mxu0 0.0
  %1258 = vmatpush1.msra.mxu0 0.0
  %1259 = vmatprep.subr.mxu0 0.0
  %1260 = vmatpush1.msra.mxu0 0.0
  %1261 = vmatprep.subr.mxu0 0.0
  %1262 = vmatpush1.msra.mxu0 0.0
  %1263 = vmatprep.subr.mxu0 0.0
  %1264 = vmatpush1.msra.mxu0 0.0
  %1265 = vmatprep.subr.mxu0 0.0
  %1266 = vmatpush1.msra.mxu0 0.0
  %1267 = vmatprep.subr.mxu0 0.0
  %1268 = vmatpush1.msra.mxu0 0.0
  %1269 = vmatprep.subr.mxu0 0.0
  %1270 = vmatpush1.msra.mxu0 0.0
  %1271 = vmatprep.subr.mxu0 0.0
  %1272 = vmatpush1.msra.mxu0 0.0
  %1273 = vmatprep.subr.mxu0 0.0
  %1274 = vmatpush1.msra.mxu0 0.0
  %1275 = vmatprep.subr.mxu0 0.0
  %1276 = vmatpush1.msra.mxu0 0.0
  %1277 = vmatprep.subr.mxu0 0.0
  %1278 = vmatpush1.msra.mxu0 0.0
  %1279 = vmatprep.subr.mxu0 0.0
  %1280 = vmatpush1.msra.mxu0 0.0
  %1281 = vmatprep.subr.mxu0 0.0
  %1282 = vmatpush1.msra.mxu0 0.0
  %1283 = vmatprep.subr.mxu0 0.0
  %1284 = vmatpush1.msra.mxu0 0.0
  %1285 = vmatprep.subr.mxu0 0.0
  %1286 = vmatpush1.msra.mxu0 0.0
  %1287 = vmatprep.subr.mxu0 0.0
  %1288 = vmatpush1.msra.mxu0 0.0
  %1289 = vmatprep.subr.mxu0 0.0
  %1290 = vmatpush1.msra.mxu0 0.0
  %1291 = vmatprep.mubr.f32.mxu0 0.0
  %1292 = vmatmul.mubr.f32.gmra.mrb[0].mxu0 %v1222
  %v1293 = vpop.f32.mrb[0].mxu0
  %v1294 = vadd.f32 0.0, %v1293
  %v1295 = vpop.f32.mrb[0].mxu0
  %1296 = vmatprep.mubr.f32.mxu0 0.0
  %1297 = vmatmul.mubr.f32.gmra.mrb[0].mxu0 %v1225
  %v1298 = vpop.f32.mrb[0].mxu0
  %v1299 = vadd.f32 0.0, %v1298
  %v1300 = vpop.f32.mrb[0].mxu0
  %1301 = vdwg.mxu0
  %v1302 = vmul.f32 %v1294, %v405
  %v1303 = vmul.f32 %v1299, %v408
  %v1304 = vadd.f32 %v1302, 0.0
  %v1305 = vadd.f32 %v1303, 0.0
  %v1306 = vmul.f32 %v1187, %v1216
  %v1307 = vmul.f32 %v1189, %v1217
  %v1309 = vsel %vm1220, %v1306, 0
  %v1312 = vsel %vm1220, %v1307, 0
  %1314 = vmatprep.subr.mxu0 0.0
  %1315 = vmatpush1.msra.mxu0 %v178
  %1316 = vmatprep.subr.mxu0 0.0
  %1317 = vmatpush1.msra.mxu0 0.0
  %1318 = vmatprep.subr.mxu0 0.0
  %1319 = vmatpush1.msra.mxu0 0.0
  %1320 = vmatprep.subr.mxu0 0.0
  %1321 = vmatpush1.msra.mxu0 0.0
  %1322 = vmatprep.subr.mxu0 0.0
  %1323 = vmatpush1.msra.mxu0 0.0
  %1324 = vmatprep.subr.mxu0 0.0
  %1325 = vmatpush1.msra.mxu0 0.0
  %1326 = vmatprep.subr.mxu0 0.0
  %1327 = vmatpush1.msra.mxu0 0.0
  %1328 = vmatprep.subr.mxu0 0.0
  %1329 = vmatpush1.msra.mxu0 0.0
  %1330 = vmatprep.subr.mxu0 0.0
  %1331 = vmatpush1.msra.mxu0 0.0
  %1332 = vmatprep.subr.mxu0 0.0
  %1333 = vmatpush1.msra.mxu0 0.0
  %1334 = vmatprep.subr.mxu0 0.0
  %1335 = vmatpush1.msra.mxu0 0.0
  %1336 = vmatprep.subr.mxu0 0.0
  %1337 = vmatpush1.msra.mxu0 0.0
  %1338 = vmatprep.subr.mxu0 0.0
  %1339 = vmatpush1.msra.mxu0 0.0
  %1340 = vmatprep.subr.mxu0 0.0
  %1341 = vmatpush1.msra.mxu0 0.0
  %1342 = vmatprep.subr.mxu0 0.0
  %1343 = vmatpush1.msra.mxu0 0.0
  %1344 = vmatprep.subr.mxu0 0.0
  %1345 = vmatpush1.msra.mxu0 0.0
  %1346 = vmatprep.subr.mxu0 0.0
  %1347 = vmatpush1.msra.mxu0 0.0
  %1348 = vmatprep.subr.mxu0 0.0
  %1349 = vmatpush1.msra.mxu0 0.0
  %1350 = vmatprep.subr.mxu0 0.0
  %1351 = vmatpush1.msra.mxu0 0.0
  %1352 = vmatprep.subr.mxu0 0.0
  %1353 = vmatpush1.msra.mxu0 0.0
  %1354 = vmatprep.subr.mxu0 0.0
  %1355 = vmatpush1.msra.mxu0 0.0
  %1356 = vmatprep.subr.mxu0 0.0
  %1357 = vmatpush1.msra.mxu0 0.0
  %1358 = vmatprep.subr.mxu0 0.0
  %1359 = vmatpush1.msra.mxu0 0.0
  %1360 = vmatprep.subr.mxu0 0.0
  %1361 = vmatpush1.msra.mxu0 0.0
  %1362 = vmatprep.subr.mxu0 0.0
  %1363 = vmatpush1.msra.mxu0 0.0
  %1364 = vmatprep.subr.mxu0 0.0
  %1365 = vmatpush1.msra.mxu0 0.0
  %1366 = vmatprep.subr.mxu0 0.0
  %1367 = vmatpush1.msra.mxu0 0.0
  %1368 = vmatprep.subr.mxu0 0.0
  %1369 = vmatpush1.msra.mxu0 0.0
  %1370 = vmatprep.subr.mxu0 0.0
  %1371 = vmatpush1.msra.mxu0 0.0
  %1372 = vmatprep.subr.mxu0 0.0
  %1373 = vmatpush1.msra.mxu0 0.0
  %1374 = vmatprep.subr.mxu0 0.0
  %1375 = vmatpush1.msra.mxu0 0.0
  %1376 = vmatprep.subr.mxu0 0.0
  %1377 = vmatpush1.msra.mxu0 0.0
  %1378 = vmatprep.mubr.f32.mxu0 0.0
  %1379 = vmatmul.mubr.f32.gmra.mrb[0].mxu0 %v1309
  %v1380 = vpop.f32.mrb[0].mxu0
  %v1381 = vadd.f32 0.0, %v1380
  %v1382 = vpop.f32.mrb[0].mxu0
  %1383 = vmatprep.mubr.f32.mxu0 0.0
  %1384 = vmatmul.mubr.f32.gmra.mrb[0].mxu0 %v1312
  %v1385 = vpop.f32.mrb[0].mxu0
  %v1386 = vadd.f32 0.0, %v1385
  %v1387 = vpop.f32.mrb[0].mxu0
  %1388 = vdwg.mxu0
  %v1389 = vmul.f32 %v1381, %v575
  %v1390 = vmul.f32 %v1386, %v578
  %v1391 = vadd.f32 %v1304, %v1389
  %v1392 = vadd.f32 %v1305, %v1390
  %v1393 = vmul.f32 %v1193, %v1216
  %v1394 = vmul.f32 %v1195, %v1217
  %v1396 = vsel %vm1220, %v1393, 0
  %v1399 = vsel %vm1220, %v1394, 0
  %1401 = vmatprep.subr.mxu0 0.0
  %1402 = vmatpush1.msra.mxu0 %v178
  %1403 = vmatprep.subr.mxu0 0.0
  %1404 = vmatpush1.msra.mxu0 0.0
  %1405 = vmatprep.subr.mxu0 0.0
  %1406 = vmatpush1.msra.mxu0 0.0
  %1407 = vmatprep.subr.mxu0 0.0
  %1408 = vmatpush1.msra.mxu0 0.0
  %1409 = vmatprep.subr.mxu0 0.0
  %1410 = vmatpush1.msra.mxu0 0.0
  %1411 = vmatprep.subr.mxu0 0.0
  %1412 = vmatpush1.msra.mxu0 0.0
  %1413 = vmatprep.subr.mxu0 0.0
  %1414 = vmatpush1.msra.mxu0 0.0
  %1415 = vmatprep.subr.mxu0 0.0
  %1416 = vmatpush1.msra.mxu0 0.0
  %1417 = vmatprep.subr.mxu0 0.0
  %1418 = vmatpush1.msra.mxu0 0.0
  %1419 = vmatprep.subr.mxu0 0.0
  %1420 = vmatpush1.msra.mxu0 0.0
  %1421 = vmatprep.subr.mxu0 0.0
  %1422 = vmatpush1.msra.mxu0 0.0
  %1423 = vmatprep.subr.mxu0 0.0
  %1424 = vmatpush1.msra.mxu0 0.0
  %1425 = vmatprep.subr.mxu0 0.0
  %1426 = vmatpush1.msra.mxu0 0.0
  %1427 = vmatprep.subr.mxu0 0.0
  %1428 = vmatpush1.msra.mxu0 0.0
  %1429 = vmatprep.subr.mxu0 0.0
  %1430 = vmatpush1.msra.mxu0 0.0
  %1431 = vmatprep.subr.mxu0 0.0
  %1432 = vmatpush1.msra.mxu0 0.0
  %1433 = vmatprep.subr.mxu0 0.0
  %1434 = vmatpush1.msra.mxu0 0.0
  %1435 = vmatprep.subr.mxu0 0.0
  %1436 = vmatpush1.msra.mxu0 0.0
  %1437 = vmatprep.subr.mxu0 0.0
  %1438 = vmatpush1.msra.mxu0 0.0
  %1439 = vmatprep.subr.mxu0 0.0
  %1440 = vmatpush1.msra.mxu0 0.0
  %1441 = vmatprep.subr.mxu0 0.0
  %1442 = vmatpush1.msra.mxu0 0.0
  %1443 = vmatprep.subr.mxu0 0.0
  %1444 = vmatpush1.msra.mxu0 0.0
  %1445 = vmatprep.subr.mxu0 0.0
  %1446 = vmatpush1.msra.mxu0 0.0
  %1447 = vmatprep.subr.mxu0 0.0
  %1448 = vmatpush1.msra.mxu0 0.0
  %1449 = vmatprep.subr.mxu0 0.0
  %1450 = vmatpush1.msra.mxu0 0.0
  %1451 = vmatprep.subr.mxu0 0.0
  %1452 = vmatpush1.msra.mxu0 0.0
  %1453 = vmatprep.subr.mxu0 0.0
  %1454 = vmatpush1.msra.mxu0 0.0
  %1455 = vmatprep.subr.mxu0 0.0
  %1456 = vmatpush1.msra.mxu0 0.0
  %1457 = vmatprep.subr.mxu0 0.0
  %1458 = vmatpush1.msra.mxu0 0.0
  %1459 = vmatprep.subr.mxu0 0.0
  %1460 = vmatpush1.msra.mxu0 0.0
  %1461 = vmatprep.subr.mxu0 0.0
  %1462 = vmatpush1.msra.mxu0 0.0
  %1463 = vmatprep.subr.mxu0 0.0
  %1464 = vmatpush1.msra.mxu0 0.0
  %1465 = vmatprep.mubr.f32.mxu0 0.0
  %1466 = vmatmul.mubr.f32.gmra.mrb[0].mxu0 %v1396
  %v1467 = vpop.f32.mrb[0].mxu0
  %v1468 = vadd.f32 0.0, %v1467
  %v1469 = vpop.f32.mrb[0].mxu0
  %1470 = vmatprep.mubr.f32.mxu0 0.0
  %1471 = vmatmul.mubr.f32.gmra.mrb[0].mxu0 %v1399
  %v1472 = vpop.f32.mrb[0].mxu0
  %v1473 = vadd.f32 0.0, %v1472
  %v1474 = vpop.f32.mrb[0].mxu0
  %1475 = vdwg.mxu0
  %v1476 = vmul.f32 %v1468, %v745
  %v1477 = vmul.f32 %v1473, %v748
  %v1478 = vadd.f32 %v1391, %v1476
  %v1479 = vadd.f32 %v1392, %v1477
  %v1480 = vmul.f32 %v1199, %v1216
  %v1481 = vmul.f32 %v1201, %v1217
  %v1483 = vsel %vm1220, %v1480, 0
  %v1486 = vsel %vm1220, %v1481, 0
  %1488 = vmatprep.subr.mxu0 0.0
  %1489 = vmatpush1.msra.mxu0 %v178
  %1490 = vmatprep.subr.mxu0 0.0
  %1491 = vmatpush1.msra.mxu0 0.0
  %1492 = vmatprep.subr.mxu0 0.0
  %1493 = vmatpush1.msra.mxu0 0.0
  %1494 = vmatprep.subr.mxu0 0.0
  %1495 = vmatpush1.msra.mxu0 0.0
  %1496 = vmatprep.subr.mxu0 0.0
  %1497 = vmatpush1.msra.mxu0 0.0
  %1498 = vmatprep.subr.mxu0 0.0
  %1499 = vmatpush1.msra.mxu0 0.0
  %1500 = vmatprep.subr.mxu0 0.0
  %1501 = vmatpush1.msra.mxu0 0.0
  %1502 = vmatprep.subr.mxu0 0.0
  %1503 = vmatpush1.msra.mxu0 0.0
  %1504 = vmatprep.subr.mxu0 0.0
  %1505 = vmatpush1.msra.mxu0 0.0
  %1506 = vmatprep.subr.mxu0 0.0
  %1507 = vmatpush1.msra.mxu0 0.0
  %1508 = vmatprep.subr.mxu0 0.0
  %1509 = vmatpush1.msra.mxu0 0.0
  %1510 = vmatprep.subr.mxu0 0.0
  %1511 = vmatpush1.msra.mxu0 0.0
  %1512 = vmatprep.subr.mxu0 0.0
  %1513 = vmatpush1.msra.mxu0 0.0
  %1514 = vmatprep.subr.mxu0 0.0
  %1515 = vmatpush1.msra.mxu0 0.0
  %1516 = vmatprep.subr.mxu0 0.0
  %1517 = vmatpush1.msra.mxu0 0.0
  %1518 = vmatprep.subr.mxu0 0.0
  %1519 = vmatpush1.msra.mxu0 0.0
  %1520 = vmatprep.subr.mxu0 0.0
  %1521 = vmatpush1.msra.mxu0 0.0
  %1522 = vmatprep.subr.mxu0 0.0
  %1523 = vmatpush1.msra.mxu0 0.0
  %1524 = vmatprep.subr.mxu0 0.0
  %1525 = vmatpush1.msra.mxu0 0.0
  %1526 = vmatprep.subr.mxu0 0.0
  %1527 = vmatpush1.msra.mxu0 0.0
  %1528 = vmatprep.subr.mxu0 0.0
  %1529 = vmatpush1.msra.mxu0 0.0
  %1530 = vmatprep.subr.mxu0 0.0
  %1531 = vmatpush1.msra.mxu0 0.0
  %1532 = vmatprep.subr.mxu0 0.0
  %1533 = vmatpush1.msra.mxu0 0.0
  %1534 = vmatprep.subr.mxu0 0.0
  %1535 = vmatpush1.msra.mxu0 0.0
  %1536 = vmatprep.subr.mxu0 0.0
  %1537 = vmatpush1.msra.mxu0 0.0
  %1538 = vmatprep.subr.mxu0 0.0
  %1539 = vmatpush1.msra.mxu0 0.0
  %1540 = vmatprep.subr.mxu0 0.0
  %1541 = vmatpush1.msra.mxu0 0.0
  %1542 = vmatprep.subr.mxu0 0.0
  %1543 = vmatpush1.msra.mxu0 0.0
  %1544 = vmatprep.subr.mxu0 0.0
  %1545 = vmatpush1.msra.mxu0 0.0
  %1546 = vmatprep.subr.mxu0 0.0
  %1547 = vmatpush1.msra.mxu0 0.0
  %1548 = vmatprep.subr.mxu0 0.0
  %1549 = vmatpush1.msra.mxu0 0.0
  %1550 = vmatprep.subr.mxu0 0.0
  %1551 = vmatpush1.msra.mxu0 0.0
  %1552 = vmatprep.mubr.f32.mxu0 0.0
  %1553 = vmatmul.mubr.f32.gmra.mrb[0].mxu0 %v1483
  %v1554 = vpop.f32.mrb[0].mxu0
  %v1555 = vadd.f32 0.0, %v1554
  %v1556 = vpop.f32.mrb[0].mxu0
  %1557 = vmatprep.mubr.f32.mxu0 0.0
  %1558 = vmatmul.mubr.f32.gmra.mrb[0].mxu0 %v1486
  %v1559 = vpop.f32.mrb[0].mxu0
  %v1560 = vadd.f32 0.0, %v1559
  %v1561 = vpop.f32.mrb[0].mxu0
  %1562 = vdwg.mxu0
  %v1563 = vmul.f32 %v1555, %v915
  %v1564 = vmul.f32 %v1560, %v918
  %v1565 = vadd.f32 %v1478, %v1563
  %v1566 = vadd.f32 %v1479, %v1564
  %v1567 = vmul.f32 %v1205, %v1216
  %v1568 = vmul.f32 %v1207, %v1217
  %v1570 = vsel %vm1220, %v1567, 0
  %v1573 = vsel %vm1220, %v1568, 0
  %1575 = vmatprep.subr.mxu0 0.0
  %1576 = vmatpush1.msra.mxu0 %v178
  %1577 = vmatprep.subr.mxu0 0.0
  %1578 = vmatpush1.msra.mxu0 0.0
  %1579 = vmatprep.subr.mxu0 0.0
  %1580 = vmatpush1.msra.mxu0 0.0
  %1581 = vmatprep.subr.mxu0 0.0
  %1582 = vmatpush1.msra.mxu0 0.0
  %1583 = vmatprep.subr.mxu0 0.0
  %1584 = vmatpush1.msra.mxu0 0.0
  %1585 = vmatprep.subr.mxu0 0.0
  %1586 = vmatpush1.msra.mxu0 0.0
  %1587 = vmatprep.subr.mxu0 0.0
  %1588 = vmatpush1.msra.mxu0 0.0
  %1589 = vmatprep.subr.mxu0 0.0
  %1590 = vmatpush1.msra.mxu0 0.0
  %1591 = vmatprep.subr.mxu0 0.0
  %1592 = vmatpush1.msra.mxu0 0.0
  %1593 = vmatprep.subr.mxu0 0.0
  %1594 = vmatpush1.msra.mxu0 0.0
  %1595 = vmatprep.subr.mxu0 0.0
  %1596 = vmatpush1.msra.mxu0 0.0
  %1597 = vmatprep.subr.mxu0 0.0
  %1598 = vmatpush1.msra.mxu0 0.0
  %1599 = vmatprep.subr.mxu0 0.0
  %1600 = vmatpush1.msra.mxu0 0.0
  %1601 = vmatprep.subr.mxu0 0.0
  %1602 = vmatpush1.msra.mxu0 0.0
  %1603 = vmatprep.subr.mxu0 0.0
  %1604 = vmatpush1.msra.mxu0 0.0
  %1605 = vmatprep.subr.mxu0 0.0
  %1606 = vmatpush1.msra.mxu0 0.0
  %1607 = vmatprep.subr.mxu0 0.0
  %1608 = vmatpush1.msra.mxu0 0.0
  %1609 = vmatprep.subr.mxu0 0.0
  %1610 = vmatpush1.msra.mxu0 0.0
  %1611 = vmatprep.subr.mxu0 0.0
  %1612 = vmatpush1.msra.mxu0 0.0
  %1613 = vmatprep.subr.mxu0 0.0
  %1614 = vmatpush1.msra.mxu0 0.0
  %1615 = vmatprep.subr.mxu0 0.0
  %1616 = vmatpush1.msra.mxu0 0.0
  %1617 = vmatprep.subr.mxu0 0.0
  %1618 = vmatpush1.msra.mxu0 0.0
  %1619 = vmatprep.subr.mxu0 0.0
  %1620 = vmatpush1.msra.mxu0 0.0
  %1621 = vmatprep.subr.mxu0 0.0
  %1622 = vmatpush1.msra.mxu0 0.0
  %1623 = vmatprep.subr.mxu0 0.0
  %1624 = vmatpush1.msra.mxu0 0.0
  %1625 = vmatprep.subr.mxu0 0.0
  %1626 = vmatpush1.msra.mxu0 0.0
  %1627 = vmatprep.subr.mxu0 0.0
  %1628 = vmatpush1.msra.mxu0 0.0
  %1629 = vmatprep.subr.mxu0 0.0
  %1630 = vmatpush1.msra.mxu0 0.0
  %1631 = vmatprep.subr.mxu0 0.0
  %1632 = vmatpush1.msra.mxu0 0.0
  %1633 = vmatprep.subr.mxu0 0.0
  %1634 = vmatpush1.msra.mxu0 0.0
  %1635 = vmatprep.subr.mxu0 0.0
  %1636 = vmatpush1.msra.mxu0 0.0
  %1637 = vmatprep.subr.mxu0 0.0
  %1638 = vmatpush1.msra.mxu0 0.0
  %1639 = vmatprep.mubr.f32.mxu0 0.0
  %1640 = vmatmul.mubr.f32.gmra.mrb[0].mxu0 %v1570
  %v1641 = vpop.f32.mrb[0].mxu0
  %v1642 = vadd.f32 0.0, %v1641
  %v1643 = vpop.f32.mrb[0].mxu0
  %1644 = vmatprep.mubr.f32.mxu0 0.0
  %1645 = vmatmul.mubr.f32.gmra.mrb[0].mxu0 %v1573
  %v1646 = vpop.f32.mrb[0].mxu0
  %v1647 = vadd.f32 0.0, %v1646
  %v1648 = vpop.f32.mrb[0].mxu0
  %1649 = vdwg.mxu0
  %v1650 = vmul.f32 %v1642, %v1085
  %v1651 = vmul.f32 %v1647, %v1088
  %v1652 = vadd.f32 %v1565, %v1650
  %v1653 = vadd.f32 %v1566, %v1651
  %v1654 = vpack.c.bf16 %v1653, %v1652
  %v1655 = vld [vmem:[%s10] sm:$0xf]
  %v1656 = vld [vmem:[%s10 + $0x4] sm:$0xf]
  %v1657 = vld [vmem:[%s10 + $0x8] sm:$0xf]
  %v1658 = vld [vmem:[%s10 + $0xc] sm:$0xf]
  %v1659 = vld [vmem:[%s10 + $0x10] sm:$0xf]
  %v1660 = vld [vmem:[%s10 + $0x14] sm:$0xf]
  %v1661 = vld [vmem:[%s10 + $0x18] sm:$0xf]
  %v1662 = vld [vmem:[%s10 + $0x1c] sm:$0xf]
  %v1663 = vld [vmem:[%s10 + $0x20] sm:$0xf]
  %v1664 = vld [vmem:[%s10 + $0x24] sm:$0xf]
  %v1665 = vld [vmem:[%s10 + $0x28] sm:$0xf]
  %v1666 = vld [vmem:[%s10 + $0x2c] sm:$0xf]
  %v1667 = vld [vmem:[%s10 + $0x30] sm:$0xf]
  %v1668 = vld [vmem:[%s10 + $0x34] sm:$0xf]
  %v1669 = vld [vmem:[%s10 + $0x38] sm:$0xf]
  %v1670 = vld [vmem:[%s10 + $0x3c] sm:$0xf]
  %v1671 = vld [vmem:[%s11] sm:$0x1]
  %v1673 = vlaneseq
  %v1674 = vshrl.u32 %v1673, 7
  %v1675 = vsub.s32 0, %v1674
  %v1676 = vrot.slane %v1671, %v1675
  %v1694 = vunpack.c.l.b16 %v1655
  %v1695 = vunpack.c.l.b16 %v1656
  %v1696 = vunpack.c.l.b16 %v1657
  %v1697 = vunpack.c.l.b16 %v1658
  %v1698 = vunpack.c.l.b16 %v1659
  %v1699 = vunpack.c.l.b16 %v1660
  %v1700 = vunpack.c.l.b16 %v1661
  %v1701 = vunpack.c.l.b16 %v1662
  %v1702 = vunpack.c.l.b16 %v1663
  %v1703 = vunpack.c.l.b16 %v1664
  %v1704 = vunpack.c.l.b16 %v1665
  %v1705 = vunpack.c.l.b16 %v1666
  %v1706 = vunpack.c.l.b16 %v1667
  %v1707 = vunpack.c.l.b16 %v1668
  %v1708 = vunpack.c.l.b16 %v1669
  %v1709 = vunpack.c.l.b16 %v1670
  %v1710 = vpack.c.b16 %v1695, %v1694
  %v1711 = vpack.c.b16 %v1697, %v1696
  %v1712 = vpack.c.b16 %v1699, %v1698
  %v1713 = vpack.c.b16 %v1701, %v1700
  %v1714 = vpack.c.b16 %v1703, %v1702
  %v1715 = vpack.c.b16 %v1705, %v1704
  %v1716 = vpack.c.b16 %v1707, %v1706
  %v1717 = vpack.c.b16 %v1709, %v1708
  %1726 = vmatprep.subr.bf16.mxu0 0
  %1727 = vmatpush1.bf16.msra.mxu0 %v1710
  %1728 = vmatprep.subr.bf16.mxu0 0
  %1729 = vmatpush1.bf16.msra.mxu0 %v1711
  %1730 = vmatprep.subr.bf16.mxu0 0
  %1731 = vmatpush1.bf16.msra.mxu0 %v1712
  %1732 = vmatprep.subr.bf16.mxu0 0
  %1733 = vmatpush1.bf16.msra.mxu0 %v1713
  %1734 = vmatprep.subr.bf16.mxu0 0
  %1735 = vmatpush1.bf16.msra.mxu0 %v1714
  %1736 = vmatprep.subr.bf16.mxu0 0
  %1737 = vmatpush1.bf16.msra.mxu0 %v1715
  %1738 = vmatprep.subr.bf16.mxu0 0
  %1739 = vmatpush1.bf16.msra.mxu0 %v1716
  %1740 = vmatprep.subr.bf16.mxu0 0
  %1741 = vmatpush1.bf16.msra.mxu0 %v1717
  %1742 = vmatprep.subr.bf16.mxu0 0
  %1743 = vmatpush1.bf16.msra.mxu0 0
  %1744 = vmatprep.subr.bf16.mxu0 0
  %1745 = vmatpush1.bf16.msra.mxu0 0
  %1746 = vmatprep.subr.bf16.mxu0 0
  %1747 = vmatpush1.bf16.msra.mxu0 0
  %1748 = vmatprep.subr.bf16.mxu0 0
  %1749 = vmatpush1.bf16.msra.mxu0 0
  %1750 = vmatprep.subr.bf16.mxu0 0
  %1751 = vmatpush1.bf16.msra.mxu0 0
  %1752 = vmatprep.subr.bf16.mxu0 0
  %1753 = vmatpush1.bf16.msra.mxu0 0
  %1754 = vmatprep.subr.bf16.mxu0 0
  %1755 = vmatpush1.bf16.msra.mxu0 0
  %1756 = vmatprep.subr.bf16.mxu0 0
  %1757 = vmatpush1.bf16.msra.mxu0 0
  %1758 = vmatprep.mubr.bf16.mxu0 0
  %1759 = vmatmul.mubr.bf16.gmra.mrb[0].mxu0 %v1654
  %v1760 = vpop.f32.mrb[0].mxu0
  %v1761 = vadd.f32 %v1676, %v1760
  %v1762 = vpop.f32.mrb[0].mxu0
  %v1763 = vpop.f32.mrb[0].mxu0
  %v1764 = vadd.f32 %v1676, %v1763
  %v1765 = vpop.f32.mrb[0].mxu0
  %1766 = vdwg.mxu0
  %v1767 = vpack.c.bf16 %v1764, %v1761
  %v1769 = vunpack.c.l.b16 %v1767
  %v1770 = vunpack.c.h.b16 %v1767
  %v1771 = vpack.c.b16 %v1769, %v1769
  %v1772 = vpack.c.b16 %v1770, %v1770
  %1775 = vst [vmem:[%s12] sm:$0xf] %v1771
  %1776 = vst [vmem:[%s12 + $0x4] sm:$0xf] %v1772
  // Predicated region
  $region50: #{graphhop_forward.16} parent=0 // pred_check
    _
  $region51: #{graphhop_forward.16} parent=0 // pred_check_branch
    %1778 = sbr.rel (0) target = $region53
  $region52: #{graphhop_forward.16} parent=0 // pred_region
    _
  $region53: #{graphhop_forward.16} parent=0 // pred_fallthru
    _
  // Predicated region
  $region54: #{graphhop_forward.16} parent=0 // pred_check
    _
  $region55: #{graphhop_forward.16} parent=0 // pred_check_branch
    %1780 = sbr.rel (0) target = $region57
  $region56: #{graphhop_forward.16} parent=0 // pred_region
    _
  $region57: #{graphhop_forward.16} parent=0 // pred_fallthru
    _

</llo_original>
